<compile_context>
chip_gen: v7x
topology: tpu7x:2x2x1
jax: 0.10.0
libtpu: 0.0.40
codegen_flags: <defaults>
</compile_context>

<pallas_src>
import math
import functools

import jax
import jax.numpy as jnp
from jax.experimental import pallas as pl
from jax.experimental.pallas import tpu as pltpu


# ----------------------------- hardware-aware constants ---------------------

def _tpu_vmem_capacity():
    try:
        return int(pltpu.get_tpu_info().vmem_capacity_bytes)
    except Exception:
        return 64 * 1024 * 1024                      # conservative (v7x-sized)


_VMEM_CAP = _tpu_vmem_capacity()
# ~48 MiB on v7x (64 MiB physical VMEM), ~96 MiB on v5e/v6e (128 MiB).
_VMEM_LIMIT = int(min(_VMEM_CAP * 3 // 4, 100 * 1024 * 1024))
_VMEM_BUDGET = _VMEM_LIMIT - 8 * 1024 * 1024         # headroom for double buffers
_WEIGHT_RESIDENT_MAX = 12 * 1024 * 1024              # VMEM-resident weight cutoff


# ----------------------------- small helpers --------------------------------

def _round_up(x, m):
    return (x + m - 1) // m * m


_ROW_TILES = (2048, 1024, 512, 256, 128, 64, 32, 16, 8)


def _pick_row_tile(m, cap):
    """Largest row tile that divides m, fits the VMEM cap and (when possible)
    leaves >= 2 tiles so both v7x TensorCores get a share of the parallel axis."""
    cands = [t for t in _ROW_TILES if t <= max(cap, 8)]
    for t in cands:
        if m % t == 0 and m // t >= 2:
            return t
    for t in cands:
        if m % t == 0:
            return t
    return 8


def _row_cap(stream_bytes_per_row, resident_bytes):
    """How many rows per tile fit the VMEM budget (streamed blocks are
    double-buffered; resident blocks are paid once)."""
    avail = max(_VMEM_BUDGET - resident_bytes, 512 * 1024)
    return max(16, avail // (2 * max(stream_bytes_per_row, 1)))


# ----------------------------- in-kernel epilogue ----------------------------

def _mish(y):
    # mish(y) = y * tanh(softplus(y)); with t = 1 + exp(y),
    # tanh(softplus(y)) = (t^2 - 1) / (t^2 + 1).
    # PyTorch softplus threshold 20: for y > 20, mish(y) == y in f32.
    t = 1.0 + jnp.exp(jnp.minimum(y, 20.0))
    t2 = t * t
    tanh_sp = (t2 - 1.0) * pl.reciprocal(t2 + 1.0, approx=True)
    return jnp.where(y > 20.0, y, y * tanh_sp)


# ----------------------------- Pallas kernels --------------------------------

def _mm_bias_mish_kernel(x_ref, w_ref, b_ref, o_ref):
    # x(tm, K) @ w(K, Cout) with the whole weight VMEM-resident, + bias, Mish.
    y = jnp.dot(x_ref[...], w_ref[...], preferred_element_type=jnp.float32)
    o_ref[...] = _mish(y + b_ref[...]).astype(o_ref.dtype)


def _mm_bias_mish_ktiled_kernel(x_ref, w_ref, b_ref, o_ref, acc_ref):
    # Fallback for weights too large to keep VMEM-resident: K reduction grid
    # axis with an f32 accumulator scratch (not exercised at these sizes).
    k = pl.program_id(1)

    @pl.when(k == 0)
    def _():
        acc_ref[...] = jnp.zeros_like(acc_ref)

    acc_ref[...] += jnp.dot(x_ref[...], w_ref[...],
                            preferred_element_type=jnp.float32)

    @pl.when(k == pl.num_programs(1) - 1)
    def _():
        o_ref[...] = _mish(acc_ref[...] + b_ref[...]).astype(o_ref.dtype)


def _make_split_kernel(cp):
    # Fused split_conv0 + split_conv1: one matmul against the concatenated
    # weight, two lane-dense outputs (no XLA-side channel slicing of a wide
    # intermediate).
    def kernel(x_ref, w_ref, b_ref, o0_ref, o1_ref):
        y = jnp.dot(x_ref[...], w_ref[...], preferred_element_type=jnp.float32)
        y = _mish(y + b_ref[...])
        o0_ref[...] = y[:, :cp].astype(o0_ref.dtype)
        o1_ref[...] = y[:, cp:].astype(o1_ref.dtype)
    return kernel


def _concat_conv_kernel(x1_ref, x0_ref, w1_ref, w0_ref, b_ref, o_ref):
    # concat_conv over torch.cat([x1, x0], channel) WITHOUT materializing the
    # concatenation: y = x1 @ W[:C] + x0 @ W[C:] + b, then Mish.
    y = jnp.dot(x1_ref[...], w1_ref[...], preferred_element_type=jnp.float32)
    y = y + jnp.dot(x0_ref[...], w0_ref[...], preferred_element_type=jnp.float32)
    o_ref[...] = _mish(y + b_ref[...]).astype(o_ref.dtype)


def _make_conv3x3_kernel(n_phase, tap_cols, C, Wo, Cout, has_res):
    """3x3 conv without im2col: one output row per grid step.
    refs = (x[kh=0, phases...], x[kh=1, ...], x[kh=2, ...], w, b, [res], out).
    Each x ref holds one padded input row (or one column-phase of it); the
    (9*C, Cout) weight and the bias are VMEM-resident (constant index_map)."""
    def kernel(*refs):
        x_refs = refs[:3 * n_phase]
        w_ref = refs[3 * n_phase]
        b_ref = refs[3 * n_phase + 1]
        r_ref = refs[3 * n_phase + 2] if has_res else None
        o_ref = refs[-1]

        acc = jnp.zeros((Wo, Cout), jnp.float32)
        for kh in range(3):
            for kw in range(3):
                phase, off = tap_cols[kw]
                xs = x_refs[kh * n_phase + phase][0, 0, pl.ds(off, Wo), :]
                wt = w_ref[pl.ds((kh * 3 + kw) * C, C), :]
                acc = acc + jnp.dot(xs, wt, preferred_element_type=jnp.float32)
        y = _mish(acc + b_ref[...])
        if has_res:
            y = y + r_ref[0, 0, :, :].astype(jnp.float32)
        o_ref[0, 0, :, :] = y.astype(o_ref.dtype)
    return kernel


# ----------------------------- Pallas wrappers -------------------------------

def conv1x1_bn_mish(x, w, b, out_dtype=jnp.bfloat16):
    """1x1 BasicConv: x(N,H,W,C) @ w(C,Cout) + folded-BN bias, Mish.  NHWC."""
    N, H, W, C = x.shape
    Cout = w.shape[1]
    M = N * H * W
    xf = x.reshape(M, C)
    Mp = _round_up(M, 8)
    if Mp != M:                                    # tiny (<8 row) pad only
        xf = jnp.pad(xf, ((0, Mp - M), (0, 0)))

    out_bytes = jnp.dtype(out_dtype).itemsize
    w_bytes = C * Cout * 2

    if w_bytes <= _WEIGHT_RESIDENT_MAX:
        cap = _row_cap(C * 2 + Cout * out_bytes, w_bytes + Cout * 4)
        tm = _pick_row_tile(Mp, cap)
        cost = pl.CostEstimate(
            flops=2 * Mp * C * Cout, transcendentals=2 * Mp * Cout,
            bytes_accessed=int(Mp * C * 2 + w_bytes + Cout * 4
                               + Mp * Cout * out_bytes))
        out = pl.pallas_call(
            _mm_bias_mish_kernel,
            out_shape=jax.ShapeDtypeStruct((Mp, Cout), out_dtype),
            grid=(Mp // tm,),
            in_specs=[pl.BlockSpec((tm, C), lambda i: (i, 0)),
                      pl.BlockSpec((C, Cout), lambda i: (0, 0)),    # resident
                      pl.BlockSpec((1, Cout), lambda i: (0, 0))],   # resident
            out_specs=pl.BlockSpec((tm, Cout), lambda i: (i, 0)),
            compiler_params=pltpu.CompilerParams(
                dimension_semantics=("parallel",),
                vmem_limit_bytes=_VMEM_LIMIT),
            cost_estimate=cost,
        )(xf, w, b)
    else:
        # K-tiled fallback (streamed weight), kept only for very large weights.
        tk = 512 if C % 512 == 0 else 256          # 256-wide MXU friendly
        Kp = _round_up(C, tk)
        if Kp != C:
            xf = jnp.pad(xf, ((0, 0), (0, Kp - C)))
            w = jnp.pad(w, ((0, Kp - C), (0, 0)))
        cap = _row_cap((tk + Cout) * 2 + Cout * (4 + out_bytes), Cout * 4)
        tm = _pick_row_tile(Mp, cap)
        cost = pl.CostEstimate(
            flops=2 * Mp * Kp * Cout, transcendentals=2 * Mp * Cout,
            bytes_accessed=int(Mp * Kp * 2 + (Mp // tm) * Kp * Cout * 2
                               + Mp * Cout * out_bytes))
        out = pl.pallas_call(
            _mm_bias_mish_ktiled_kernel,
            out_shape=jax.ShapeDtypeStruct((Mp, Cout), out_dtype),
            grid=(Mp // tm, Kp // tk),
            in_specs=[pl.BlockSpec((tm, tk), lambda i, k: (i, k)),
                      pl.BlockSpec((tk, Cout), lambda i, k: (k, 0)),
                      pl.BlockSpec((1, Cout), lambda i, k: (0, 0))],
            out_specs=pl.BlockSpec((tm, Cout), lambda i, k: (i, 0)),
            scratch_shapes=[pltpu.VMEM((tm, Cout), jnp.float32)],
            compiler_params=pltpu.CompilerParams(
                dimension_semantics=("parallel", "arbitrary"),
                vmem_limit_bytes=_VMEM_LIMIT),
            cost_estimate=cost,
        )(xf, w, b)

    out = out[:M] if Mp != M else out
    return out.reshape(N, H, W, Cout)


def conv1x1_split_fused(x, w, b, out_dtype=jnp.bfloat16):
    """Fused split_conv0 + split_conv1 (weight (C, 2*cp)); returns (x0, x1)
    as two separate lane-dense kernel outputs (no XLA channel slicing)."""
    N, H, W, C = x.shape
    two_cp = w.shape[1]
    cp = two_cp // 2
    M = N * H * W
    xf = x.reshape(M, C)
    Mp = _round_up(M, 8)
    if Mp != M:
        xf = jnp.pad(xf, ((0, Mp - M), (0, 0)))

    out_bytes = jnp.dtype(out_dtype).itemsize
    cap = _row_cap(C * 2 + two_cp * out_bytes, C * two_cp * 2 + two_cp * 4)
    tm = _pick_row_tile(Mp, cap)
    cost = pl.CostEstimate(
        flops=2 * Mp * C * two_cp, transcendentals=2 * Mp * two_cp,
        bytes_accessed=int(Mp * C * 2 + C * two_cp * 2 + two_cp * 4
                           + Mp * two_cp * out_bytes))
    x0, x1 = pl.pallas_call(
        _make_split_kernel(cp),
        out_shape=(jax.ShapeDtypeStruct((Mp, cp), out_dtype),
                   jax.ShapeDtypeStruct((Mp, cp), out_dtype)),
        grid=(Mp // tm,),
        in_specs=[pl.BlockSpec((tm, C), lambda i: (i, 0)),
                  pl.BlockSpec((C, two_cp), lambda i: (0, 0)),       # resident
                  pl.BlockSpec((1, two_cp), lambda i: (0, 0))],      # resident
        out_specs=(pl.BlockSpec((tm, cp), lambda i: (i, 0)),
                   pl.BlockSpec((tm, cp), lambda i: (i, 0))),
        compiler_params=pltpu.CompilerParams(
            dimension_semantics=("parallel",),
            vmem_limit_bytes=_VMEM_LIMIT),
        cost_estimate=cost,
    )(xf, w, b)
    if Mp != M:
        x0, x1 = x0[:M], x1[:M]
    return x0.reshape(N, H, W, cp), x1.reshape(N, H, W, cp)


def concat_conv_bn_mish(x1, x0, w1, w0, b, out_dtype=jnp.bfloat16):
    """concat_conv over torch.cat([x1, x0], channel), fused (no concatenated
    tensor in HBM); bf16 output, upcast happens after the final transpose."""
    N, H, W, C = x1.shape
    Cout = w1.shape[1]
    M = N * H * W
    x1f = x1.reshape(M, C)
    x0f = x0.reshape(M, C)
    Mp = _round_up(M, 8)
    if Mp != M:
        x1f = jnp.pad(x1f, ((0, Mp - M), (0, 0)))
        x0f = jnp.pad(x0f, ((0, Mp - M), (0, 0)))

    out_bytes = jnp.dtype(out_dtype).itemsize
    cap = _row_cap(2 * C * 2 + Cout * out_bytes, 2 * C * Cout * 2 + Cout * 4)
    tm = _pick_row_tile(Mp, cap)
    cost = pl.CostEstimate(
        flops=4 * Mp * C * Cout, transcendentals=2 * Mp * Cout,
        bytes_accessed=int(2 * Mp * C * 2 + 2 * C * Cout * 2 + Cout * 4
                           + Mp * Cout * out_bytes))
    out = pl.pallas_call(
        _concat_conv_kernel,
        out_shape=jax.ShapeDtypeStruct((Mp, Cout), out_dtype),
        grid=(Mp // tm,),
        in_specs=[pl.BlockSpec((tm, C), lambda i: (i, 0)),
                  pl.BlockSpec((tm, C), lambda i: (i, 0)),
                  pl.BlockSpec((C, Cout), lambda i: (0, 0)),         # resident
                  pl.BlockSpec((C, Cout), lambda i: (0, 0)),         # resident
                  pl.BlockSpec((1, Cout), lambda i: (0, 0))],        # resident
        out_specs=pl.BlockSpec((tm, Cout), lambda i: (i, 0)),
        compiler_params=pltpu.CompilerParams(
            dimension_semantics=("parallel",),
            vmem_limit_bytes=_VMEM_LIMIT),
        cost_estimate=cost,
    )(x1f, x0f, w1, w0, b)
    out = out[:M] if Mp != M else out
    return out.reshape(N, H, W, Cout)


def conv3x3_bn_mish(x, w, b, *, stride, residual=None, out_dtype=jnp.bfloat16):
    """3x3 BasicConv (pad=1) WITHOUT im2col.  Grid (N, H_out); per output row
    the kernel reads the 3 padded input rows it needs (block size 1 along H)
    and runs the 9 tap matmuls against the VMEM-resident (9*C, Cout) weight.
    Stride 2 uses even/odd column phases so every in-kernel slice is
    unit-stride.  Optionally adds the Resblock residual in the epilogue."""
    # TODO(synk): very large layers (9*C*Cout bf16 > VMEM budget) would need an
    # additional tap/K tiling of the resident weight; not required at CSPDarknet
    # channel widths.
    N, H, W, C = x.shape
    Cout = w.shape[1]
    Ho = (H - 1) // stride + 1
    Wo = (W - 1) // stride + 1

    xp = jnp.pad(x, ((0, 0), (1, 1), (1, 1), (0, 0)))    # spatial halo only

    if stride == 1:
        phases = [xp]
        tap_cols = [(0, 0), (0, 1), (0, 2)]              # kw -> (phase, col off)
    else:  # stride == 2
        phases = [xp[:, :, 0::2, :], xp[:, :, 1::2, :]]  # even / odd columns
        tap_cols = [(0, 0), (1, 0), (0, 1)]
    n_phase = len(phases)

    in_specs, args = [], []
    for kh in range(3):
        for ph in range(n_phase):
            wp = phases[ph].shape[2]
            in_specs.append(pl.BlockSpec(
                (1, 1, wp, C),
                lambda n, ho, kh=kh: (n, stride * ho + kh, 0, 0)))
            args.append(phases[ph])
    in_specs += [pl.BlockSpec((9 * C, Cout), lambda n, ho: (0, 0)),   # resident
                 pl.BlockSpec((1, Cout), lambda n, ho: (0, 0))]       # resident
    args += [w, b]
    has_res = residual is not None
    if has_res:
        in_specs.append(pl.BlockSpec((1, 1, Wo, residual.shape[3]),
                                     lambda n, ho: (n, ho, 0, 0)))
        args.append(residual)

    out_bytes = jnp.dtype(out_dtype).itemsize
    res_bytes = int(residual.size) * residual.dtype.itemsize if has_res else 0
    cost = pl.CostEstimate(
        flops=2 * N * Ho * Wo * 9 * C * Cout,
        transcendentals=2 * N * Ho * Wo * Cout,
        bytes_accessed=int(3 * xp.size * 2 + w.size * 2 + Cout * 4
                           + N * Ho * Wo * Cout * out_bytes + res_bytes))

    return pl.pallas_call(
        _make_conv3x3_kernel(n_phase, tap_cols, C, Wo, Cout, has_res),
        out_shape=jax.ShapeDtypeStruct((N, Ho, Wo, Cout), out_dtype),
        grid=(N, Ho),
        in_specs=in_specs,
        out_specs=pl.BlockSpec((1, 1, Wo, Cout), lambda n, ho: (n, ho, 0, 0)),
        compiler_params=pltpu.CompilerParams(
            dimension_semantics=("parallel", "parallel"),
            vmem_limit_bytes=_VMEM_LIMIT),
        cost_estimate=cost,
    )(*args)


# ----------------------------- Parameter init --------------------------------

def _fold_bn(key, cout):
    # BatchNorm eval mode, folded: y = gamma*(x-mean)/sqrt(var+eps) + beta.
    # TODO(synk): training-mode BN (batch statistics) is not reproduced.
    kg, kb, km, kv = jax.random.split(key, 4)
    gamma = 1.0 + 0.1 * jax.random.normal(kg, (cout,), jnp.float32)
    beta = 0.1 * jax.random.normal(kb, (cout,), jnp.float32)
    mean = 0.1 * jax.random.normal(km, (cout,), jnp.float32)
    var = 1.0 + 0.1 * jnp.abs(jax.random.normal(kv, (cout,), jnp.float32))
    eps = 1e-5
    scale = gamma / jnp.sqrt(var + eps)
    bias = beta - mean * scale
    return scale, bias


def init_basic_conv(key, cin, cout, k, cin_pad, cout_pad):
    kw, kbn = jax.random.split(key)
    fan_in = cin * k * k
    bound = 1.0 / math.sqrt(fan_in)
    # PyTorch weight layout (Cout, Cin, KH, KW).
    w = jax.random.uniform(kw, (cout, cin, k, k), jnp.float32, -bound, bound)
    scale, bias = _fold_bn(kbn, cout)
    # Fold BN scale into the conv weights, pad channels to lane-dense counts,
    # store in matmul (KH*KW*Cin_p, Cout_p) bf16 layout (row = (kh*k+kw)*Cin_p+cin).
    w = w * scale[:, None, None, None]
    w_mat = jnp.transpose(w, (2, 3, 1, 0))                 # (kh, kw, cin, cout)
    w_full = jnp.zeros((k, k, cin_pad, cout_pad), jnp.float32)
    w_full = w_full.at[:, :, :cin, :cout].set(w_mat)
    w_full = w_full.reshape(k * k * cin_pad, cout_pad).astype(jnp.bfloat16)
    b_full = jnp.zeros((1, cout_pad), jnp.float32).at[0, :cout].set(bias)
    return {"w": w_full, "b": b_full}


def init_concat_conv(key, out_channels, cp):
    kw, kbn = jax.random.split(key)
    cin = 2 * out_channels
    bound = 1.0 / math.sqrt(cin)
    w = jax.random.uniform(kw, (out_channels, cin), jnp.float32, -bound, bound)
    scale, bias = _fold_bn(kbn, out_channels)
    w = jnp.transpose(w * scale[:, None])                  # (2*out_c, out_c)
    w1 = w[:out_channels]                                  # rows acting on x1
    w0 = w[out_channels:]                                  # rows acting on x0

    def pad_w(wm):
        return (jnp.zeros((cp, cp), jnp.float32)
                .at[:out_channels, :out_channels].set(wm).astype(jnp.bfloat16))

    b_full = jnp.zeros((1, cp), jnp.float32).at[0, :out_channels].set(bias)
    return {"w1": pad_w(w1), "w0": pad_w(w0), "b": b_full}


def init_csp_layer(key, in_channels, out_channels, num_blocks=1):
    cin_p = _round_up(in_channels, 128)
    cp = _round_up(out_channels, 128)
    keys = jax.random.split(key, 5 + 2 * num_blocks)

    split0 = init_basic_conv(keys[1], out_channels, out_channels, 1, cp, cp)
    split1 = init_basic_conv(keys[2], out_channels, out_channels, 1, cp, cp)
    params = {
        "downsample": init_basic_conv(keys[0], in_channels, out_channels, 3,
                                      cin_p, cp),
        # split_conv0 / split_conv1 fused into one matmul over 2*cp outputs.
        "split_fused": {
            "w": jnp.concatenate([split0["w"], split1["w"]], axis=1),
            "b": jnp.concatenate([split0["b"], split1["b"]], axis=1),
        },
        "resblocks": [],
        "blocks_out": init_basic_conv(keys[3 + 2 * num_blocks], out_channels,
                                      out_channels, 1, cp, cp),
        "concat": init_concat_conv(keys[4 + 2 * num_blocks], out_channels, cp),
    }
    for bi in range(num_blocks):
        params["resblocks"].append({
            "conv1": init_basic_conv(keys[3 + 2 * bi], out_channels,
                                     out_channels, 1, cp, cp),
            "conv2": init_basic_conv(keys[4 + 2 * bi], out_channels,
                                     out_channels, 3, cp, cp),
        })
    return params


# ----------------------------- CSPLayer forward -------------------------------

@functools.partial(jax.jit, static_argnames=("out_channels",))
def csp_layer_forward(params, x_nchw, *, out_channels):
    # NCHW -> NHWC, bf16 activations, pad input channels to the padded width
    # baked into the downsample weights (padded channels stay exactly zero).
    x = jnp.transpose(x_nchw, (0, 2, 3, 1)).astype(jnp.bfloat16)
    cin_p = params["downsample"]["w"].shape[0] // 9
    if x.shape[-1] != cin_p:
        x = jnp.pad(x, ((0, 0), (0, 0), (0, 0), (0, cin_p - x.shape[-1])))

    # downsample_conv: 3x3 / stride 2 (no im2col).
    x = conv3x3_bn_mish(x, params["downsample"]["w"], params["downsample"]["b"],
                        stride=2)

    # split_conv0 + split_conv1 fused into one kernel with two outputs.
    x0, x1 = conv1x1_split_fused(x, params["split_fused"]["w"],
                                 params["split_fused"]["b"])

    # blocks_conv: Resblock(s) then a 1x1 BasicConv.
    for rb in params["resblocks"]:
        h = conv1x1_bn_mish(x1, rb["conv1"]["w"], rb["conv1"]["b"])
        x1 = conv3x3_bn_mish(h, rb["conv2"]["w"], rb["conv2"]["b"],
                             stride=1, residual=x1)        # x1 + block(x1)
    x1 = conv1x1_bn_mish(x1, params["blocks_out"]["w"], params["blocks_out"]["b"])

    # torch.cat([x1, x0], dim=1) + concat_conv, fused; output stays bf16.
    out = concat_conv_bn_mish(x1, x0, params["concat"]["w1"],
                              params["concat"]["w0"], params["concat"]["b"])

    out = out[..., :out_channels]                 # drop channel padding
    out = jnp.transpose(out, (0, 3, 1, 2))        # NHWC -> NCHW
    return out.astype(jnp.float32)                # upcast once, after transpose


# ----------------------------- Main -------------------------------------------

if __name__ == "__main__":
    key = jax.random.PRNGKey(0)
    k_in, k_par = jax.random.split(key)

    in_channels, out_channels, num_blocks = 4, 8, 1
    x = jax.random.normal(k_in, (2, in_channels, 16, 16), jnp.float32)  # NCHW

    params = init_csp_layer(k_par, in_channels, out_channels, num_blocks)

    out = csp_layer_forward(params, x, out_channels=out_channels)
    out = jax.block_until_ready(out)

    # After the stride-2 downsample, spatial 16x16 -> 8x8, channels -> out_channels.
    assert out.shape == (2, out_channels, 8, 8), out.shape
    assert bool(jnp.all(jnp.isfinite(out)))

    print("KERNEL_OK")
</pallas_src>

<mosaic_0001>
module attributes {stable_mosaic.version = 11 : i64} {
  func.func @kernel(%arg0: i32, %arg1: i32, %arg2: memref<1x1x9x128xbf16, #tpu.memory_space<vmem>>, %arg3: memref<1x1x9x128xbf16, #tpu.memory_space<vmem>>, %arg4: memref<1x1x9x128xbf16, #tpu.memory_space<vmem>>, %arg5: memref<1x1x9x128xbf16, #tpu.memory_space<vmem>>, %arg6: memref<1x1x9x128xbf16, #tpu.memory_space<vmem>>, %arg7: memref<1x1x9x128xbf16, #tpu.memory_space<vmem>>, %arg8: memref<1152x128xbf16, #tpu.memory_space<vmem>>, %arg9: memref<1x128xf32, #tpu.memory_space<vmem>>, %arg10: memref<1x1x8x128xbf16, #tpu.memory_space<vmem>>) attributes {dimension_semantics = [#tpu.dimension_semantics<parallel>, #tpu.dimension_semantics<parallel>], iteration_bounds = array<i64: 2, 8>, scalar_prefetch = 0 : i64, scratch_operands = 0 : i64, tpu.core_type = #tpu.core_type<tc>, window_params = [{transform_indices = @transform_0, window_bounds = array<i64: 1, 1, 9, 128>}, {transform_indices = @transform_1, window_bounds = array<i64: 1, 1, 9, 128>}, {transform_indices = @transform_2, window_bounds = array<i64: 1, 1, 9, 128>}, {transform_indices = @transform_3, window_bounds = array<i64: 1, 1, 9, 128>}, {transform_indices = @transform_4, window_bounds = array<i64: 1, 1, 9, 128>}, {transform_indices = @transform_5, window_bounds = array<i64: 1, 1, 9, 128>}, {pipeline_mode = #tpu.pipeline_mode<synchronous>, transform_indices = @transform_6, window_bounds = array<i64: 1152, 128>}, {pipeline_mode = #tpu.pipeline_mode<synchronous>, transform_indices = @transform_7, window_bounds = array<i64: 1, 128>}, {transform_indices = @transform_8, window_bounds = array<i64: 1, 1, 8, 128>}]} {
    %cst = arith.constant 0.000000e+00 : f32
    %0 = vector.broadcast %cst : f32 to vector<8x128xf32>
    %c0 = arith.constant 0 : index
    %c0_0 = arith.constant 0 : index
    %c0_1 = arith.constant 0 : index
    %c0_2 = arith.constant 0 : index
    %1 = vector.load %arg2[%c0, %c0_0, %c0_1, %c0_2] : memref<1x1x9x128xbf16, #tpu.memory_space<vmem>>, vector<1x1x8x128xbf16>
    %2 = vector.shape_cast %1 : vector<1x1x8x128xbf16> to vector<8x128xbf16>
    %c0_3 = arith.constant 0 : index
    %c0_4 = arith.constant 0 : index
    %3 = vector.load %arg8[%c0_3, %c0_4] : memref<1152x128xbf16, #tpu.memory_space<vmem>>, vector<128x128xbf16>
    %cst_5 = arith.constant dense<0.000000e+00> : vector<8x128xf32>
    %4 = tpu.matmul %2, %3, %cst_5 {dimension_numbers = #tpu.dot_dimension_numbers<[1], [0], [0], [1], [0, 0, 1, 1], [], []>} : vector<8x128xbf16>, vector<128x128xbf16>, vector<8x128xf32> -> vector<8x128xf32>
    %5 = arith.addf %0, %4 : vector<8x128xf32>
    %c0_6 = arith.constant 0 : index
    %c0_7 = arith.constant 0 : index
    %c0_8 = arith.constant 0 : index
    %c0_9 = arith.constant 0 : index
    %6 = vector.load %arg3[%c0_6, %c0_7, %c0_8, %c0_9] : memref<1x1x9x128xbf16, #tpu.memory_space<vmem>>, vector<1x1x8x128xbf16>
    %7 = vector.shape_cast %6 : vector<1x1x8x128xbf16> to vector<8x128xbf16>
    %c128 = arith.constant 128 : index
    %c0_10 = arith.constant 0 : index
    %8 = vector.load %arg8[%c128, %c0_10] : memref<1152x128xbf16, #tpu.memory_space<vmem>>, vector<128x128xbf16>
    %cst_11 = arith.constant dense<0.000000e+00> : vector<8x128xf32>
    %9 = tpu.matmul %7, %8, %cst_11 {dimension_numbers = #tpu.dot_dimension_numbers<[1], [0], [0], [1], [0, 0, 1, 1], [], []>} : vector<8x128xbf16>, vector<128x128xbf16>, vector<8x128xf32> -> vector<8x128xf32>
    %10 = arith.addf %5, %9 : vector<8x128xf32>
    %c0_12 = arith.constant 0 : index
    %c0_13 = arith.constant 0 : index
    %c1 = arith.constant 1 : index
    %c0_14 = arith.constant 0 : index
    %11 = vector.load %arg2[%c0_12, %c0_13, %c1, %c0_14] : memref<1x1x9x128xbf16, #tpu.memory_space<vmem>>, vector<1x1x8x128xbf16>
    %12 = vector.shape_cast %11 : vector<1x1x8x128xbf16> to vector<8x128xbf16>
    %c256 = arith.constant 256 : index
    %c0_15 = arith.constant 0 : index
    %13 = vector.load %arg8[%c256, %c0_15] : memref<1152x128xbf16, #tpu.memory_space<vmem>>, vector<128x128xbf16>
    %cst_16 = arith.constant dense<0.000000e+00> : vector<8x128xf32>
    %14 = tpu.matmul %12, %13, %cst_16 {dimension_numbers = #tpu.dot_dimension_numbers<[1], [0], [0], [1], [0, 0, 1, 1], [], []>} : vector<8x128xbf16>, vector<128x128xbf16>, vector<8x128xf32> -> vector<8x128xf32>
    %15 = arith.addf %10, %14 : vector<8x128xf32>
    %c0_17 = arith.constant 0 : index
    %c0_18 = arith.constant 0 : index
    %c0_19 = arith.constant 0 : index
    %c0_20 = arith.constant 0 : index
    %16 = vector.load %arg4[%c0_17, %c0_18, %c0_19, %c0_20] : memref<1x1x9x128xbf16, #tpu.memory_space<vmem>>, vector<1x1x8x128xbf16>
    %17 = vector.shape_cast %16 : vector<1x1x8x128xbf16> to vector<8x128xbf16>
    %c384 = arith.constant 384 : index
    %c0_21 = arith.constant 0 : index
    %18 = vector.load %arg8[%c384, %c0_21] : memref<1152x128xbf16, #tpu.memory_space<vmem>>, vector<128x128xbf16>
    %cst_22 = arith.constant dense<0.000000e+00> : vector<8x128xf32>
    %19 = tpu.matmul %17, %18, %cst_22 {dimension_numbers = #tpu.dot_dimension_numbers<[1], [0], [0], [1], [0, 0, 1, 1], [], []>} : vector<8x128xbf16>, vector<128x128xbf16>, vector<8x128xf32> -> vector<8x128xf32>
    %20 = arith.addf %15, %19 : vector<8x128xf32>
    %c0_23 = arith.constant 0 : index
    %c0_24 = arith.constant 0 : index
    %c0_25 = arith.constant 0 : index
    %c0_26 = arith.constant 0 : index
    %21 = vector.load %arg5[%c0_23, %c0_24, %c0_25, %c0_26] : memref<1x1x9x128xbf16, #tpu.memory_space<vmem>>, vector<1x1x8x128xbf16>
    %22 = vector.shape_cast %21 : vector<1x1x8x128xbf16> to vector<8x128xbf16>
    %c512 = arith.constant 512 : index
    %c0_27 = arith.constant 0 : index
    %23 = vector.load %arg8[%c512, %c0_27] : memref<1152x128xbf16, #tpu.memory_space<vmem>>, vector<128x128xbf16>
    %cst_28 = arith.constant dense<0.000000e+00> : vector<8x128xf32>
    %24 = tpu.matmul %22, %23, %cst_28 {dimension_numbers = #tpu.dot_dimension_numbers<[1], [0], [0], [1], [0, 0, 1, 1], [], []>} : vector<8x128xbf16>, vector<128x128xbf16>, vector<8x128xf32> -> vector<8x128xf32>
    %25 = arith.addf %20, %24 : vector<8x128xf32>
    %c0_29 = arith.constant 0 : index
    %c0_30 = arith.constant 0 : index
    %c1_31 = arith.constant 1 : index
    %c0_32 = arith.constant 0 : index
    %26 = vector.load %arg4[%c0_29, %c0_30, %c1_31, %c0_32] : memref<1x1x9x128xbf16, #tpu.memory_space<vmem>>, vector<1x1x8x128xbf16>
    %27 = vector.shape_cast %26 : vector<1x1x8x128xbf16> to vector<8x128xbf16>
    %c640 = arith.constant 640 : index
    %c0_33 = arith.constant 0 : index
    %28 = vector.load %arg8[%c640, %c0_33] : memref<1152x128xbf16, #tpu.memory_space<vmem>>, vector<128x128xbf16>
    %cst_34 = arith.constant dense<0.000000e+00> : vector<8x128xf32>
    %29 = tpu.matmul %27, %28, %cst_34 {dimension_numbers = #tpu.dot_dimension_numbers<[1], [0], [0], [1], [0, 0, 1, 1], [], []>} : vector<8x128xbf16>, vector<128x128xbf16>, vector<8x128xf32> -> vector<8x128xf32>
    %30 = arith.addf %25, %29 : vector<8x128xf32>
    %c0_35 = arith.constant 0 : index
    %c0_36 = arith.constant 0 : index
    %c0_37 = arith.constant 0 : index
    %c0_38 = arith.constant 0 : index
    %31 = vector.load %arg6[%c0_35, %c0_36, %c0_37, %c0_38] : memref<1x1x9x128xbf16, #tpu.memory_space<vmem>>, vector<1x1x8x128xbf16>
    %32 = vector.shape_cast %31 : vector<1x1x8x128xbf16> to vector<8x128xbf16>
    %c768 = arith.constant 768 : index
    %c0_39 = arith.constant 0 : index
    %33 = vector.load %arg8[%c768, %c0_39] : memref<1152x128xbf16, #tpu.memory_space<vmem>>, vector<128x128xbf16>
    %cst_40 = arith.constant dense<0.000000e+00> : vector<8x128xf32>
    %34 = tpu.matmul %32, %33, %cst_40 {dimension_numbers = #tpu.dot_dimension_numbers<[1], [0], [0], [1], [0, 0, 1, 1], [], []>} : vector<8x128xbf16>, vector<128x128xbf16>, vector<8x128xf32> -> vector<8x128xf32>
    %35 = arith.addf %30, %34 : vector<8x128xf32>
    %c0_41 = arith.constant 0 : index
    %c0_42 = arith.constant 0 : index
    %c0_43 = arith.constant 0 : index
    %c0_44 = arith.constant 0 : index
    %36 = vector.load %arg7[%c0_41, %c0_42, %c0_43, %c0_44] : memref<1x1x9x128xbf16, #tpu.memory_space<vmem>>, vector<1x1x8x128xbf16>
    %37 = vector.shape_cast %36 : vector<1x1x8x128xbf16> to vector<8x128xbf16>
    %c896 = arith.constant 896 : index
    %c0_45 = arith.constant 0 : index
    %38 = vector.load %arg8[%c896, %c0_45] : memref<1152x128xbf16, #tpu.memory_space<vmem>>, vector<128x128xbf16>
    %cst_46 = arith.constant dense<0.000000e+00> : vector<8x128xf32>
    %39 = tpu.matmul %37, %38, %cst_46 {dimension_numbers = #tpu.dot_dimension_numbers<[1], [0], [0], [1], [0, 0, 1, 1], [], []>} : vector<8x128xbf16>, vector<128x128xbf16>, vector<8x128xf32> -> vector<8x128xf32>
    %40 = arith.addf %35, %39 : vector<8x128xf32>
    %c0_47 = arith.constant 0 : index
    %c0_48 = arith.constant 0 : index
    %c1_49 = arith.constant 1 : index
    %c0_50 = arith.constant 0 : index
    %41 = vector.load %arg6[%c0_47, %c0_48, %c1_49, %c0_50] : memref<1x1x9x128xbf16, #tpu.memory_space<vmem>>, vector<1x1x8x128xbf16>
    %42 = vector.shape_cast %41 : vector<1x1x8x128xbf16> to vector<8x128xbf16>
    %c1024 = arith.constant 1024 : index
    %c0_51 = arith.constant 0 : index
    %43 = vector.load %arg8[%c1024, %c0_51] : memref<1152x128xbf16, #tpu.memory_space<vmem>>, vector<128x128xbf16>
    %cst_52 = arith.constant dense<0.000000e+00> : vector<8x128xf32>
    %44 = tpu.matmul %42, %43, %cst_52 {dimension_numbers = #tpu.dot_dimension_numbers<[1], [0], [0], [1], [0, 0, 1, 1], [], []>} : vector<8x128xbf16>, vector<128x128xbf16>, vector<8x128xf32> -> vector<8x128xf32>
    %45 = arith.addf %40, %44 : vector<8x128xf32>
    %c0_53 = arith.constant 0 : index
    %c0_54 = arith.constant 0 : index
    %46 = vector.load %arg9[%c0_53, %c0_54] : memref<1x128xf32, #tpu.memory_space<vmem>>, vector<1x128xf32>
    %47 = vector.broadcast %46 : vector<1x128xf32> to vector<8x128xf32>
    %48 = arith.addf %45, %47 : vector<8x128xf32>
    %cst_55 = arith.constant 2.000000e+01 : f32
    %49 = vector.broadcast %cst_55 : f32 to vector<8x128xf32>
    %50 = arith.minimumf %48, %49 : vector<8x128xf32>
    %51 = math.exp %50 : vector<8x128xf32>
    %cst_56 = arith.constant 1.000000e+00 : f32
    %52 = vector.broadcast %cst_56 : f32 to vector<8x128xf32>
    %53 = arith.addf %52, %51 : vector<8x128xf32>
    %54 = arith.mulf %53, %53 : vector<8x128xf32>
    %cst_57 = arith.constant 1.000000e+00 : f32
    %55 = vector.broadcast %cst_57 : f32 to vector<8x128xf32>
    %56 = arith.subf %54, %55 : vector<8x128xf32>
    %cst_58 = arith.constant 1.000000e+00 : f32
    %57 = vector.broadcast %cst_58 : f32 to vector<8x128xf32>
    %58 = arith.addf %54, %57 : vector<8x128xf32>
    %59 = tpu.reciprocal %58 {approx = true} : vector<8x128xf32> -> vector<8x128xf32>
    %60 = arith.mulf %56, %59 : vector<8x128xf32>
    %cst_59 = arith.constant 2.000000e+01 : f32
    %61 = vector.broadcast %cst_59 : f32 to vector<8x128xf32>
    %62 = arith.cmpf ogt, %48, %61 : vector<8x128xf32>
    %63 = arith.mulf %48, %60 : vector<8x128xf32>
    %64 = arith.select %62, %48, %63 : vector<8x128xi1>, vector<8x128xf32>
    %65 = arith.truncf %64 : vector<8x128xf32> to vector<8x128xbf16>
    %c0_60 = arith.constant 0 : index
    %c0_61 = arith.constant 0 : index
    %c0_62 = arith.constant 0 : index
    %c0_63 = arith.constant 0 : index
    %66 = vector.load %arg10[%c0_60, %c0_61, %c0_62, %c0_63] : memref<1x1x8x128xbf16, #tpu.memory_space<vmem>>, vector<1x1x8x128xbf16>
    %67 = vector.shape_cast %66 : vector<1x1x8x128xbf16> to vector<8x128xbf16>
    %68 = vector.shape_cast %65 : vector<8x128xbf16> to vector<1x1x8x128xbf16>
    tpu.vector_store %arg10[%c0_60, %c0_61, %c0_62, %c0_63], %68 {strides = array<i32>} : memref<1x1x8x128xbf16, #tpu.memory_space<vmem>>, vector<1x1x8x128xbf16>,
    return
  }
  func.func @transform_0(%arg0: i32, %arg1: i32) -> (i32, i32, i32, i32) {
    %c2_i32 = arith.constant 2 : i32
    %0 = arith.muli %c2_i32, %arg1 : i32
    %c0_i32 = arith.constant 0 : i32
    %1 = arith.addi %0, %c0_i32 : i32
    %c0_i32_0 = arith.constant 0 : i32
    %c0_i32_1 = arith.constant 0 : i32
    %c0_i32_2 = arith.constant 0 : i32
    return %arg0, %1, %c0_i32_0, %c0_i32_1 : i32, i32, i32, i32
  }
  func.func @transform_1(%arg0: i32, %arg1: i32) -> (i32, i32, i32, i32) {
    %c2_i32 = arith.constant 2 : i32
    %0 = arith.muli %c2_i32, %arg1 : i32
    %c0_i32 = arith.constant 0 : i32
    %1 = arith.addi %0, %c0_i32 : i32
    %c0_i32_0 = arith.constant 0 : i32
    %c0_i32_1 = arith.constant 0 : i32
    %c0_i32_2 = arith.constant 0 : i32
    return %arg0, %1, %c0_i32_0, %c0_i32_1 : i32, i32, i32, i32
  }
  func.func @transform_2(%arg0: i32, %arg1: i32) -> (i32, i32, i32, i32) {
    %c2_i32 = arith.constant 2 : i32
    %0 = arith.muli %c2_i32, %arg1 : i32
    %c1_i32 = arith.constant 1 : i32
    %1 = arith.addi %0, %c1_i32 : i32
    %c0_i32 = arith.constant 0 : i32
    %c0_i32_0 = arith.constant 0 : i32
    %c0_i32_1 = arith.constant 0 : i32
    return %arg0, %1, %c0_i32, %c0_i32_0 : i32, i32, i32, i32
  }
  func.func @transform_3(%arg0: i32, %arg1: i32) -> (i32, i32, i32, i32) {
    %c2_i32 = arith.constant 2 : i32
    %0 = arith.muli %c2_i32, %arg1 : i32
    %c1_i32 = arith.constant 1 : i32
    %1 = arith.addi %0, %c1_i32 : i32
    %c0_i32 = arith.constant 0 : i32
    %c0_i32_0 = arith.constant 0 : i32
    %c0_i32_1 = arith.constant 0 : i32
    return %arg0, %1, %c0_i32, %c0_i32_0 : i32, i32, i32, i32
  }
  func.func @transform_4(%arg0: i32, %arg1: i32) -> (i32, i32, i32, i32) {
    %c2_i32 = arith.constant 2 : i32
    %0 = arith.muli %c2_i32, %arg1 : i32
    %c2_i32_0 = arith.constant 2 : i32
    %1 = arith.addi %0, %c2_i32_0 : i32
    %c0_i32 = arith.constant 0 : i32
    %c0_i32_1 = arith.constant 0 : i32
    %c0_i32_2 = arith.constant 0 : i32
    return %arg0, %1, %c0_i32, %c0_i32_1 : i32, i32, i32, i32
  }
  func.func @transform_5(%arg0: i32, %arg1: i32) -> (i32, i32, i32, i32) {
    %c2_i32 = arith.constant 2 : i32
    %0 = arith.muli %c2_i32, %arg1 : i32
    %c2_i32_0 = arith.constant 2 : i32
    %1 = arith.addi %0, %c2_i32_0 : i32
    %c0_i32 = arith.constant 0 : i32
    %c0_i32_1 = arith.constant 0 : i32
    %c0_i32_2 = arith.constant 0 : i32
    return %arg0, %1, %c0_i32, %c0_i32_1 : i32, i32, i32, i32
  }
  func.func @transform_6(%arg0: i32, %arg1: i32) -> (i32, i32) {
    %c0_i32 = arith.constant 0 : i32
    %c0_i32_0 = arith.constant 0 : i32
    %c0_i32_1 = arith.constant 0 : i32
    return %c0_i32, %c0_i32_0 : i32, i32
  }
  func.func @transform_7(%arg0: i32, %arg1: i32) -> (i32, i32) {
    %c0_i32 = arith.constant 0 : i32
    %c0_i32_0 = arith.constant 0 : i32
    %c0_i32_1 = arith.constant 0 : i32
    return %c0_i32, %c0_i32_0 : i32, i32
  }
  func.func @transform_8(%arg0: i32, %arg1: i32) -> (i32, i32, i32, i32) {
    %c0_i32 = arith.constant 0 : i32
    %c0_i32_0 = arith.constant 0 : i32
    %c0_i32_1 = arith.constant 0 : i32
    return %arg0, %arg1, %c0_i32, %c0_i32_0 : i32, i32, i32, i32
  }
}

module attributes {stable_mosaic.version = 11 : i64} {
  func.func @kernel(%arg0: i32, %arg1: memref<64x128xbf16, #tpu.memory_space<vmem>>, %arg2: memref<128x256xbf16, #tpu.memory_space<vmem>>, %arg3: memref<1x256xf32, #tpu.memory_space<vmem>>, %arg4: memref<64x128xbf16, #tpu.memory_space<vmem>>, %arg5: memref<64x128xbf16, #tpu.memory_space<vmem>>) attributes {dimension_semantics = [#tpu.dimension_semantics<parallel>], iteration_bounds = array<i64: 2>, scalar_prefetch = 0 : i64, scratch_operands = 0 : i64, tpu.core_type = #tpu.core_type<tc>, window_params = [{transform_indices = @transform_0, window_bounds = array<i64: 64, 128>}, {pipeline_mode = #tpu.pipeline_mode<synchronous>, transform_indices = @transform_1, window_bounds = array<i64: 128, 256>}, {pipeline_mode = #tpu.pipeline_mode<synchronous>, transform_indices = @transform_2, window_bounds = array<i64: 1, 256>}, {transform_indices = @transform_3, window_bounds = array<i64: 64, 128>}, {transform_indices = @transform_4, window_bounds = array<i64: 64, 128>}]} {
    %c0 = arith.constant 0 : index
    %c0_0 = arith.constant 0 : index
    %0 = vector.load %arg1[%c0, %c0_0] : memref<64x128xbf16, #tpu.memory_space<vmem>>, vector<64x128xbf16>
    %c0_1 = arith.constant 0 : index
    %c0_2 = arith.constant 0 : index
    %1 = vector.load %arg2[%c0_1, %c0_2] : memref<128x256xbf16, #tpu.memory_space<vmem>>, vector<128x256xbf16>
    %cst = arith.constant dense<0.000000e+00> : vector<64x256xf32>
    %2 = tpu.matmul %0, %1, %cst {dimension_numbers = #tpu.dot_dimension_numbers<[1], [0], [0], [1], [0, 0, 1, 1], [], []>} : vector<64x128xbf16>, vector<128x256xbf16>, vector<64x256xf32> -> vector<64x256xf32>
    %c0_3 = arith.constant 0 : index
    %c0_4 = arith.constant 0 : index
    %3 = vector.load %arg3[%c0_3, %c0_4] : memref<1x256xf32, #tpu.memory_space<vmem>>, vector<1x256xf32>
    %4 = vector.broadcast %3 : vector<1x256xf32> to vector<64x256xf32>
    %5 = arith.addf %2, %4 : vector<64x256xf32>
    %cst_5 = arith.constant 2.000000e+01 : f32
    %6 = vector.broadcast %cst_5 : f32 to vector<64x256xf32>
    %7 = arith.minimumf %5, %6 : vector<64x256xf32>
    %8 = math.exp %7 : vector<64x256xf32>
    %cst_6 = arith.constant 1.000000e+00 : f32
    %9 = vector.broadcast %cst_6 : f32 to vector<64x256xf32>
    %10 = arith.addf %9, %8 : vector<64x256xf32>
    %11 = arith.mulf %10, %10 : vector<64x256xf32>
    %cst_7 = arith.constant 1.000000e+00 : f32
    %12 = vector.broadcast %cst_7 : f32 to vector<64x256xf32>
    %13 = arith.subf %11, %12 : vector<64x256xf32>
    %cst_8 = arith.constant 1.000000e+00 : f32
    %14 = vector.broadcast %cst_8 : f32 to vector<64x256xf32>
    %15 = arith.addf %11, %14 : vector<64x256xf32>
    %16 = tpu.reciprocal %15 {approx = true} : vector<64x256xf32> -> vector<64x256xf32>
    %17 = arith.mulf %13, %16 : vector<64x256xf32>
    %cst_9 = arith.constant 2.000000e+01 : f32
    %18 = vector.broadcast %cst_9 : f32 to vector<64x256xf32>
    %19 = arith.cmpf ogt, %5, %18 : vector<64x256xf32>
    %20 = arith.mulf %5, %17 : vector<64x256xf32>
    %21 = arith.select %19, %5, %20 : vector<64x256xi1>, vector<64x256xf32>
    %22 = vector.extract_strided_slice %21 {offsets = [0, 0], sizes = [64, 128], strides = [1, 1]} : vector<64x256xf32> to vector<64x128xf32>
    %23 = arith.truncf %22 : vector<64x128xf32> to vector<64x128xbf16>
    %c0_10 = arith.constant 0 : index
    %c0_11 = arith.constant 0 : index
    %24 = vector.load %arg4[%c0_10, %c0_11] : memref<64x128xbf16, #tpu.memory_space<vmem>>, vector<64x128xbf16>
    tpu.vector_store %arg4[%c0_10, %c0_11], %23 {strides = array<i32>} : memref<64x128xbf16, #tpu.memory_space<vmem>>, vector<64x128xbf16>,
    %25 = vector.extract_strided_slice %21 {offsets = [0, 128], sizes = [64, 128], strides = [1, 1]} : vector<64x256xf32> to vector<64x128xf32>
    %26 = arith.truncf %25 : vector<64x128xf32> to vector<64x128xbf16>
    %c0_12 = arith.constant 0 : index
    %c0_13 = arith.constant 0 : index
    %27 = vector.load %arg5[%c0_12, %c0_13] : memref<64x128xbf16, #tpu.memory_space<vmem>>, vector<64x128xbf16>
    tpu.vector_store %arg5[%c0_12, %c0_13], %26 {strides = array<i32>} : memref<64x128xbf16, #tpu.memory_space<vmem>>, vector<64x128xbf16>,
    return
  }
  func.func @transform_0(%arg0: i32) -> (i32, i32) {
    %c0_i32 = arith.constant 0 : i32
    %c0_i32_0 = arith.constant 0 : i32
    return %arg0, %c0_i32 : i32, i32
  }
  func.func @transform_1(%arg0: i32) -> (i32, i32) {
    %c0_i32 = arith.constant 0 : i32
    %c0_i32_0 = arith.constant 0 : i32
    %c0_i32_1 = arith.constant 0 : i32
    return %c0_i32, %c0_i32_0 : i32, i32
  }
  func.func @transform_2(%arg0: i32) -> (i32, i32) {
    %c0_i32 = arith.constant 0 : i32
    %c0_i32_0 = arith.constant 0 : i32
    %c0_i32_1 = arith.constant 0 : i32
    return %c0_i32, %c0_i32_0 : i32, i32
  }
  func.func @transform_3(%arg0: i32) -> (i32, i32) {
    %c0_i32 = arith.constant 0 : i32
    %c0_i32_0 = arith.constant 0 : i32
    return %arg0, %c0_i32 : i32, i32
  }
  func.func @transform_4(%arg0: i32) -> (i32, i32) {
    %c0_i32 = arith.constant 0 : i32
    %c0_i32_0 = arith.constant 0 : i32
    return %arg0, %c0_i32 : i32, i32
  }
}

module attributes {stable_mosaic.version = 11 : i64} {
  func.func @_mm_bias_mish_kernel(%arg0: i32, %arg1: memref<64x128xbf16, #tpu.memory_space<vmem>>, %arg2: memref<128x128xbf16, #tpu.memory_space<vmem>>, %arg3: memref<1x128xf32, #tpu.memory_space<vmem>>, %arg4: memref<64x128xbf16, #tpu.memory_space<vmem>>) attributes {dimension_semantics = [#tpu.dimension_semantics<parallel>], iteration_bounds = array<i64: 2>, scalar_prefetch = 0 : i64, scratch_operands = 0 : i64, tpu.core_type = #tpu.core_type<tc>, window_params = [{transform_indices = @transform_0, window_bounds = array<i64: 64, 128>}, {pipeline_mode = #tpu.pipeline_mode<synchronous>, transform_indices = @transform_1, window_bounds = array<i64: 128, 128>}, {pipeline_mode = #tpu.pipeline_mode<synchronous>, transform_indices = @transform_2, window_bounds = array<i64: 1, 128>}, {transform_indices = @transform_3, window_bounds = array<i64: 64, 128>}]} {
    %c0 = arith.constant 0 : index
    %c0_0 = arith.constant 0 : index
    %0 = vector.load %arg1[%c0, %c0_0] : memref<64x128xbf16, #tpu.memory_space<vmem>>, vector<64x128xbf16>
    %c0_1 = arith.constant 0 : index
    %c0_2 = arith.constant 0 : index
    %1 = vector.load %arg2[%c0_1, %c0_2] : memref<128x128xbf16, #tpu.memory_space<vmem>>, vector<128x128xbf16>
    %cst = arith.constant dense<0.000000e+00> : vector<64x128xf32>
    %2 = tpu.matmul %0, %1, %cst {dimension_numbers = #tpu.dot_dimension_numbers<[1], [0], [0], [1], [0, 0, 1, 1], [], []>} : vector<64x128xbf16>, vector<128x128xbf16>, vector<64x128xf32> -> vector<64x128xf32>
    %c0_3 = arith.constant 0 : index
    %c0_4 = arith.constant 0 : index
    %3 = vector.load %arg3[%c0_3, %c0_4] : memref<1x128xf32, #tpu.memory_space<vmem>>, vector<1x128xf32>
    %4 = vector.broadcast %3 : vector<1x128xf32> to vector<64x128xf32>
    %5 = arith.addf %2, %4 : vector<64x128xf32>
    %cst_5 = arith.constant 2.000000e+01 : f32
    %6 = vector.broadcast %cst_5 : f32 to vector<64x128xf32>
    %7 = arith.minimumf %5, %6 : vector<64x128xf32>
    %8 = math.exp %7 : vector<64x128xf32>
    %cst_6 = arith.constant 1.000000e+00 : f32
    %9 = vector.broadcast %cst_6 : f32 to vector<64x128xf32>
    %10 = arith.addf %9, %8 : vector<64x128xf32>
    %11 = arith.mulf %10, %10 : vector<64x128xf32>
    %cst_7 = arith.constant 1.000000e+00 : f32
    %12 = vector.broadcast %cst_7 : f32 to vector<64x128xf32>
    %13 = arith.subf %11, %12 : vector<64x128xf32>
    %cst_8 = arith.constant 1.000000e+00 : f32
    %14 = vector.broadcast %cst_8 : f32 to vector<64x128xf32>
    %15 = arith.addf %11, %14 : vector<64x128xf32>
    %16 = tpu.reciprocal %15 {approx = true} : vector<64x128xf32> -> vector<64x128xf32>
    %17 = arith.mulf %13, %16 : vector<64x128xf32>
    %cst_9 = arith.constant 2.000000e+01 : f32
    %18 = vector.broadcast %cst_9 : f32 to vector<64x128xf32>
    %19 = arith.cmpf ogt, %5, %18 : vector<64x128xf32>
    %20 = arith.mulf %5, %17 : vector<64x128xf32>
    %21 = arith.select %19, %5, %20 : vector<64x128xi1>, vector<64x128xf32>
    %22 = arith.truncf %21 : vector<64x128xf32> to vector<64x128xbf16>
    %c0_10 = arith.constant 0 : index
    %c0_11 = arith.constant 0 : index
    %23 = vector.load %arg4[%c0_10, %c0_11] : memref<64x128xbf16, #tpu.memory_space<vmem>>, vector<64x128xbf16>
    tpu.vector_store %arg4[%c0_10, %c0_11], %22 {strides = array<i32>} : memref<64x128xbf16, #tpu.memory_space<vmem>>, vector<64x128xbf16>,
    return
  }
  func.func @transform_0(%arg0: i32) -> (i32, i32) {
    %c0_i32 = arith.constant 0 : i32
    %c0_i32_0 = arith.constant 0 : i32
    return %arg0, %c0_i32 : i32, i32
  }
  func.func @transform_1(%arg0: i32) -> (i32, i32) {
    %c0_i32 = arith.constant 0 : i32
    %c0_i32_0 = arith.constant 0 : i32
    %c0_i32_1 = arith.constant 0 : i32
    return %c0_i32, %c0_i32_0 : i32, i32
  }
  func.func @transform_2(%arg0: i32) -> (i32, i32) {
    %c0_i32 = arith.constant 0 : i32
    %c0_i32_0 = arith.constant 0 : i32
    %c0_i32_1 = arith.constant 0 : i32
    return %c0_i32, %c0_i32_0 : i32, i32
  }
  func.func @transform_3(%arg0: i32) -> (i32, i32) {
    %c0_i32 = arith.constant 0 : i32
    %c0_i32_0 = arith.constant 0 : i32
    return %arg0, %c0_i32 : i32, i32
  }
}

module attributes {stable_mosaic.version = 11 : i64} {
  func.func @kernel(%arg0: i32, %arg1: i32, %arg2: memref<1x1x10x128xbf16, #tpu.memory_space<vmem>>, %arg3: memref<1x1x10x128xbf16, #tpu.memory_space<vmem>>, %arg4: memref<1x1x10x128xbf16, #tpu.memory_space<vmem>>, %arg5: memref<1152x128xbf16, #tpu.memory_space<vmem>>, %arg6: memref<1x128xf32, #tpu.memory_space<vmem>>, %arg7: memref<1x1x8x128xbf16, #tpu.memory_space<vmem>>, %arg8: memref<1x1x8x128xbf16, #tpu.memory_space<vmem>>) attributes {dimension_semantics = [#tpu.dimension_semantics<parallel>, #tpu.dimension_semantics<parallel>], iteration_bounds = array<i64: 2, 8>, scalar_prefetch = 0 : i64, scratch_operands = 0 : i64, tpu.core_type = #tpu.core_type<tc>, window_params = [{transform_indices = @transform_0, window_bounds = array<i64: 1, 1, 10, 128>}, {transform_indices = @transform_1, window_bounds = array<i64: 1, 1, 10, 128>}, {transform_indices = @transform_2, window_bounds = array<i64: 1, 1, 10, 128>}, {pipeline_mode = #tpu.pipeline_mode<synchronous>, transform_indices = @transform_3, window_bounds = array<i64: 1152, 128>}, {pipeline_mode = #tpu.pipeline_mode<synchronous>, transform_indices = @transform_4, window_bounds = array<i64: 1, 128>}, {transform_indices = @transform_5, window_bounds = array<i64: 1, 1, 8, 128>}, {transform_indices = @transform_6, window_bounds = array<i64: 1, 1, 8, 128>}]} {
    %cst = arith.constant 0.000000e+00 : f32
    %0 = vector.broadcast %cst : f32 to vector<8x128xf32>
    %c0 = arith.constant 0 : index
    %c0_0 = arith.constant 0 : index
    %c0_1 = arith.constant 0 : index
    %c0_2 = arith.constant 0 : index
    %1 = vector.load %arg2[%c0, %c0_0, %c0_1, %c0_2] : memref<1x1x10x128xbf16, #tpu.memory_space<vmem>>, vector<1x1x8x128xbf16>
    %2 = vector.shape_cast %1 : vector<1x1x8x128xbf16> to vector<8x128xbf16>
    %c0_3 = arith.constant 0 : index
    %c0_4 = arith.constant 0 : index
    %3 = vector.load %arg5[%c0_3, %c0_4] : memref<1152x128xbf16, #tpu.memory_space<vmem>>, vector<128x128xbf16>
    %cst_5 = arith.constant dense<0.000000e+00> : vector<8x128xf32>
    %4 = tpu.matmul %2, %3, %cst_5 {dimension_numbers = #tpu.dot_dimension_numbers<[1], [0], [0], [1], [0, 0, 1, 1], [], []>} : vector<8x128xbf16>, vector<128x128xbf16>, vector<8x128xf32> -> vector<8x128xf32>
    %5 = arith.addf %0, %4 : vector<8x128xf32>
    %c0_6 = arith.constant 0 : index
    %c0_7 = arith.constant 0 : index
    %c1 = arith.constant 1 : index
    %c0_8 = arith.constant 0 : index
    %6 = vector.load %arg2[%c0_6, %c0_7, %c1, %c0_8] : memref<1x1x10x128xbf16, #tpu.memory_space<vmem>>, vector<1x1x8x128xbf16>
    %7 = vector.shape_cast %6 : vector<1x1x8x128xbf16> to vector<8x128xbf16>
    %c128 = arith.constant 128 : index
    %c0_9 = arith.constant 0 : index
    %8 = vector.load %arg5[%c128, %c0_9] : memref<1152x128xbf16, #tpu.memory_space<vmem>>, vector<128x128xbf16>
    %cst_10 = arith.constant dense<0.000000e+00> : vector<8x128xf32>
    %9 = tpu.matmul %7, %8, %cst_10 {dimension_numbers = #tpu.dot_dimension_numbers<[1], [0], [0], [1], [0, 0, 1, 1], [], []>} : vector<8x128xbf16>, vector<128x128xbf16>, vector<8x128xf32> -> vector<8x128xf32>
    %10 = arith.addf %5, %9 : vector<8x128xf32>
    %c0_11 = arith.constant 0 : index
    %c0_12 = arith.constant 0 : index
    %c2 = arith.constant 2 : index
    %c0_13 = arith.constant 0 : index
    %11 = vector.load %arg2[%c0_11, %c0_12, %c2, %c0_13] : memref<1x1x10x128xbf16, #tpu.memory_space<vmem>>, vector<1x1x8x128xbf16>
    %12 = vector.shape_cast %11 : vector<1x1x8x128xbf16> to vector<8x128xbf16>
    %c256 = arith.constant 256 : index
    %c0_14 = arith.constant 0 : index
    %13 = vector.load %arg5[%c256, %c0_14] : memref<1152x128xbf16, #tpu.memory_space<vmem>>, vector<128x128xbf16>
    %cst_15 = arith.constant dense<0.000000e+00> : vector<8x128xf32>
    %14 = tpu.matmul %12, %13, %cst_15 {dimension_numbers = #tpu.dot_dimension_numbers<[1], [0], [0], [1], [0, 0, 1, 1], [], []>} : vector<8x128xbf16>, vector<128x128xbf16>, vector<8x128xf32> -> vector<8x128xf32>
    %15 = arith.addf %10, %14 : vector<8x128xf32>
    %c0_16 = arith.constant 0 : index
    %c0_17 = arith.constant 0 : index
    %c0_18 = arith.constant 0 : index
    %c0_19 = arith.constant 0 : index
    %16 = vector.load %arg3[%c0_16, %c0_17, %c0_18, %c0_19] : memref<1x1x10x128xbf16, #tpu.memory_space<vmem>>, vector<1x1x8x128xbf16>
    %17 = vector.shape_cast %16 : vector<1x1x8x128xbf16> to vector<8x128xbf16>
    %c384 = arith.constant 384 : index
    %c0_20 = arith.constant 0 : index
    %18 = vector.load %arg5[%c384, %c0_20] : memref<1152x128xbf16, #tpu.memory_space<vmem>>, vector<128x128xbf16>
    %cst_21 = arith.constant dense<0.000000e+00> : vector<8x128xf32>
    %19 = tpu.matmul %17, %18, %cst_21 {dimension_numbers = #tpu.dot_dimension_numbers<[1], [0], [0], [1], [0, 0, 1, 1], [], []>} : vector<8x128xbf16>, vector<128x128xbf16>, vector<8x128xf32> -> vector<8x128xf32>
    %20 = arith.addf %15, %19 : vector<8x128xf32>
    %c0_22 = arith.constant 0 : index
    %c0_23 = arith.constant 0 : index
    %c1_24 = arith.constant 1 : index
    %c0_25 = arith.constant 0 : index
    %21 = vector.load %arg3[%c0_22, %c0_23, %c1_24, %c0_25] : memref<1x1x10x128xbf16, #tpu.memory_space<vmem>>, vector<1x1x8x128xbf16>
    %22 = vector.shape_cast %21 : vector<1x1x8x128xbf16> to vector<8x128xbf16>
    %c512 = arith.constant 512 : index
    %c0_26 = arith.constant 0 : index
    %23 = vector.load %arg5[%c512, %c0_26] : memref<1152x128xbf16, #tpu.memory_space<vmem>>, vector<128x128xbf16>
    %cst_27 = arith.constant dense<0.000000e+00> : vector<8x128xf32>
    %24 = tpu.matmul %22, %23, %cst_27 {dimension_numbers = #tpu.dot_dimension_numbers<[1], [0], [0], [1], [0, 0, 1, 1], [], []>} : vector<8x128xbf16>, vector<128x128xbf16>, vector<8x128xf32> -> vector<8x128xf32>
    %25 = arith.addf %20, %24 : vector<8x128xf32>
    %c0_28 = arith.constant 0 : index
    %c0_29 = arith.constant 0 : index
    %c2_30 = arith.constant 2 : index
    %c0_31 = arith.constant 0 : index
    %26 = vector.load %arg3[%c0_28, %c0_29, %c2_30, %c0_31] : memref<1x1x10x128xbf16, #tpu.memory_space<vmem>>, vector<1x1x8x128xbf16>
    %27 = vector.shape_cast %26 : vector<1x1x8x128xbf16> to vector<8x128xbf16>
    %c640 = arith.constant 640 : index
    %c0_32 = arith.constant 0 : index
    %28 = vector.load %arg5[%c640, %c0_32] : memref<1152x128xbf16, #tpu.memory_space<vmem>>, vector<128x128xbf16>
    %cst_33 = arith.constant dense<0.000000e+00> : vector<8x128xf32>
    %29 = tpu.matmul %27, %28, %cst_33 {dimension_numbers = #tpu.dot_dimension_numbers<[1], [0], [0], [1], [0, 0, 1, 1], [], []>} : vector<8x128xbf16>, vector<128x128xbf16>, vector<8x128xf32> -> vector<8x128xf32>
    %30 = arith.addf %25, %29 : vector<8x128xf32>
    %c0_34 = arith.constant 0 : index
    %c0_35 = arith.constant 0 : index
    %c0_36 = arith.constant 0 : index
    %c0_37 = arith.constant 0 : index
    %31 = vector.load %arg4[%c0_34, %c0_35, %c0_36, %c0_37] : memref<1x1x10x128xbf16, #tpu.memory_space<vmem>>, vector<1x1x8x128xbf16>
    %32 = vector.shape_cast %31 : vector<1x1x8x128xbf16> to vector<8x128xbf16>
    %c768 = arith.constant 768 : index
    %c0_38 = arith.constant 0 : index
    %33 = vector.load %arg5[%c768, %c0_38] : memref<1152x128xbf16, #tpu.memory_space<vmem>>, vector<128x128xbf16>
    %cst_39 = arith.constant dense<0.000000e+00> : vector<8x128xf32>
    %34 = tpu.matmul %32, %33, %cst_39 {dimension_numbers = #tpu.dot_dimension_numbers<[1], [0], [0], [1], [0, 0, 1, 1], [], []>} : vector<8x128xbf16>, vector<128x128xbf16>, vector<8x128xf32> -> vector<8x128xf32>
    %35 = arith.addf %30, %34 : vector<8x128xf32>
    %c0_40 = arith.constant 0 : index
    %c0_41 = arith.constant 0 : index
    %c1_42 = arith.constant 1 : index
    %c0_43 = arith.constant 0 : index
    %36 = vector.load %arg4[%c0_40, %c0_41, %c1_42, %c0_43] : memref<1x1x10x128xbf16, #tpu.memory_space<vmem>>, vector<1x1x8x128xbf16>
    %37 = vector.shape_cast %36 : vector<1x1x8x128xbf16> to vector<8x128xbf16>
    %c896 = arith.constant 896 : index
    %c0_44 = arith.constant 0 : index
    %38 = vector.load %arg5[%c896, %c0_44] : memref<1152x128xbf16, #tpu.memory_space<vmem>>, vector<128x128xbf16>
    %cst_45 = arith.constant dense<0.000000e+00> : vector<8x128xf32>
    %39 = tpu.matmul %37, %38, %cst_45 {dimension_numbers = #tpu.dot_dimension_numbers<[1], [0], [0], [1], [0, 0, 1, 1], [], []>} : vector<8x128xbf16>, vector<128x128xbf16>, vector<8x128xf32> -> vector<8x128xf32>
    %40 = arith.addf %35, %39 : vector<8x128xf32>
    %c0_46 = arith.constant 0 : index
    %c0_47 = arith.constant 0 : index
    %c2_48 = arith.constant 2 : index
    %c0_49 = arith.constant 0 : index
    %41 = vector.load %arg4[%c0_46, %c0_47, %c2_48, %c0_49] : memref<1x1x10x128xbf16, #tpu.memory_space<vmem>>, vector<1x1x8x128xbf16>
    %42 = vector.shape_cast %41 : vector<1x1x8x128xbf16> to vector<8x128xbf16>
    %c1024 = arith.constant 1024 : index
    %c0_50 = arith.constant 0 : index
    %43 = vector.load %arg5[%c1024, %c0_50] : memref<1152x128xbf16, #tpu.memory_space<vmem>>, vector<128x128xbf16>
    %cst_51 = arith.constant dense<0.000000e+00> : vector<8x128xf32>
    %44 = tpu.matmul %42, %43, %cst_51 {dimension_numbers = #tpu.dot_dimension_numbers<[1], [0], [0], [1], [0, 0, 1, 1], [], []>} : vector<8x128xbf16>, vector<128x128xbf16>, vector<8x128xf32> -> vector<8x128xf32>
    %45 = arith.addf %40, %44 : vector<8x128xf32>
    %c0_52 = arith.constant 0 : index
    %c0_53 = arith.constant 0 : index
    %46 = vector.load %arg6[%c0_52, %c0_53] : memref<1x128xf32, #tpu.memory_space<vmem>>, vector<1x128xf32>
    %47 = vector.broadcast %46 : vector<1x128xf32> to vector<8x128xf32>
    %48 = arith.addf %45, %47 : vector<8x128xf32>
    %cst_54 = arith.constant 2.000000e+01 : f32
    %49 = vector.broadcast %cst_54 : f32 to vector<8x128xf32>
    %50 = arith.minimumf %48, %49 : vector<8x128xf32>
    %51 = math.exp %50 : vector<8x128xf32>
    %cst_55 = arith.constant 1.000000e+00 : f32
    %52 = vector.broadcast %cst_55 : f32 to vector<8x128xf32>
    %53 = arith.addf %52, %51 : vector<8x128xf32>
    %54 = arith.mulf %53, %53 : vector<8x128xf32>
    %cst_56 = arith.constant 1.000000e+00 : f32
    %55 = vector.broadcast %cst_56 : f32 to vector<8x128xf32>
    %56 = arith.subf %54, %55 : vector<8x128xf32>
    %cst_57 = arith.constant 1.000000e+00 : f32
    %57 = vector.broadcast %cst_57 : f32 to vector<8x128xf32>
    %58 = arith.addf %54, %57 : vector<8x128xf32>
    %59 = tpu.reciprocal %58 {approx = true} : vector<8x128xf32> -> vector<8x128xf32>
    %60 = arith.mulf %56, %59 : vector<8x128xf32>
    %cst_58 = arith.constant 2.000000e+01 : f32
    %61 = vector.broadcast %cst_58 : f32 to vector<8x128xf32>
    %62 = arith.cmpf ogt, %48, %61 : vector<8x128xf32>
    %63 = arith.mulf %48, %60 : vector<8x128xf32>
    %64 = arith.select %62, %48, %63 : vector<8x128xi1>, vector<8x128xf32>
    %c0_59 = arith.constant 0 : index
    %c0_60 = arith.constant 0 : index
    %c0_61 = arith.constant 0 : index
    %c0_62 = arith.constant 0 : index
    %65 = vector.load %arg7[%c0_59, %c0_60, %c0_61, %c0_62] : memref<1x1x8x128xbf16, #tpu.memory_space<vmem>>, vector<1x1x8x128xbf16>
    %66 = vector.shape_cast %65 : vector<1x1x8x128xbf16> to vector<8x128xbf16>
    %67 = arith.extf %66 : vector<8x128xbf16> to vector<8x128xf32>
    %68 = arith.addf %64, %67 : vector<8x128xf32>
    %69 = arith.truncf %68 : vector<8x128xf32> to vector<8x128xbf16>
    %c0_63 = arith.constant 0 : index
    %c0_64 = arith.constant 0 : index
    %c0_65 = arith.constant 0 : index
    %c0_66 = arith.constant 0 : index
    %70 = vector.load %arg8[%c0_63, %c0_64, %c0_65, %c0_66] : memref<1x1x8x128xbf16, #tpu.memory_space<vmem>>, vector<1x1x8x128xbf16>
    %71 = vector.shape_cast %70 : vector<1x1x8x128xbf16> to vector<8x128xbf16>
    %72 = vector.shape_cast %69 : vector<8x128xbf16> to vector<1x1x8x128xbf16>
    tpu.vector_store %arg8[%c0_63, %c0_64, %c0_65, %c0_66], %72 {strides = array<i32>} : memref<1x1x8x128xbf16, #tpu.memory_space<vmem>>, vector<1x1x8x128xbf16>,
    return
  }
  func.func @transform_0(%arg0: i32, %arg1: i32) -> (i32, i32, i32, i32) {
    %c1_i32 = arith.constant 1 : i32
    %0 = arith.muli %c1_i32, %arg1 : i32
    %c0_i32 = arith.constant 0 : i32
    %1 = arith.addi %0, %c0_i32 : i32
    %c0_i32_0 = arith.constant 0 : i32
    %c0_i32_1 = arith.constant 0 : i32
    %c0_i32_2 = arith.constant 0 : i32
    return %arg0, %1, %c0_i32_0, %c0_i32_1 : i32, i32, i32, i32
  }
  func.func @transform_1(%arg0: i32, %arg1: i32) -> (i32, i32, i32, i32) {
    %c1_i32 = arith.constant 1 : i32
    %0 = arith.muli %c1_i32, %arg1 : i32
    %c1_i32_0 = arith.constant 1 : i32
    %1 = arith.addi %0, %c1_i32_0 : i32
    %c0_i32 = arith.constant 0 : i32
    %c0_i32_1 = arith.constant 0 : i32
    %c0_i32_2 = arith.constant 0 : i32
    return %arg0, %1, %c0_i32, %c0_i32_1 : i32, i32, i32, i32
  }
  func.func @transform_2(%arg0: i32, %arg1: i32) -> (i32, i32, i32, i32) {
    %c1_i32 = arith.constant 1 : i32
    %0 = arith.muli %c1_i32, %arg1 : i32
    %c2_i32 = arith.constant 2 : i32
    %1 = arith.addi %0, %c2_i32 : i32
    %c0_i32 = arith.constant 0 : i32
    %c0_i32_0 = arith.constant 0 : i32
    %c0_i32_1 = arith.constant 0 : i32
    return %arg0, %1, %c0_i32, %c0_i32_0 : i32, i32, i32, i32
  }
  func.func @transform_3(%arg0: i32, %arg1: i32) -> (i32, i32) {
    %c0_i32 = arith.constant 0 : i32
    %c0_i32_0 = arith.constant 0 : i32
    %c0_i32_1 = arith.constant 0 : i32
    return %c0_i32, %c0_i32_0 : i32, i32
  }
  func.func @transform_4(%arg0: i32, %arg1: i32) -> (i32, i32) {
    %c0_i32 = arith.constant 0 : i32
    %c0_i32_0 = arith.constant 0 : i32
    %c0_i32_1 = arith.constant 0 : i32
    return %c0_i32, %c0_i32_0 : i32, i32
  }
  func.func @transform_5(%arg0: i32, %arg1: i32) -> (i32, i32, i32, i32) {
    %c0_i32 = arith.constant 0 : i32
    %c0_i32_0 = arith.constant 0 : i32
    %c0_i32_1 = arith.constant 0 : i32
    return %arg0, %arg1, %c0_i32, %c0_i32_0 : i32, i32, i32, i32
  }
  func.func @transform_6(%arg0: i32, %arg1: i32) -> (i32, i32, i32, i32) {
    %c0_i32 = arith.constant 0 : i32
    %c0_i32_0 = arith.constant 0 : i32
    %c0_i32_1 = arith.constant 0 : i32
    return %arg0, %arg1, %c0_i32, %c0_i32_0 : i32, i32, i32, i32
  }
}

module attributes {stable_mosaic.version = 11 : i64} {
  func.func @_concat_conv_kernel(%arg0: i32, %arg1: memref<64x128xbf16, #tpu.memory_space<vmem>>, %arg2: memref<64x128xbf16, #tpu.memory_space<vmem>>, %arg3: memref<128x128xbf16, #tpu.memory_space<vmem>>, %arg4: memref<128x128xbf16, #tpu.memory_space<vmem>>, %arg5: memref<1x128xf32, #tpu.memory_space<vmem>>, %arg6: memref<64x128xbf16, #tpu.memory_space<vmem>>) attributes {dimension_semantics = [#tpu.dimension_semantics<parallel>], iteration_bounds = array<i64: 2>, scalar_prefetch = 0 : i64, scratch_operands = 0 : i64, tpu.core_type = #tpu.core_type<tc>, window_params = [{transform_indices = @transform_0, window_bounds = array<i64: 64, 128>}, {transform_indices = @transform_1, window_bounds = array<i64: 64, 128>}, {pipeline_mode = #tpu.pipeline_mode<synchronous>, transform_indices = @transform_2, window_bounds = array<i64: 128, 128>}, {pipeline_mode = #tpu.pipeline_mode<synchronous>, transform_indices = @transform_3, window_bounds = array<i64: 128, 128>}, {pipeline_mode = #tpu.pipeline_mode<synchronous>, transform_indices = @transform_4, window_bounds = array<i64: 1, 128>}, {transform_indices = @transform_5, window_bounds = array<i64: 64, 128>}]} {
    %c0 = arith.constant 0 : index
    %c0_0 = arith.constant 0 : index
    %0 = vector.load %arg1[%c0, %c0_0] : memref<64x128xbf16, #tpu.memory_space<vmem>>, vector<64x128xbf16>
    %c0_1 = arith.constant 0 : index
    %c0_2 = arith.constant 0 : index
    %1 = vector.load %arg3[%c0_1, %c0_2] : memref<128x128xbf16, #tpu.memory_space<vmem>>, vector<128x128xbf16>
    %cst = arith.constant dense<0.000000e+00> : vector<64x128xf32>
    %2 = tpu.matmul %0, %1, %cst {dimension_numbers = #tpu.dot_dimension_numbers<[1], [0], [0], [1], [0, 0, 1, 1], [], []>} : vector<64x128xbf16>, vector<128x128xbf16>, vector<64x128xf32> -> vector<64x128xf32>
    %c0_3 = arith.constant 0 : index
    %c0_4 = arith.constant 0 : index
    %3 = vector.load %arg2[%c0_3, %c0_4] : memref<64x128xbf16, #tpu.memory_space<vmem>>, vector<64x128xbf16>
    %c0_5 = arith.constant 0 : index
    %c0_6 = arith.constant 0 : index
    %4 = vector.load %arg4[%c0_5, %c0_6] : memref<128x128xbf16, #tpu.memory_space<vmem>>, vector<128x128xbf16>
    %cst_7 = arith.constant dense<0.000000e+00> : vector<64x128xf32>
    %5 = tpu.matmul %3, %4, %cst_7 {dimension_numbers = #tpu.dot_dimension_numbers<[1], [0], [0], [1], [0, 0, 1, 1], [], []>} : vector<64x128xbf16>, vector<128x128xbf16>, vector<64x128xf32> -> vector<64x128xf32>
    %6 = arith.addf %2, %5 : vector<64x128xf32>
    %c0_8 = arith.constant 0 : index
    %c0_9 = arith.constant 0 : index
    %7 = vector.load %arg5[%c0_8, %c0_9] : memref<1x128xf32, #tpu.memory_space<vmem>>, vector<1x128xf32>
    %8 = vector.broadcast %7 : vector<1x128xf32> to vector<64x128xf32>
    %9 = arith.addf %6, %8 : vector<64x128xf32>
    %cst_10 = arith.constant 2.000000e+01 : f32
    %10 = vector.broadcast %cst_10 : f32 to vector<64x128xf32>
    %11 = arith.minimumf %9, %10 : vector<64x128xf32>
    %12 = math.exp %11 : vector<64x128xf32>
    %cst_11 = arith.constant 1.000000e+00 : f32
    %13 = vector.broadcast %cst_11 : f32 to vector<64x128xf32>
    %14 = arith.addf %13, %12 : vector<64x128xf32>
    %15 = arith.mulf %14, %14 : vector<64x128xf32>
    %cst_12 = arith.constant 1.000000e+00 : f32
    %16 = vector.broadcast %cst_12 : f32 to vector<64x128xf32>
    %17 = arith.subf %15, %16 : vector<64x128xf32>
    %cst_13 = arith.constant 1.000000e+00 : f32
    %18 = vector.broadcast %cst_13 : f32 to vector<64x128xf32>
    %19 = arith.addf %15, %18 : vector<64x128xf32>
    %20 = tpu.reciprocal %19 {approx = true} : vector<64x128xf32> -> vector<64x128xf32>
    %21 = arith.mulf %17, %20 : vector<64x128xf32>
    %cst_14 = arith.constant 2.000000e+01 : f32
    %22 = vector.broadcast %cst_14 : f32 to vector<64x128xf32>
    %23 = arith.cmpf ogt, %9, %22 : vector<64x128xf32>
    %24 = arith.mulf %9, %21 : vector<64x128xf32>
    %25 = arith.select %23, %9, %24 : vector<64x128xi1>, vector<64x128xf32>
    %26 = arith.truncf %25 : vector<64x128xf32> to vector<64x128xbf16>
    %c0_15 = arith.constant 0 : index
    %c0_16 = arith.constant 0 : index
    %27 = vector.load %arg6[%c0_15, %c0_16] : memref<64x128xbf16, #tpu.memory_space<vmem>>, vector<64x128xbf16>
    tpu.vector_store %arg6[%c0_15, %c0_16], %26 {strides = array<i32>} : memref<64x128xbf16, #tpu.memory_space<vmem>>, vector<64x128xbf16>,
    return
  }
  func.func @transform_0(%arg0: i32) -> (i32, i32) {
    %c0_i32 = arith.constant 0 : i32
    %c0_i32_0 = arith.constant 0 : i32
    return %arg0, %c0_i32 : i32, i32
  }
  func.func @transform_1(%arg0: i32) -> (i32, i32) {
    %c0_i32 = arith.constant 0 : i32
    %c0_i32_0 = arith.constant 0 : i32
    return %arg0, %c0_i32 : i32, i32
  }
  func.func @transform_2(%arg0: i32) -> (i32, i32) {
    %c0_i32 = arith.constant 0 : i32
    %c0_i32_0 = arith.constant 0 : i32
    %c0_i32_1 = arith.constant 0 : i32
    return %c0_i32, %c0_i32_0 : i32, i32
  }
  func.func @transform_3(%arg0: i32) -> (i32, i32) {
    %c0_i32 = arith.constant 0 : i32
    %c0_i32_0 = arith.constant 0 : i32
    %c0_i32_1 = arith.constant 0 : i32
    return %c0_i32, %c0_i32_0 : i32, i32
  }
  func.func @transform_4(%arg0: i32) -> (i32, i32) {
    %c0_i32 = arith.constant 0 : i32
    %c0_i32_0 = arith.constant 0 : i32
    %c0_i32_1 = arith.constant 0 : i32
    return %c0_i32, %c0_i32_0 : i32, i32
  }
  func.func @transform_5(%arg0: i32) -> (i32, i32) {
    %c0_i32 = arith.constant 0 : i32
    %c0_i32_0 = arith.constant 0 : i32
    return %arg0, %c0_i32 : i32, i32
  }
}

</mosaic_0001>

<llo_original>
// kernel: csp_layer_forward.8
$region0: #{csp_layer_forward.8}
  #allocation0 [shape = 'u32[]', space=smem, size = 0x4, offset = 0x4, fixed_abs, tag = 'smem constant byte address 0x4 - core index']
  #allocation1 [shape = 'u32[144,128]{1,0:T(1,128)}', space=vmem, size = 0x12000, scoped, tag = 'internal scratch']
  %s0 = inlined_call_operand.vmem [shape: bf16[128,128], index: 0, kind: input, shape index: {}]
  %s1 = inlined_call_operand.vmem [shape: bf16[128,128], index: 1, kind: input, shape index: {}]
  %s2 = inlined_call_operand.vmem [shape: f32[1,128], index: 2, kind: input, shape index: {}]
  %s3 = inlined_call_operand.vmem [shape: bf16[128,128], index: 3, kind: output, shape index: {}]
  %s4 = sld [smem:[#allocation0]]
  $region45: #{csp_layer_forward.8} parent=0
    _
  %s6 = ssub.s32 1, %s4
  %s7 = scalar_select 0, %s6, %s4
  loop: start=0, step=1, limit=4
  $region2: #{csp_layer_forward.8} parent=0 // loop_pre_header
    _
  $region3: #{csp_layer_forward.8} parent=0 // loop_header
    %s9 = sphi 0, %s13
    %p10 = scmp.ge.s32.totalorder %s9, 4
    %s19 = sphi 0, %s21
    %s22 = sphi 0, %s19
    %s23 = sphi 0, %s22
    %s39 = sphi 0, %s23
    %s43 = sphi 0, %s43
    %s45 = sphi 0, %s43
    %s46 = sphi 0, %s45
    %s60 = sphi 0, %s46
    %s64 = sphi 0, %s64
    %s66 = sphi 0, %s64
    %s67 = sphi 0, %s66
    %s81 = sphi 0, %s67
    %s87 = sphi 0, %s89
    %s90 = sphi 0, %s87
    %s91 = sphi 0, %s90
    %s107 = sphi 0, %s91
  $region4: #{csp_layer_forward.8} parent=0 // loop_header_branch
    %12 = sbr.rel (%p10) target = $region8
  $region5: #{csp_layer_forward.8} parent=0 // loop_body
    %s14 = ssub.s32 %s9, 1
    %s15 = ssub.s32 %s9, 2
    %s16 = sadd.s32 %s9, 1
    %s17 = ssub.s32 %s9, %s16
    %p18 = scmp.eq.s32.totalorder %s17, 0
    %s20 = sadd.s32 %s19, 1
    %s21 = scalar_select %p18, %s19, %s20
    %p24 = pneg %p18
    %p25 = scmp.eq.s32.totalorder %s9, 1
    %p26 = por %p24, %p25
    %p27 = scmp.ne.s32.totalorder %s19, %s22
    %p28 = scmp.eq.s32.totalorder %s9, 0
    %p29 = por %p27, %p28
    %p30 = scmp.ne.s32.totalorder %s19, %s22
    %p31 = scmp.eq.s32.totalorder %s14, 1
    %p32 = por %p30, %p31
    %p33 = scmp.ne.s32.totalorder %s22, %s23
    %p34 = scmp.eq.s32.totalorder %s14, 0
    %p35 = por %p33, %p34
    %p36 = scmp.ne.s32.totalorder %s22, %s23
    %p37 = scmp.eq.s32.totalorder %s15, 1
    %p38 = por %p36, %p37
    %p40 = scmp.ne.s32.totalorder %s23, %s39
    %p41 = scmp.eq.s32.totalorder %s15, 0
    %p42 = por %p40, %p41
    %s44 = sadd.s32 %s43, 1
    %p47 = scmp.eq.s32.totalorder %s9, 1
    %p48 = scmp.ne.s32.totalorder %s43, %s45
    %p49 = scmp.eq.s32.totalorder %s9, 0
    %p50 = por %p48, %p49
    %p51 = scmp.ne.s32.totalorder %s43, %s45
    %p52 = scmp.eq.s32.totalorder %s14, 1
    %p53 = por %p51, %p52
    %p54 = scmp.ne.s32.totalorder %s45, %s46
    %p55 = scmp.eq.s32.totalorder %s14, 0
    %p56 = por %p54, %p55
    %p57 = scmp.ne.s32.totalorder %s45, %s46
    %p58 = scmp.eq.s32.totalorder %s15, 1
    %p59 = por %p57, %p58
    %p61 = scmp.ne.s32.totalorder %s46, %s60
    %p62 = scmp.eq.s32.totalorder %s15, 0
    %p63 = por %p61, %p62
    %s65 = sadd.s32 %s64, 1
    %p68 = scmp.eq.s32.totalorder %s9, 1
    %p69 = scmp.ne.s32.totalorder %s64, %s66
    %p70 = scmp.eq.s32.totalorder %s9, 0
    %p71 = por %p69, %p70
    %p72 = scmp.ne.s32.totalorder %s64, %s66
    %p73 = scmp.eq.s32.totalorder %s14, 1
    %p74 = por %p72, %p73
    %p75 = scmp.ne.s32.totalorder %s66, %s67
    %p76 = scmp.eq.s32.totalorder %s14, 0
    %p77 = por %p75, %p76
    %p78 = scmp.ne.s32.totalorder %s66, %s67
    %p79 = scmp.eq.s32.totalorder %s15, 1
    %p80 = por %p78, %p79
    %p82 = scmp.ne.s32.totalorder %s67, %s81
    %p83 = scmp.eq.s32.totalorder %s15, 0
    %p84 = por %p82, %p83
    %s85 = ssub.s32 %s9, %s16
    %p86 = scmp.eq.s32.totalorder %s85, 0
    %s88 = sadd.s32 %s87, 1
    %s89 = scalar_select %p86, %s87, %s88
    %p92 = pneg %p86
    %p93 = scmp.eq.s32.totalorder %s9, 1
    %p94 = por %p92, %p93
    %p95 = scmp.ne.s32.totalorder %s87, %s90
    %p96 = scmp.eq.s32.totalorder %s9, 0
    %p97 = por %p95, %p96
    %p98 = scmp.ne.s32.totalorder %s87, %s90
    %p99 = scmp.eq.s32.totalorder %s14, 1
    %p100 = por %p98, %p99
    %p101 = scmp.ne.s32.totalorder %s90, %s91
    %p102 = scmp.eq.s32.totalorder %s14, 0
    %p103 = por %p101, %p102
    %p104 = scmp.ne.s32.totalorder %s90, %s91
    %p105 = scmp.eq.s32.totalorder %s15, 1
    %p106 = por %p104, %p105
    %p108 = scmp.ne.s32.totalorder %s91, %s107
    %p109 = scmp.eq.s32.totalorder %s15, 0
    %p110 = por %p108, %p109
    %p111 = scmp.le.s32.totalorder 1, %s9
    %p112 = scmp.lt.s32.totalorder %s9, 3
    %p113 = pnand %p111, %p112
    %p114 = pneg %p113
    // Predicated region
    $region9: #{csp_layer_forward.8} parent=5 // pred_check
      _
    $region10: #{csp_layer_forward.8} parent=5 // pred_check_branch
      %116 = sbr.rel (%p113) target = $region12
    $region11: #{csp_layer_forward.8} parent=5 // pred_region
      %s117 = ssub.s32 %s9, 1
      // Predicated region
      $region13: #{csp_layer_forward.8} parent=11 // pred_check
        %p118 = pneg %p56
      $region14: #{csp_layer_forward.8} parent=11 // pred_check_branch
        %120 = sbr.rel (%p118) target = $region16
      $region15: #{csp_layer_forward.8} parent=11 // pred_region
        _
      $region16: #{csp_layer_forward.8} parent=11 // pred_fallthru
        _
      // Predicated region
      $region17: #{csp_layer_forward.8} parent=11 // pred_check
        %p121 = pneg %p77
      $region18: #{csp_layer_forward.8} parent=11 // pred_check_branch
        %123 = sbr.rel (%p121) target = $region20
      $region19: #{csp_layer_forward.8} parent=11 // pred_region
        _
      $region20: #{csp_layer_forward.8} parent=11 // pred_fallthru
        _
    $region12: #{csp_layer_forward.8} parent=5 // pred_fallthru
      _
    %p124 = scmp.lt.s32.totalorder %s9, 2
    // Predicated region
    $region21: #{csp_layer_forward.8} parent=5 // pred_check
      %p125 = pneg %p124
    $region22: #{csp_layer_forward.8} parent=5 // pred_check_branch
      %127 = sbr.rel (%p125) target = $region24
    $region23: #{csp_layer_forward.8} parent=5 // pred_region
      // Predicated region
      $region25: #{csp_layer_forward.8} parent=23 // pred_check
        %p128 = pneg %p29
      $region26: #{csp_layer_forward.8} parent=23 // pred_check_branch
        %130 = sbr.rel (%p128) target = $region28
      $region27: #{csp_layer_forward.8} parent=23 // pred_region
        %s131 = smul.u32 8, %s9
        %p132 = scmp.lt.s32.totalorder %s131, 15
        %s133 = scalar_select %p132, %s131, 15
        %s134 = smul.addr %s133, 4
        %s135 = scalar_lea.vmem %s0, %s134
        %s136 = smul.u32 8, %s9
      $region28: #{csp_layer_forward.8} parent=23 // pred_fallthru
        _
    $region24: #{csp_layer_forward.8} parent=5 // pred_fallthru
      _
    %p137 = scmp.le.s32.totalorder 1, %s9
    %p138 = scmp.lt.s32.totalorder %s9, 3
    %p139 = pnand %p137, %p138
    %p140 = pneg %p139
    // Predicated region
    $region29: #{csp_layer_forward.8} parent=5 // pred_check
      _
    $region30: #{csp_layer_forward.8} parent=5 // pred_check_branch
      %142 = sbr.rel (%p139) target = $region32
    $region31: #{csp_layer_forward.8} parent=5 // pred_region
      %s143 = ssub.s32 %s9, 1
      %s144 = smul.u32 8, %s14
      %p145 = scmp.lt.s32.totalorder %s144, 15
      %s146 = scalar_select %p145, %s144, 15
      %s147 = smul.addr %s146, 4
      %s148 = scalar_lea.vmem %s0, %s147
      %p149 = pneg %p35
      %p150 = pneg %p32
      %p151 = pneg %p56
      %p152 = pneg %p53
      %p153 = pneg %p77
      %p154 = pneg %p74
      %p155 = pneg %p103
      %p156 = pneg %p100
      %s157 = smul.u32 8, %s14
      %p158 = scmp.lt.s32.totalorder %s157, 15
      %s159 = scalar_select %p158, %s157, 15
      %s160 = smul.addr %s159, 4
      %s161 = scalar_lea.vmem %s3, %s160
      %s162 = smul.u32 8, %s14
      %p163 = scmp.lt.s32.totalorder %s162, 15
      %s164 = scalar_select %p163, %s162, 15
      %s165 = smul.addr %s164, 4
      %s166 = scalar_lea.vmem %s0, %s165
      %s167 = smul.u32 8, %s14
      %s168 = smul.u32 8, %s14
      %p169 = scmp.lt.s32.totalorder %s168, 15
      %s170 = scalar_select %p169, %s168, 15
      %s171 = smul.addr %s170, 4
      %s172 = scalar_lea.vmem %s3, %s171
      %s173 = smul.u32 8, %s14
      %v175 = vld [vmem:[%s166] sm:$0xf]
      %v176 = vld [vmem:[%s166 + $0x4] sm:$0xf]
      %v177 = vld [vmem:[%s166 + $0x8] sm:$0xf]
      %v178 = vld [vmem:[%s166 + $0xc] sm:$0xf]
      %v179 = vld [vmem:[%s166 + $0x10] sm:$0xf]
      %v180 = vld [vmem:[%s166 + $0x14] sm:$0xf]
      %v181 = vld [vmem:[%s166 + $0x18] sm:$0xf]
      %v182 = vld [vmem:[%s166 + $0x1c] sm:$0xf]
      %v183 = vld [vmem:[%s1] sm:$0xf]
      %v184 = vld [vmem:[%s1 + $0x4] sm:$0xf]
      %v185 = vld [vmem:[%s1 + $0x8] sm:$0xf]
      %v186 = vld [vmem:[%s1 + $0xc] sm:$0xf]
      %v187 = vld [vmem:[%s1 + $0x10] sm:$0xf]
      %v188 = vld [vmem:[%s1 + $0x14] sm:$0xf]
      %v189 = vld [vmem:[%s1 + $0x18] sm:$0xf]
      %v190 = vld [vmem:[%s1 + $0x1c] sm:$0xf]
      %v191 = vld [vmem:[%s1 + $0x20] sm:$0xf]
      %v192 = vld [vmem:[%s1 + $0x24] sm:$0xf]
      %v193 = vld [vmem:[%s1 + $0x28] sm:$0xf]
      %v194 = vld [vmem:[%s1 + $0x2c] sm:$0xf]
      %v195 = vld [vmem:[%s1 + $0x30] sm:$0xf]
      %v196 = vld [vmem:[%s1 + $0x34] sm:$0xf]
      %v197 = vld [vmem:[%s1 + $0x38] sm:$0xf]
      %v198 = vld [vmem:[%s1 + $0x3c] sm:$0xf]
      %v199 = vld [vmem:[%s2] sm:$0x1]
      %v201 = vlaneseq
      %v202 = vshrl.u32 %v201, 7
      %v203 = vsub.s32 0, %v202
      %v204 = vrot.slane %v199, %v203
      %v214 = vunpack.c.l.b16 %v175
      %v215 = vunpack.c.l.b16 %v176
      %v216 = vunpack.c.l.b16 %v177
      %v217 = vunpack.c.l.b16 %v178
      %v218 = vunpack.c.l.b16 %v179
      %v219 = vunpack.c.l.b16 %v180
      %v220 = vunpack.c.l.b16 %v181
      %v221 = vunpack.c.l.b16 %v182
      %v222 = vpack.c.b16 %v215, %v214
      %v223 = vpack.c.b16 %v217, %v216
      %v224 = vpack.c.b16 %v219, %v218
      %v225 = vpack.c.b16 %v221, %v220
      %v246 = vunpack.c.l.b16 %v183
      %v247 = vunpack.c.l.b16 %v184
      %v248 = vunpack.c.l.b16 %v185
      %v249 = vunpack.c.l.b16 %v186
      %v250 = vunpack.c.l.b16 %v187
      %v251 = vunpack.c.l.b16 %v188
      %v252 = vunpack.c.l.b16 %v189
      %v253 = vunpack.c.l.b16 %v190
      %v254 = vunpack.c.l.b16 %v191
      %v255 = vunpack.c.l.b16 %v192
      %v256 = vunpack.c.l.b16 %v193
      %v257 = vunpack.c.l.b16 %v194
      %v258 = vunpack.c.l.b16 %v195
      %v259 = vunpack.c.l.b16 %v196
      %v260 = vunpack.c.l.b16 %v197
      %v261 = vunpack.c.l.b16 %v198
      %v262 = vpack.c.b16 %v247, %v246
      %v263 = vpack.c.b16 %v249, %v248
      %v264 = vpack.c.b16 %v251, %v250
      %v265 = vpack.c.b16 %v253, %v252
      %v266 = vpack.c.b16 %v255, %v254
      %v267 = vpack.c.b16 %v257, %v256
      %v268 = vpack.c.b16 %v259, %v258
      %v269 = vpack.c.b16 %v261, %v260
      %278 = vmatprep.subr.bf16.mxu0 0
      %279 = vmatpush1.bf16.msra.mxu0 %v262
      %280 = vmatprep.subr.bf16.mxu0 0
      %281 = vmatpush1.bf16.msra.mxu0 %v263
      %282 = vmatprep.subr.bf16.mxu0 0
      %283 = vmatpush1.bf16.msra.mxu0 %v264
      %284 = vmatprep.subr.bf16.mxu0 0
      %285 = vmatpush1.bf16.msra.mxu0 %v265
      %286 = vmatprep.subr.bf16.mxu0 0
      %287 = vmatpush1.bf16.msra.mxu0 %v266
      %288 = vmatprep.subr.bf16.mxu0 0
      %289 = vmatpush1.bf16.msra.mxu0 %v267
      %290 = vmatprep.subr.bf16.mxu0 0
      %291 = vmatpush1.bf16.msra.mxu0 %v268
      %292 = vmatprep.subr.bf16.mxu0 0
      %293 = vmatpush1.bf16.msra.mxu0 %v269
      %294 = vmatprep.subr.bf16.mxu0 0
      %295 = vmatpush1.bf16.msra.mxu0 0
      %296 = vmatprep.subr.bf16.mxu0 0
      %297 = vmatpush1.bf16.msra.mxu0 0
      %298 = vmatprep.subr.bf16.mxu0 0
      %299 = vmatpush1.bf16.msra.mxu0 0
      %300 = vmatprep.subr.bf16.mxu0 0
      %301 = vmatpush1.bf16.msra.mxu0 0
      %302 = vmatprep.subr.bf16.mxu0 0
      %303 = vmatpush1.bf16.msra.mxu0 0
      %304 = vmatprep.subr.bf16.mxu0 0
      %305 = vmatpush1.bf16.msra.mxu0 0
      %306 = vmatprep.subr.bf16.mxu0 0
      %307 = vmatpush1.bf16.msra.mxu0 0
      %308 = vmatprep.subr.bf16.mxu0 0
      %309 = vmatpush1.bf16.msra.mxu0 0
      %310 = vmatprep.mubr.bf16.mxu0 0
      %311 = vmatmul.mubr.bf16.gmra.mrb[0].mxu0 %v222
      %v312 = vpop.f32.mrb[0].mxu0
      %v313 = vadd.f32 %v204, %v312
      %v314 = vpop.f32.mrb[0].mxu0
      %v315 = vpop.f32.mrb[0].mxu0
      %v316 = vadd.f32 %v204, %v315
      %v317 = vpop.f32.mrb[0].mxu0
      %318 = vmatprep.mubr.bf16.mxu0 0
      %319 = vmatmul.mubr.bf16.gmra.mrb[0].mxu0 %v223
      %v320 = vpop.f32.mrb[0].mxu0
      %v321 = vadd.f32 %v204, %v320
      %v322 = vpop.f32.mrb[0].mxu0
      %v323 = vpop.f32.mrb[0].mxu0
      %v324 = vadd.f32 %v204, %v323
      %v325 = vpop.f32.mrb[0].mxu0
      %326 = vmatprep.mubr.bf16.mxu0 0
      %327 = vmatmul.mubr.bf16.gmra.mrb[0].mxu0 %v224
      %v328 = vpop.f32.mrb[0].mxu0
      %v329 = vadd.f32 %v204, %v328
      %v330 = vpop.f32.mrb[0].mxu0
      %v331 = vpop.f32.mrb[0].mxu0
      %v332 = vadd.f32 %v204, %v331
      %v333 = vpop.f32.mrb[0].mxu0
      %334 = vmatprep.mubr.bf16.mxu0 0
      %335 = vmatmul.mubr.bf16.gmra.mrb[0].mxu0 %v225
      %v336 = vpop.f32.mrb[0].mxu0
      %v337 = vadd.f32 %v204, %v336
      %v338 = vpop.f32.mrb[0].mxu0
      %v339 = vpop.f32.mrb[0].mxu0
      %v340 = vadd.f32 %v204, %v339
      %v341 = vpop.f32.mrb[0].mxu0
      %342 = vdwg.mxu0
      %v343 = vmin.f32 %v313, 20.0
      %v344 = vmin.f32 %v316, 20.0
      %v345 = vmin.f32 %v321, 20.0
      %v346 = vmin.f32 %v324, 20.0
      %v347 = vmin.f32 %v329, 20.0
      %v348 = vmin.f32 %v332, 20.0
      %v349 = vmin.f32 %v337, 20.0
      %v350 = vmin.f32 %v340, 20.0
      %v351 = vmul.f32 %v343, 1.442695
      %v352 = vpow.pop %v351
      %v353 = vmul.f32 %v344, 1.442695
      %v354 = vpow.pop %v353
      %v355 = vmul.f32 %v345, 1.442695
      %v356 = vpow.pop %v355
      %v357 = vmul.f32 %v346, 1.442695
      %v358 = vpow.pop %v357
      %v359 = vmul.f32 %v347, 1.442695
      %v360 = vpow.pop %v359
      %v361 = vmul.f32 %v348, 1.442695
      %v362 = vpow.pop %v361
      %v363 = vmul.f32 %v349, 1.442695
      %v364 = vpow.pop %v363
      %v365 = vmul.f32 %v350, 1.442695
      %v366 = vpow.pop %v365
      %v367 = vadd.f32 %v352, 1.0
      %v368 = vadd.f32 %v354, 1.0
      %v369 = vadd.f32 %v356, 1.0
      %v370 = vadd.f32 %v358, 1.0
      %v371 = vadd.f32 %v360, 1.0
      %v372 = vadd.f32 %v362, 1.0
      %v373 = vadd.f32 %v364, 1.0
      %v374 = vadd.f32 %v366, 1.0
      %v375 = vmul.f32 %v367, %v367
      %v376 = vmul.f32 %v368, %v368
      %v377 = vmul.f32 %v369, %v369
      %v378 = vmul.f32 %v370, %v370
      %v379 = vmul.f32 %v371, %v371
      %v380 = vmul.f32 %v372, %v372
      %v381 = vmul.f32 %v373, %v373
      %v382 = vmul.f32 %v374, %v374
      %v383 = vsub.f32 %v375, 1.0
      %v384 = vsub.f32 %v376, 1.0
      %v385 = vsub.f32 %v377, 1.0
      %v386 = vsub.f32 %v378, 1.0
      %v387 = vsub.f32 %v379, 1.0
      %v388 = vsub.f32 %v380, 1.0
      %v389 = vsub.f32 %v381, 1.0
      %v390 = vsub.f32 %v382, 1.0
      %v391 = vadd.f32 %v375, 1.0
      %v392 = vadd.f32 %v376, 1.0
      %v393 = vadd.f32 %v377, 1.0
      %v394 = vadd.f32 %v378, 1.0
      %v395 = vadd.f32 %v379, 1.0
      %v396 = vadd.f32 %v380, 1.0
      %v397 = vadd.f32 %v381, 1.0
      %v398 = vadd.f32 %v382, 1.0
      %v399 = vrcp.pop %v391
      %v400 = vrcp.pop %v392
      %v401 = vrcp.pop %v393
      %v402 = vrcp.pop %v394
      %v403 = vrcp.pop %v395
      %v404 = vrcp.pop %v396
      %v405 = vrcp.pop %v397
      %v406 = vrcp.pop %v398
      %v407 = vmul.f32 %v383, %v399
      %v408 = vmul.f32 %v384, %v400
      %v409 = vmul.f32 %v385, %v401
      %v410 = vmul.f32 %v386, %v402
      %v411 = vmul.f32 %v387, %v403
      %v412 = vmul.f32 %v388, %v404
      %v413 = vmul.f32 %v389, %v405
      %v414 = vmul.f32 %v390, %v406
      %vm415 = vcmp.gt.f32.partialorder %v313, 20.0
      %vm416 = vcmp.gt.f32.partialorder %v316, 20.0
      %vm417 = vcmp.gt.f32.partialorder %v321, 20.0
      %vm418 = vcmp.gt.f32.partialorder %v324, 20.0
      %vm419 = vcmp.gt.f32.partialorder %v329, 20.0
      %vm420 = vcmp.gt.f32.partialorder %v332, 20.0
      %vm421 = vcmp.gt.f32.partialorder %v337, 20.0
      %vm422 = vcmp.gt.f32.partialorder %v340, 20.0
      %v423 = vmul.f32 %v313, %v407
      %v424 = vmul.f32 %v316, %v408
      %v425 = vmul.f32 %v321, %v409
      %v426 = vmul.f32 %v324, %v410
      %v427 = vmul.f32 %v329, %v411
      %v428 = vmul.f32 %v332, %v412
      %v429 = vmul.f32 %v337, %v413
      %v430 = vmul.f32 %v340, %v414
      %v431 = vsel %vm415, %v313, %v423
      %v432 = vsel %vm416, %v316, %v424
      %v433 = vsel %vm417, %v321, %v425
      %v434 = vsel %vm418, %v324, %v426
      %v435 = vsel %vm419, %v329, %v427
      %v436 = vsel %vm420, %v332, %v428
      %v437 = vsel %vm421, %v337, %v429
      %v438 = vsel %vm422, %v340, %v430
      %v439 = vpack.c.bf16 %v432, %v431
      %v440 = vpack.c.bf16 %v434, %v433
      %v441 = vpack.c.bf16 %v436, %v435
      %v442 = vpack.c.bf16 %v438, %v437
      %v447 = vunpack.c.l.b16 %v439
      %v448 = vunpack.c.h.b16 %v439
      %v449 = vunpack.c.l.b16 %v440
      %v450 = vunpack.c.h.b16 %v440
      %v451 = vunpack.c.l.b16 %v441
      %v452 = vunpack.c.h.b16 %v441
      %v453 = vunpack.c.l.b16 %v442
      %v454 = vunpack.c.h.b16 %v442
      %v455 = vpack.c.b16 %v447, %v447
      %v456 = vpack.c.b16 %v448, %v448
      %v457 = vpack.c.b16 %v449, %v449
      %v458 = vpack.c.b16 %v450, %v450
      %v459 = vpack.c.b16 %v451, %v451
      %v460 = vpack.c.b16 %v452, %v452
      %v461 = vpack.c.b16 %v453, %v453
      %v462 = vpack.c.b16 %v454, %v454
      %471 = vst [vmem:[%s172] sm:$0xf] %v455
      %472 = vst [vmem:[%s172 + $0x4] sm:$0xf] %v456
      %473 = vst [vmem:[%s172 + $0x8] sm:$0xf] %v457
      %474 = vst [vmem:[%s172 + $0xc] sm:$0xf] %v458
      %475 = vst [vmem:[%s172 + $0x10] sm:$0xf] %v459
      %476 = vst [vmem:[%s172 + $0x14] sm:$0xf] %v460
      %477 = vst [vmem:[%s172 + $0x18] sm:$0xf] %v461
      %478 = vst [vmem:[%s172 + $0x1c] sm:$0xf] %v462
      %s479 = smul.u32 8, %s14
      %p480 = scmp.lt.s32.totalorder %s479, 15
      %s481 = scalar_select %p480, %s479, 15
      %s482 = smul.addr %s481, 4
      %s483 = scalar_lea.vmem %s3, %s482
      // Predicated region
      $region33: #{csp_layer_forward.8} parent=31 // pred_check
        %p484 = pneg %p100
      $region34: #{csp_layer_forward.8} parent=31 // pred_check_branch
        %486 = sbr.rel (%p484) target = $region36
      $region35: #{csp_layer_forward.8} parent=31 // pred_region
        %s487 = smul.u32 8, %s14
      $region36: #{csp_layer_forward.8} parent=31 // pred_fallthru
        _
    $region32: #{csp_layer_forward.8} parent=5 // pred_fallthru
      _
    %p488 = scmp.le.s32.totalorder 2, %s9
    // Predicated region
    $region37: #{csp_layer_forward.8} parent=5 // pred_check
      %p489 = pneg %p488
    $region38: #{csp_layer_forward.8} parent=5 // pred_check_branch
      %491 = sbr.rel (%p489) target = $region40
    $region39: #{csp_layer_forward.8} parent=5 // pred_region
      %s492 = ssub.s32 %s9, 2
      // Predicated region
      $region41: #{csp_layer_forward.8} parent=39 // pred_check
        %p493 = pneg %p106
      $region42: #{csp_layer_forward.8} parent=39 // pred_check_branch
        %495 = sbr.rel (%p493) target = $region44
      $region43: #{csp_layer_forward.8} parent=39 // pred_region
        %s496 = smul.u32 8, %s15
        %p497 = scmp.lt.s32.totalorder %s496, 15
        %s498 = scalar_select %p497, %s496, 15
        %s499 = smul.addr %s498, 4
        %s500 = scalar_lea.vmem %s3, %s499
      $region44: #{csp_layer_forward.8} parent=39 // pred_fallthru
        _
    $region40: #{csp_layer_forward.8} parent=5 // pred_fallthru
      _
  $region6: #{csp_layer_forward.8} parent=0 // loop_footer
    %s13 = sadd.s32 1, %s9
  $region7: #{csp_layer_forward.8} parent=0 // loop_footer_branch
    %8 = sbr.rel target = $region3
  $region8: #{csp_layer_forward.8} parent=0 // loop_exit
    _

// kernel: csp_layer_forward.7
$region0: #{csp_layer_forward.7}
  #allocation0 [shape = 'u32[]', space=smem, size = 0x4, offset = 0x4, fixed_abs, tag = 'smem constant byte address 0x4 - core index']
  #allocation1 [shape = 'u32[144,128]{1,0:T(1,128)}', space=vmem, size = 0x12000, scoped, tag = 'internal scratch']
  %s0 = inlined_call_operand.vmem [shape: bf16[128,128], index: 0, kind: input, shape index: {}]
  %s1 = inlined_call_operand.vmem [shape: bf16[128,256], index: 1, kind: input, shape index: {}]
  %s2 = inlined_call_operand.vmem [shape: f32[1,256], index: 2, kind: input, shape index: {}]
  %s3 = inlined_call_operand.vmem [shape: bf16[128,128], index: 3, kind: output, shape index: {0}]
  %s4 = inlined_call_operand.vmem [shape: bf16[128,128], index: 4, kind: output, shape index: {1}]
  %5 = xla_tuple %s3, %s4
  %s6 = sld [smem:[#allocation0]]
  $region53: #{csp_layer_forward.7} parent=0
    _
  %s8 = ssub.s32 1, %s6
  %s9 = scalar_select 0, %s8, %s6
  loop: start=0, step=1, limit=4
  $region2: #{csp_layer_forward.7} parent=0 // loop_pre_header
    _
  $region3: #{csp_layer_forward.7} parent=0 // loop_header
    %s11 = sphi 0, %s15
    %p12 = scmp.ge.s32.totalorder %s11, 4
    %s21 = sphi 0, %s23
    %s24 = sphi 0, %s21
    %s25 = sphi 0, %s24
    %s41 = sphi 0, %s25
    %s45 = sphi 0, %s45
    %s47 = sphi 0, %s45
    %s48 = sphi 0, %s47
    %s62 = sphi 0, %s48
    %s66 = sphi 0, %s66
    %s68 = sphi 0, %s66
    %s69 = sphi 0, %s68
    %s83 = sphi 0, %s69
    %s89 = sphi 0, %s91
    %s92 = sphi 0, %s89
    %s93 = sphi 0, %s92
    %s109 = sphi 0, %s93
    %s115 = sphi 0, %s117
    %s118 = sphi 0, %s115
    %s119 = sphi 0, %s118
    %s135 = sphi 0, %s119
  $region4: #{csp_layer_forward.7} parent=0 // loop_header_branch
    %14 = sbr.rel (%p12) target = $region8
  $region5: #{csp_layer_forward.7} parent=0 // loop_body
    %s16 = ssub.s32 %s11, 1
    %s17 = ssub.s32 %s11, 2
    %s18 = sadd.s32 %s11, 1
    %s19 = ssub.s32 %s11, %s18
    %p20 = scmp.eq.s32.totalorder %s19, 0
    %s22 = sadd.s32 %s21, 1
    %s23 = scalar_select %p20, %s21, %s22
    %p26 = pneg %p20
    %p27 = scmp.eq.s32.totalorder %s11, 1
    %p28 = por %p26, %p27
    %p29 = scmp.ne.s32.totalorder %s21, %s24
    %p30 = scmp.eq.s32.totalorder %s11, 0
    %p31 = por %p29, %p30
    %p32 = scmp.ne.s32.totalorder %s21, %s24
    %p33 = scmp.eq.s32.totalorder %s16, 1
    %p34 = por %p32, %p33
    %p35 = scmp.ne.s32.totalorder %s24, %s25
    %p36 = scmp.eq.s32.totalorder %s16, 0
    %p37 = por %p35, %p36
    %p38 = scmp.ne.s32.totalorder %s24, %s25
    %p39 = scmp.eq.s32.totalorder %s17, 1
    %p40 = por %p38, %p39
    %p42 = scmp.ne.s32.totalorder %s25, %s41
    %p43 = scmp.eq.s32.totalorder %s17, 0
    %p44 = por %p42, %p43
    %s46 = sadd.s32 %s45, 1
    %p49 = scmp.eq.s32.totalorder %s11, 1
    %p50 = scmp.ne.s32.totalorder %s45, %s47
    %p51 = scmp.eq.s32.totalorder %s11, 0
    %p52 = por %p50, %p51
    %p53 = scmp.ne.s32.totalorder %s45, %s47
    %p54 = scmp.eq.s32.totalorder %s16, 1
    %p55 = por %p53, %p54
    %p56 = scmp.ne.s32.totalorder %s47, %s48
    %p57 = scmp.eq.s32.totalorder %s16, 0
    %p58 = por %p56, %p57
    %p59 = scmp.ne.s32.totalorder %s47, %s48
    %p60 = scmp.eq.s32.totalorder %s17, 1
    %p61 = por %p59, %p60
    %p63 = scmp.ne.s32.totalorder %s48, %s62
    %p64 = scmp.eq.s32.totalorder %s17, 0
    %p65 = por %p63, %p64
    %s67 = sadd.s32 %s66, 1
    %p70 = scmp.eq.s32.totalorder %s11, 1
    %p71 = scmp.ne.s32.totalorder %s66, %s68
    %p72 = scmp.eq.s32.totalorder %s11, 0
    %p73 = por %p71, %p72
    %p74 = scmp.ne.s32.totalorder %s66, %s68
    %p75 = scmp.eq.s32.totalorder %s16, 1
    %p76 = por %p74, %p75
    %p77 = scmp.ne.s32.totalorder %s68, %s69
    %p78 = scmp.eq.s32.totalorder %s16, 0
    %p79 = por %p77, %p78
    %p80 = scmp.ne.s32.totalorder %s68, %s69
    %p81 = scmp.eq.s32.totalorder %s17, 1
    %p82 = por %p80, %p81
    %p84 = scmp.ne.s32.totalorder %s69, %s83
    %p85 = scmp.eq.s32.totalorder %s17, 0
    %p86 = por %p84, %p85
    %s87 = ssub.s32 %s11, %s18
    %p88 = scmp.eq.s32.totalorder %s87, 0
    %s90 = sadd.s32 %s89, 1
    %s91 = scalar_select %p88, %s89, %s90
    %p94 = pneg %p88
    %p95 = scmp.eq.s32.totalorder %s11, 1
    %p96 = por %p94, %p95
    %p97 = scmp.ne.s32.totalorder %s89, %s92
    %p98 = scmp.eq.s32.totalorder %s11, 0
    %p99 = por %p97, %p98
    %p100 = scmp.ne.s32.totalorder %s89, %s92
    %p101 = scmp.eq.s32.totalorder %s16, 1
    %p102 = por %p100, %p101
    %p103 = scmp.ne.s32.totalorder %s92, %s93
    %p104 = scmp.eq.s32.totalorder %s16, 0
    %p105 = por %p103, %p104
    %p106 = scmp.ne.s32.totalorder %s92, %s93
    %p107 = scmp.eq.s32.totalorder %s17, 1
    %p108 = por %p106, %p107
    %p110 = scmp.ne.s32.totalorder %s93, %s109
    %p111 = scmp.eq.s32.totalorder %s17, 0
    %p112 = por %p110, %p111
    %s113 = ssub.s32 %s11, %s18
    %p114 = scmp.eq.s32.totalorder %s113, 0
    %s116 = sadd.s32 %s115, 1
    %s117 = scalar_select %p114, %s115, %s116
    %p120 = pneg %p114
    %p121 = scmp.eq.s32.totalorder %s11, 1
    %p122 = por %p120, %p121
    %p123 = scmp.ne.s32.totalorder %s115, %s118
    %p124 = scmp.eq.s32.totalorder %s11, 0
    %p125 = por %p123, %p124
    %p126 = scmp.ne.s32.totalorder %s115, %s118
    %p127 = scmp.eq.s32.totalorder %s16, 1
    %p128 = por %p126, %p127
    %p129 = scmp.ne.s32.totalorder %s118, %s119
    %p130 = scmp.eq.s32.totalorder %s16, 0
    %p131 = por %p129, %p130
    %p132 = scmp.ne.s32.totalorder %s118, %s119
    %p133 = scmp.eq.s32.totalorder %s17, 1
    %p134 = por %p132, %p133
    %p136 = scmp.ne.s32.totalorder %s119, %s135
    %p137 = scmp.eq.s32.totalorder %s17, 0
    %p138 = por %p136, %p137
    %p139 = scmp.le.s32.totalorder 1, %s11
    %p140 = scmp.lt.s32.totalorder %s11, 3
    %p141 = pnand %p139, %p140
    %p142 = pneg %p141
    // Predicated region
    $region9: #{csp_layer_forward.7} parent=5 // pred_check
      _
    $region10: #{csp_layer_forward.7} parent=5 // pred_check_branch
      %144 = sbr.rel (%p141) target = $region12
    $region11: #{csp_layer_forward.7} parent=5 // pred_region
      %s145 = ssub.s32 %s11, 1
      // Predicated region
      $region13: #{csp_layer_forward.7} parent=11 // pred_check
        %p146 = pneg %p58
      $region14: #{csp_layer_forward.7} parent=11 // pred_check_branch
        %148 = sbr.rel (%p146) target = $region16
      $region15: #{csp_layer_forward.7} parent=11 // pred_region
        _
      $region16: #{csp_layer_forward.7} parent=11 // pred_fallthru
        _
      // Predicated region
      $region17: #{csp_layer_forward.7} parent=11 // pred_check
        %p149 = pneg %p79
      $region18: #{csp_layer_forward.7} parent=11 // pred_check_branch
        %151 = sbr.rel (%p149) target = $region20
      $region19: #{csp_layer_forward.7} parent=11 // pred_region
        _
      $region20: #{csp_layer_forward.7} parent=11 // pred_fallthru
        _
    $region12: #{csp_layer_forward.7} parent=5 // pred_fallthru
      _
    %p152 = scmp.lt.s32.totalorder %s11, 2
    // Predicated region
    $region21: #{csp_layer_forward.7} parent=5 // pred_check
      %p153 = pneg %p152
    $region22: #{csp_layer_forward.7} parent=5 // pred_check_branch
      %155 = sbr.rel (%p153) target = $region24
    $region23: #{csp_layer_forward.7} parent=5 // pred_region
      // Predicated region
      $region25: #{csp_layer_forward.7} parent=23 // pred_check
        %p156 = pneg %p31
      $region26: #{csp_layer_forward.7} parent=23 // pred_check_branch
        %158 = sbr.rel (%p156) target = $region28
      $region27: #{csp_layer_forward.7} parent=23 // pred_region
        %s159 = smul.u32 8, %s11
        %p160 = scmp.lt.s32.totalorder %s159, 15
        %s161 = scalar_select %p160, %s159, 15
        %s162 = smul.addr %s161, 4
        %s163 = scalar_lea.vmem %s0, %s162
        %s164 = smul.u32 8, %s11
      $region28: #{csp_layer_forward.7} parent=23 // pred_fallthru
        _
    $region24: #{csp_layer_forward.7} parent=5 // pred_fallthru
      _
    %p165 = scmp.le.s32.totalorder 1, %s11
    %p166 = scmp.lt.s32.totalorder %s11, 3
    %p167 = pnand %p165, %p166
    %p168 = pneg %p167
    // Predicated region
    $region29: #{csp_layer_forward.7} parent=5 // pred_check
      _
    $region30: #{csp_layer_forward.7} parent=5 // pred_check_branch
      %170 = sbr.rel (%p167) target = $region32
    $region31: #{csp_layer_forward.7} parent=5 // pred_region
      %s171 = ssub.s32 %s11, 1
      %s172 = smul.u32 8, %s16
      %p173 = scmp.lt.s32.totalorder %s172, 15
      %s174 = scalar_select %p173, %s172, 15
      %s175 = smul.addr %s174, 4
      %s176 = scalar_lea.vmem %s0, %s175
      %p177 = pneg %p37
      %p178 = pneg %p34
      %p179 = pneg %p58
      %p180 = pneg %p55
      %p181 = pneg %p79
      %p182 = pneg %p76
      %p183 = pneg %p105
      %p184 = pneg %p102
      %s185 = smul.u32 8, %s16
      %p186 = scmp.lt.s32.totalorder %s185, 15
      %s187 = scalar_select %p186, %s185, 15
      %s188 = smul.addr %s187, 4
      %s189 = scalar_lea.vmem %s3, %s188
      %p190 = pneg %p131
      %p191 = pneg %p128
      %s192 = smul.u32 8, %s16
      %p193 = scmp.lt.s32.totalorder %s192, 15
      %s194 = scalar_select %p193, %s192, 15
      %s195 = smul.addr %s194, 4
      %s196 = scalar_lea.vmem %s4, %s195
      %s197 = smul.u32 8, %s16
      %p198 = scmp.lt.s32.totalorder %s197, 15
      %s199 = scalar_select %p198, %s197, 15
      %s200 = smul.addr %s199, 4
      %s201 = scalar_lea.vmem %s0, %s200
      %s202 = smul.u32 8, %s16
      %s203 = smul.u32 8, %s16
      %p204 = scmp.lt.s32.totalorder %s203, 15
      %s205 = scalar_select %p204, %s203, 15
      %s206 = smul.addr %s205, 4
      %s207 = scalar_lea.vmem %s3, %s206
      %s208 = smul.u32 8, %s16
      %s209 = smul.u32 8, %s16
      %p210 = scmp.lt.s32.totalorder %s209, 15
      %s211 = scalar_select %p210, %s209, 15
      %s212 = smul.addr %s211, 4
      %s213 = scalar_lea.vmem %s4, %s212
      %s214 = smul.u32 8, %s16
      %v216 = vld [vmem:[%s201] sm:$0xf]
      %v217 = vld [vmem:[%s201 + $0x4] sm:$0xf]
      %v218 = vld [vmem:[%s201 + $0x8] sm:$0xf]
      %v219 = vld [vmem:[%s201 + $0xc] sm:$0xf]
      %v220 = vld [vmem:[%s201 + $0x10] sm:$0xf]
      %v221 = vld [vmem:[%s201 + $0x14] sm:$0xf]
      %v222 = vld [vmem:[%s201 + $0x18] sm:$0xf]
      %v223 = vld [vmem:[%s201 + $0x1c] sm:$0xf]
      %v224 = vld [vmem:[%s1] sm:$0xff]
      %v225 = vld [vmem:[%s1 + $0x8] sm:$0xff]
      %v226 = vld [vmem:[%s1 + $0x10] sm:$0xff]
      %v227 = vld [vmem:[%s1 + $0x18] sm:$0xff]
      %v228 = vld [vmem:[%s1 + $0x20] sm:$0xff]
      %v229 = vld [vmem:[%s1 + $0x28] sm:$0xff]
      %v230 = vld [vmem:[%s1 + $0x30] sm:$0xff]
      %v231 = vld [vmem:[%s1 + $0x38] sm:$0xff]
      %v232 = vld [vmem:[%s1 + $0x40] sm:$0xff]
      %v233 = vld [vmem:[%s1 + $0x48] sm:$0xff]
      %v234 = vld [vmem:[%s1 + $0x50] sm:$0xff]
      %v235 = vld [vmem:[%s1 + $0x58] sm:$0xff]
      %v236 = vld [vmem:[%s1 + $0x60] sm:$0xff]
      %v237 = vld [vmem:[%s1 + $0x68] sm:$0xff]
      %v238 = vld [vmem:[%s1 + $0x70] sm:$0xff]
      %v239 = vld [vmem:[%s1 + $0x78] sm:$0xff]
      %v240 = vld [vmem:[%s2] sm:$0x3]
      %v242 = vlaneseq
      %v243 = vshrl.u32 %v242, 7
      %v244 = vsub.s32 0, %v243
      %v245 = vrot.slane %v240, %v244
      %v246 = vlaneseq
      %v247 = vshrl.u32 %v246, 7
      %v248 = vsub.s32 1, %v247
      %v249 = vrot.slane %v240, %v248
      %v260 = vunpack.c.l.b16 %v216
      %v261 = vunpack.c.l.b16 %v217
      %v262 = vunpack.c.l.b16 %v218
      %v263 = vunpack.c.l.b16 %v219
      %v264 = vunpack.c.l.b16 %v220
      %v265 = vunpack.c.l.b16 %v221
      %v266 = vunpack.c.l.b16 %v222
      %v267 = vunpack.c.l.b16 %v223
      %v268 = vpack.c.b16 %v261, %v260
      %v269 = vpack.c.b16 %v263, %v262
      %v270 = vpack.c.b16 %v265, %v264
      %v271 = vpack.c.b16 %v267, %v266
      %v292 = vunpack.c.l.b16 %v224
      %v293 = vunpack.c.h.b16 %v224
      %v294 = vunpack.c.l.b16 %v225
      %v295 = vunpack.c.h.b16 %v225
      %v296 = vunpack.c.l.b16 %v226
      %v297 = vunpack.c.h.b16 %v226
      %v298 = vunpack.c.l.b16 %v227
      %v299 = vunpack.c.h.b16 %v227
      %v300 = vunpack.c.l.b16 %v228
      %v301 = vunpack.c.h.b16 %v228
      %v302 = vunpack.c.l.b16 %v229
      %v303 = vunpack.c.h.b16 %v229
      %v304 = vunpack.c.l.b16 %v230
      %v305 = vunpack.c.h.b16 %v230
      %v306 = vunpack.c.l.b16 %v231
      %v307 = vunpack.c.h.b16 %v231
      %v308 = vunpack.c.l.b16 %v232
      %v309 = vunpack.c.h.b16 %v232
      %v310 = vunpack.c.l.b16 %v233
      %v311 = vunpack.c.h.b16 %v233
      %v312 = vunpack.c.l.b16 %v234
      %v313 = vunpack.c.h.b16 %v234
      %v314 = vunpack.c.l.b16 %v235
      %v315 = vunpack.c.h.b16 %v235
      %v316 = vunpack.c.l.b16 %v236
      %v317 = vunpack.c.h.b16 %v236
      %v318 = vunpack.c.l.b16 %v237
      %v319 = vunpack.c.h.b16 %v237
      %v320 = vunpack.c.l.b16 %v238
      %v321 = vunpack.c.h.b16 %v238
      %v322 = vunpack.c.l.b16 %v239
      %v323 = vunpack.c.h.b16 %v239
      %v324 = vpack.c.b16 %v294, %v292
      %v325 = vpack.c.b16 %v295, %v293
      %v326 = vpack.c.b16 %v298, %v296
      %v327 = vpack.c.b16 %v299, %v297
      %v328 = vpack.c.b16 %v302, %v300
      %v329 = vpack.c.b16 %v303, %v301
      %v330 = vpack.c.b16 %v306, %v304
      %v331 = vpack.c.b16 %v307, %v305
      %v332 = vpack.c.b16 %v310, %v308
      %v333 = vpack.c.b16 %v311, %v309
      %v334 = vpack.c.b16 %v314, %v312
      %v335 = vpack.c.b16 %v315, %v313
      %v336 = vpack.c.b16 %v318, %v316
      %v337 = vpack.c.b16 %v319, %v317
      %v338 = vpack.c.b16 %v322, %v320
      %v339 = vpack.c.b16 %v323, %v321
      %356 = vmatprep.subr.bf16.mxu0 %v325
      %357 = vmatpush1.bf16.msra.mxu0 %v324
      %358 = vmatprep.subr.bf16.mxu0 %v327
      %359 = vmatpush1.bf16.msra.mxu0 %v326
      %360 = vmatprep.subr.bf16.mxu0 %v329
      %361 = vmatpush1.bf16.msra.mxu0 %v328
      %362 = vmatprep.subr.bf16.mxu0 %v331
      %363 = vmatpush1.bf16.msra.mxu0 %v330
      %364 = vmatprep.subr.bf16.mxu0 %v333
      %365 = vmatpush1.bf16.msra.mxu0 %v332
      %366 = vmatprep.subr.bf16.mxu0 %v335
      %367 = vmatpush1.bf16.msra.mxu0 %v334
      %368 = vmatprep.subr.bf16.mxu0 %v337
      %369 = vmatpush1.bf16.msra.mxu0 %v336
      %370 = vmatprep.subr.bf16.mxu0 %v339
      %371 = vmatpush1.bf16.msra.mxu0 %v338
      %372 = vmatprep.subr.bf16.mxu0 0
      %373 = vmatpush1.bf16.msra.mxu0 0
      %374 = vmatprep.subr.bf16.mxu0 0
      %375 = vmatpush1.bf16.msra.mxu0 0
      %376 = vmatprep.subr.bf16.mxu0 0
      %377 = vmatpush1.bf16.msra.mxu0 0
      %378 = vmatprep.subr.bf16.mxu0 0
      %379 = vmatpush1.bf16.msra.mxu0 0
      %380 = vmatprep.subr.bf16.mxu0 0
      %381 = vmatpush1.bf16.msra.mxu0 0
      %382 = vmatprep.subr.bf16.mxu0 0
      %383 = vmatpush1.bf16.msra.mxu0 0
      %384 = vmatprep.subr.bf16.mxu0 0
      %385 = vmatpush1.bf16.msra.mxu0 0
      %386 = vmatprep.subr.bf16.mxu0 0
      %387 = vmatpush1.bf16.msra.mxu0 0
      %388 = vmatprep.mubr.bf16.mxu0 0
      %389 = vmatmul.mubr.bf16.gmra.mrb[0].mxu0 %v268
      %v390 = vpop.f32.mrb[0].mxu0
      %v391 = vadd.f32 %v245, %v390
      %v392 = vpop.f32.mrb[0].mxu0
      %v393 = vadd.f32 %v249, %v392
      %v394 = vpop.f32.mrb[0].mxu0
      %v395 = vadd.f32 %v245, %v394
      %v396 = vpop.f32.mrb[0].mxu0
      %v397 = vadd.f32 %v249, %v396
      %398 = vmatprep.mubr.bf16.mxu0 0
      %399 = vmatmul.mubr.bf16.gmra.mrb[0].mxu0 %v269
      %v400 = vpop.f32.mrb[0].mxu0
      %v401 = vadd.f32 %v245, %v400
      %v402 = vpop.f32.mrb[0].mxu0
      %v403 = vadd.f32 %v249, %v402
      %v404 = vpop.f32.mrb[0].mxu0
      %v405 = vadd.f32 %v245, %v404
      %v406 = vpop.f32.mrb[0].mxu0
      %v407 = vadd.f32 %v249, %v406
      %408 = vmatprep.mubr.bf16.mxu0 0
      %409 = vmatmul.mubr.bf16.gmra.mrb[0].mxu0 %v270
      %v410 = vpop.f32.mrb[0].mxu0
      %v411 = vadd.f32 %v245, %v410
      %v412 = vpop.f32.mrb[0].mxu0
      %v413 = vadd.f32 %v249, %v412
      %v414 = vpop.f32.mrb[0].mxu0
      %v415 = vadd.f32 %v245, %v414
      %v416 = vpop.f32.mrb[0].mxu0
      %v417 = vadd.f32 %v249, %v416
      %418 = vmatprep.mubr.bf16.mxu0 0
      %419 = vmatmul.mubr.bf16.gmra.mrb[0].mxu0 %v271
      %v420 = vpop.f32.mrb[0].mxu0
      %v421 = vadd.f32 %v245, %v420
      %v422 = vpop.f32.mrb[0].mxu0
      %v423 = vadd.f32 %v249, %v422
      %v424 = vpop.f32.mrb[0].mxu0
      %v425 = vadd.f32 %v245, %v424
      %v426 = vpop.f32.mrb[0].mxu0
      %v427 = vadd.f32 %v249, %v426
      %428 = vdwg.mxu0
      %v429 = vmin.f32 %v391, 20.0
      %v430 = vmin.f32 %v393, 20.0
      %v431 = vmin.f32 %v395, 20.0
      %v432 = vmin.f32 %v397, 20.0
      %v433 = vmin.f32 %v401, 20.0
      %v434 = vmin.f32 %v403, 20.0
      %v435 = vmin.f32 %v405, 20.0
      %v436 = vmin.f32 %v407, 20.0
      %v437 = vmin.f32 %v411, 20.0
      %v438 = vmin.f32 %v413, 20.0
      %v439 = vmin.f32 %v415, 20.0
      %v440 = vmin.f32 %v417, 20.0
      %v441 = vmin.f32 %v421, 20.0
      %v442 = vmin.f32 %v423, 20.0
      %v443 = vmin.f32 %v425, 20.0
      %v444 = vmin.f32 %v427, 20.0
      %v445 = vmul.f32 %v429, 1.442695
      %v446 = vpow.pop %v445
      %v447 = vmul.f32 %v430, 1.442695
      %v448 = vpow.pop %v447
      %v449 = vmul.f32 %v431, 1.442695
      %v450 = vpow.pop %v449
      %v451 = vmul.f32 %v432, 1.442695
      %v452 = vpow.pop %v451
      %v453 = vmul.f32 %v433, 1.442695
      %v454 = vpow.pop %v453
      %v455 = vmul.f32 %v434, 1.442695
      %v456 = vpow.pop %v455
      %v457 = vmul.f32 %v435, 1.442695
      %v458 = vpow.pop %v457
      %v459 = vmul.f32 %v436, 1.442695
      %v460 = vpow.pop %v459
      %v461 = vmul.f32 %v437, 1.442695
      %v462 = vpow.pop %v461
      %v463 = vmul.f32 %v438, 1.442695
      %v464 = vpow.pop %v463
      %v465 = vmul.f32 %v439, 1.442695
      %v466 = vpow.pop %v465
      %v467 = vmul.f32 %v440, 1.442695
      %v468 = vpow.pop %v467
      %v469 = vmul.f32 %v441, 1.442695
      %v470 = vpow.pop %v469
      %v471 = vmul.f32 %v442, 1.442695
      %v472 = vpow.pop %v471
      %v473 = vmul.f32 %v443, 1.442695
      %v474 = vpow.pop %v473
      %v475 = vmul.f32 %v444, 1.442695
      %v476 = vpow.pop %v475
      %v477 = vadd.f32 %v446, 1.0
      %v478 = vadd.f32 %v448, 1.0
      %v479 = vadd.f32 %v450, 1.0
      %v480 = vadd.f32 %v452, 1.0
      %v481 = vadd.f32 %v454, 1.0
      %v482 = vadd.f32 %v456, 1.0
      %v483 = vadd.f32 %v458, 1.0
      %v484 = vadd.f32 %v460, 1.0
      %v485 = vadd.f32 %v462, 1.0
      %v486 = vadd.f32 %v464, 1.0
      %v487 = vadd.f32 %v466, 1.0
      %v488 = vadd.f32 %v468, 1.0
      %v489 = vadd.f32 %v470, 1.0
      %v490 = vadd.f32 %v472, 1.0
      %v491 = vadd.f32 %v474, 1.0
      %v492 = vadd.f32 %v476, 1.0
      %v493 = vmul.f32 %v477, %v477
      %v494 = vmul.f32 %v478, %v478
      %v495 = vmul.f32 %v479, %v479
      %v496 = vmul.f32 %v480, %v480
      %v497 = vmul.f32 %v481, %v481
      %v498 = vmul.f32 %v482, %v482
      %v499 = vmul.f32 %v483, %v483
      %v500 = vmul.f32 %v484, %v484
      %v501 = vmul.f32 %v485, %v485
      %v502 = vmul.f32 %v486, %v486
      %v503 = vmul.f32 %v487, %v487
      %v504 = vmul.f32 %v488, %v488
      %v505 = vmul.f32 %v489, %v489
      %v506 = vmul.f32 %v490, %v490
      %v507 = vmul.f32 %v491, %v491
      %v508 = vmul.f32 %v492, %v492
      %v509 = vsub.f32 %v493, 1.0
      %v510 = vsub.f32 %v494, 1.0
      %v511 = vsub.f32 %v495, 1.0
      %v512 = vsub.f32 %v496, 1.0
      %v513 = vsub.f32 %v497, 1.0
      %v514 = vsub.f32 %v498, 1.0
      %v515 = vsub.f32 %v499, 1.0
      %v516 = vsub.f32 %v500, 1.0
      %v517 = vsub.f32 %v501, 1.0
      %v518 = vsub.f32 %v502, 1.0
      %v519 = vsub.f32 %v503, 1.0
      %v520 = vsub.f32 %v504, 1.0
      %v521 = vsub.f32 %v505, 1.0
      %v522 = vsub.f32 %v506, 1.0
      %v523 = vsub.f32 %v507, 1.0
      %v524 = vsub.f32 %v508, 1.0
      %v525 = vadd.f32 %v493, 1.0
      %v526 = vadd.f32 %v494, 1.0
      %v527 = vadd.f32 %v495, 1.0
      %v528 = vadd.f32 %v496, 1.0
      %v529 = vadd.f32 %v497, 1.0
      %v530 = vadd.f32 %v498, 1.0
      %v531 = vadd.f32 %v499, 1.0
      %v532 = vadd.f32 %v500, 1.0
      %v533 = vadd.f32 %v501, 1.0
      %v534 = vadd.f32 %v502, 1.0
      %v535 = vadd.f32 %v503, 1.0
      %v536 = vadd.f32 %v504, 1.0
      %v537 = vadd.f32 %v505, 1.0
      %v538 = vadd.f32 %v506, 1.0
      %v539 = vadd.f32 %v507, 1.0
      %v540 = vadd.f32 %v508, 1.0
      %v541 = vrcp.pop %v525
      %v542 = vrcp.pop %v526
      %v543 = vrcp.pop %v527
      %v544 = vrcp.pop %v528
      %v545 = vrcp.pop %v529
      %v546 = vrcp.pop %v530
      %v547 = vrcp.pop %v531
      %v548 = vrcp.pop %v532
      %v549 = vrcp.pop %v533
      %v550 = vrcp.pop %v534
      %v551 = vrcp.pop %v535
      %v552 = vrcp.pop %v536
      %v553 = vrcp.pop %v537
      %v554 = vrcp.pop %v538
      %v555 = vrcp.pop %v539
      %v556 = vrcp.pop %v540
      %v557 = vmul.f32 %v509, %v541
      %v558 = vmul.f32 %v510, %v542
      %v559 = vmul.f32 %v511, %v543
      %v560 = vmul.f32 %v512, %v544
      %v561 = vmul.f32 %v513, %v545
      %v562 = vmul.f32 %v514, %v546
      %v563 = vmul.f32 %v515, %v547
      %v564 = vmul.f32 %v516, %v548
      %v565 = vmul.f32 %v517, %v549
      %v566 = vmul.f32 %v518, %v550
      %v567 = vmul.f32 %v519, %v551
      %v568 = vmul.f32 %v520, %v552
      %v569 = vmul.f32 %v521, %v553
      %v570 = vmul.f32 %v522, %v554
      %v571 = vmul.f32 %v523, %v555
      %v572 = vmul.f32 %v524, %v556
      %vm573 = vcmp.gt.f32.partialorder %v391, 20.0
      %vm574 = vcmp.gt.f32.partialorder %v393, 20.0
      %vm575 = vcmp.gt.f32.partialorder %v395, 20.0
      %vm576 = vcmp.gt.f32.partialorder %v397, 20.0
      %vm577 = vcmp.gt.f32.partialorder %v401, 20.0
      %vm578 = vcmp.gt.f32.partialorder %v403, 20.0
      %vm579 = vcmp.gt.f32.partialorder %v405, 20.0
      %vm580 = vcmp.gt.f32.partialorder %v407, 20.0
      %vm581 = vcmp.gt.f32.partialorder %v411, 20.0
      %vm582 = vcmp.gt.f32.partialorder %v413, 20.0
      %vm583 = vcmp.gt.f32.partialorder %v415, 20.0
      %vm584 = vcmp.gt.f32.partialorder %v417, 20.0
      %vm585 = vcmp.gt.f32.partialorder %v421, 20.0
      %vm586 = vcmp.gt.f32.partialorder %v423, 20.0
      %vm587 = vcmp.gt.f32.partialorder %v425, 20.0
      %vm588 = vcmp.gt.f32.partialorder %v427, 20.0
      %v589 = vmul.f32 %v391, %v557
      %v590 = vmul.f32 %v393, %v558
      %v591 = vmul.f32 %v395, %v559
      %v592 = vmul.f32 %v397, %v560
      %v593 = vmul.f32 %v401, %v561
      %v594 = vmul.f32 %v403, %v562
      %v595 = vmul.f32 %v405, %v563
      %v596 = vmul.f32 %v407, %v564
      %v597 = vmul.f32 %v411, %v565
      %v598 = vmul.f32 %v413, %v566
      %v599 = vmul.f32 %v415, %v567
      %v600 = vmul.f32 %v417, %v568
      %v601 = vmul.f32 %v421, %v569
      %v602 = vmul.f32 %v423, %v570
      %v603 = vmul.f32 %v425, %v571
      %v604 = vmul.f32 %v427, %v572
      %v605 = vsel %vm573, %v391, %v589
      %v606 = vsel %vm574, %v393, %v590
      %v607 = vsel %vm575, %v395, %v591
      %v608 = vsel %vm576, %v397, %v592
      %v609 = vsel %vm577, %v401, %v593
      %v610 = vsel %vm578, %v403, %v594
      %v611 = vsel %vm579, %v405, %v595
      %v612 = vsel %vm580, %v407, %v596
      %v613 = vsel %vm581, %v411, %v597
      %v614 = vsel %vm582, %v413, %v598
      %v615 = vsel %vm583, %v415, %v599
      %v616 = vsel %vm584, %v417, %v600
      %v617 = vsel %vm585, %v421, %v601
      %v618 = vsel %vm586, %v423, %v602
      %v619 = vsel %vm587, %v425, %v603
      %v620 = vsel %vm588, %v427, %v604
      %v621 = vpack.c.bf16 %v607, %v605
      %v622 = vpack.c.bf16 %v611, %v609
      %v623 = vpack.c.bf16 %v615, %v613
      %v624 = vpack.c.bf16 %v619, %v617
      %v629 = vunpack.c.l.b16 %v621
      %v630 = vunpack.c.h.b16 %v621
      %v631 = vunpack.c.l.b16 %v622
      %v632 = vunpack.c.h.b16 %v622
      %v633 = vunpack.c.l.b16 %v623
      %v634 = vunpack.c.h.b16 %v623
      %v635 = vunpack.c.l.b16 %v624
      %v636 = vunpack.c.h.b16 %v624
      %v637 = vpack.c.b16 %v629, %v629
      %v638 = vpack.c.b16 %v630, %v630
      %v639 = vpack.c.b16 %v631, %v631
      %v640 = vpack.c.b16 %v632, %v632
      %v641 = vpack.c.b16 %v633, %v633
      %v642 = vpack.c.b16 %v634, %v634
      %v643 = vpack.c.b16 %v635, %v635
      %v644 = vpack.c.b16 %v636, %v636
      %653 = vst [vmem:[%s207] sm:$0xf] %v637
      %654 = vst [vmem:[%s207 + $0x4] sm:$0xf] %v638
      %655 = vst [vmem:[%s207 + $0x8] sm:$0xf] %v639
      %656 = vst [vmem:[%s207 + $0xc] sm:$0xf] %v640
      %657 = vst [vmem:[%s207 + $0x10] sm:$0xf] %v641
      %658 = vst [vmem:[%s207 + $0x14] sm:$0xf] %v642
      %659 = vst [vmem:[%s207 + $0x18] sm:$0xf] %v643
      %660 = vst [vmem:[%s207 + $0x1c] sm:$0xf] %v644
      %v661 = vpack.c.bf16 %v608, %v606
      %v662 = vpack.c.bf16 %v612, %v610
      %v663 = vpack.c.bf16 %v616, %v614
      %v664 = vpack.c.bf16 %v620, %v618
      %v669 = vunpack.c.l.b16 %v661
      %v670 = vunpack.c.h.b16 %v661
      %v671 = vunpack.c.l.b16 %v662
      %v672 = vunpack.c.h.b16 %v662
      %v673 = vunpack.c.l.b16 %v663
      %v674 = vunpack.c.h.b16 %v663
      %v675 = vunpack.c.l.b16 %v664
      %v676 = vunpack.c.h.b16 %v664
      %v677 = vpack.c.b16 %v669, %v669
      %v678 = vpack.c.b16 %v670, %v670
      %v679 = vpack.c.b16 %v671, %v671
      %v680 = vpack.c.b16 %v672, %v672
      %v681 = vpack.c.b16 %v673, %v673
      %v682 = vpack.c.b16 %v674, %v674
      %v683 = vpack.c.b16 %v675, %v675
      %v684 = vpack.c.b16 %v676, %v676
      %693 = vst [vmem:[%s213] sm:$0xf] %v677
      %694 = vst [vmem:[%s213 + $0x4] sm:$0xf] %v678
      %695 = vst [vmem:[%s213 + $0x8] sm:$0xf] %v679
      %696 = vst [vmem:[%s213 + $0xc] sm:$0xf] %v680
      %697 = vst [vmem:[%s213 + $0x10] sm:$0xf] %v681
      %698 = vst [vmem:[%s213 + $0x14] sm:$0xf] %v682
      %699 = vst [vmem:[%s213 + $0x18] sm:$0xf] %v683
      %700 = vst [vmem:[%s213 + $0x1c] sm:$0xf] %v684
      %s701 = smul.u32 8, %s16
      %p702 = scmp.lt.s32.totalorder %s701, 15
      %s703 = scalar_select %p702, %s701, 15
      %s704 = smul.addr %s703, 4
      %s705 = scalar_lea.vmem %s3, %s704
      %s706 = smul.u32 8, %s16
      %p707 = scmp.lt.s32.totalorder %s706, 15
      %s708 = scalar_select %p707, %s706, 15
      %s709 = smul.addr %s708, 4
      %s710 = scalar_lea.vmem %s4, %s709
      // Predicated region
      $region33: #{csp_layer_forward.7} parent=31 // pred_check
        %p711 = pneg %p102
      $region34: #{csp_layer_forward.7} parent=31 // pred_check_branch
        %713 = sbr.rel (%p711) target = $region36
      $region35: #{csp_layer_forward.7} parent=31 // pred_region
        %s714 = smul.u32 8, %s16
      $region36: #{csp_layer_forward.7} parent=31 // pred_fallthru
        _
      // Predicated region
      $region37: #{csp_layer_forward.7} parent=31 // pred_check
        %p715 = pneg %p128
      $region38: #{csp_layer_forward.7} parent=31 // pred_check_branch
        %717 = sbr.rel (%p715) target = $region40
      $region39: #{csp_layer_forward.7} parent=31 // pred_region
        %s718 = smul.u32 8, %s16
      $region40: #{csp_layer_forward.7} parent=31 // pred_fallthru
        _
    $region32: #{csp_layer_forward.7} parent=5 // pred_fallthru
      _
    %p719 = scmp.le.s32.totalorder 2, %s11
    // Predicated region
    $region41: #{csp_layer_forward.7} parent=5 // pred_check
      %p720 = pneg %p719
    $region42: #{csp_layer_forward.7} parent=5 // pred_check_branch
      %722 = sbr.rel (%p720) target = $region44
    $region43: #{csp_layer_forward.7} parent=5 // pred_region
      %s723 = ssub.s32 %s11, 2
      // Predicated region
      $region45: #{csp_layer_forward.7} parent=43 // pred_check
        %p724 = pneg %p108
      $region46: #{csp_layer_forward.7} parent=43 // pred_check_branch
        %726 = sbr.rel (%p724) target = $region48
      $region47: #{csp_layer_forward.7} parent=43 // pred_region
        %s727 = smul.u32 8, %s17
        %p728 = scmp.lt.s32.totalorder %s727, 15
        %s729 = scalar_select %p728, %s727, 15
        %s730 = smul.addr %s729, 4
        %s731 = scalar_lea.vmem %s3, %s730
      $region48: #{csp_layer_forward.7} parent=43 // pred_fallthru
        _
      // Predicated region
      $region49: #{csp_layer_forward.7} parent=43 // pred_check
        %p732 = pneg %p134
      $region50: #{csp_layer_forward.7} parent=43 // pred_check_branch
        %734 = sbr.rel (%p732) target = $region52
      $region51: #{csp_layer_forward.7} parent=43 // pred_region
        %s735 = smul.u32 8, %s17
        %p736 = scmp.lt.s32.totalorder %s735, 15
        %s737 = scalar_select %p736, %s735, 15
        %s738 = smul.addr %s737, 4
        %s739 = scalar_lea.vmem %s4, %s738
      $region52: #{csp_layer_forward.7} parent=43 // pred_fallthru
        _
    $region44: #{csp_layer_forward.7} parent=5 // pred_fallthru
      _
  $region6: #{csp_layer_forward.7} parent=0 // loop_footer
    %s15 = sadd.s32 1, %s11
  $region7: #{csp_layer_forward.7} parent=0 // loop_footer_branch
    %10 = sbr.rel target = $region3
  $region8: #{csp_layer_forward.7} parent=0 // loop_exit
    _

// kernel: csp_layer_forward.6
$region0: #{csp_layer_forward.6}
  #allocation0 [shape = 'u32[]', space=smem, size = 0x4, offset = 0x4, fixed_abs, tag = 'smem constant byte address 0x4 - core index']
  #allocation1 [shape = 'u32[144,128]{1,0:T(1,128)}', space=vmem, size = 0x12000, scoped, tag = 'internal scratch']
  %s0 = inlined_call_operand.vmem [shape: bf16[2,18,9,128], index: 0, kind: input, shape index: {}, may-alias: {0,2,4}]
  %s1 = inlined_call_operand.vmem [shape: bf16[2,18,9,128], index: 1, kind: input, shape index: {}, may-alias: {1,3,5}]
  %s2 = inlined_call_operand.vmem [shape: bf16[2,18,9,128], index: 2, kind: input, shape index: {}, may-alias: {0,2,4}]
  %s3 = inlined_call_operand.vmem [shape: bf16[2,18,9,128], index: 3, kind: input, shape index: {}, may-alias: {1,3,5}]
  %s4 = inlined_call_operand.vmem [shape: bf16[2,18,9,128], index: 4, kind: input, shape index: {}, may-alias: {0,2,4}]
  %s5 = inlined_call_operand.vmem [shape: bf16[2,18,9,128], index: 5, kind: input, shape index: {}, may-alias: {1,3,5}]
  %s6 = inlined_call_operand.vmem [shape: bf16[1152,128], index: 6, kind: input, shape index: {}]
  %s7 = inlined_call_operand.vmem [shape: f32[1,128], index: 7, kind: input, shape index: {}]
  %s8 = inlined_call_operand.vmem [shape: bf16[2,8,8,128], index: 8, kind: output, shape index: {}]
  %s9 = sld [smem:[#allocation0]]
  $region65: #{csp_layer_forward.6} parent=0
    _
  %s11 = ssub.s32 1, %s9
  %s12 = scalar_select 0, %s11, %s9
  loop: start=0, step=1, limit=18
  $region2: #{csp_layer_forward.6} parent=0 // loop_pre_header
    _
  $region3: #{csp_layer_forward.6} parent=0 // loop_header
    %s14 = sphi 0, %s18
    %p15 = scmp.ge.s32.totalorder %s14, 18
    %s21 = sphi 0, %s33
    %s22 = sphi 0, %s29
    %s23 = sphi 0, %s21
    %s24 = sphi 0, %s22
    %s25 = sphi 0, %s23
    %s26 = sphi 0, %s24
    %s40 = sphi 0, %s42
    %s43 = sphi 0, %s40
    %s44 = sphi 0, %s43
    %s60 = sphi 0, %s44
    %s70 = sphi 0, %s72
    %s73 = sphi 0, %s70
    %s74 = sphi 0, %s73
    %s90 = sphi 0, %s74
    %s102 = sphi 0, %s104
    %s105 = sphi 0, %s102
    %s106 = sphi 0, %s105
    %s122 = sphi 0, %s106
    %s134 = sphi 0, %s136
    %s137 = sphi 0, %s134
    %s138 = sphi 0, %s137
    %s154 = sphi 0, %s138
    %s166 = sphi 0, %s168
    %s169 = sphi 0, %s166
    %s170 = sphi 0, %s169
    %s186 = sphi 0, %s170
    %s198 = sphi 0, %s200
    %s201 = sphi 0, %s198
    %s202 = sphi 0, %s201
    %s218 = sphi 0, %s202
    %s222 = sphi 0, %s222
    %s224 = sphi 0, %s222
    %s225 = sphi 0, %s224
    %s239 = sphi 0, %s225
    %s243 = sphi 0, %s243
    %s245 = sphi 0, %s243
    %s246 = sphi 0, %s245
    %s260 = sphi 0, %s246
    %s268 = sphi 0, %s270
    %s271 = sphi 0, %s268
    %s272 = sphi 0, %s271
    %s288 = sphi 0, %s272
  $region4: #{csp_layer_forward.6} parent=0 // loop_header_branch
    %17 = sbr.rel (%p15) target = $region8
  $region5: #{csp_layer_forward.6} parent=0 // loop_body
    %s19 = ssub.s32 %s14, 1
    %s20 = ssub.s32 %s14, 2
    %s27 = sadd.s32 1, %s22
    %p28 = scmp.ge.s32.totalorder %s27, 8
    %s29 = scalar_select %p28, 0, %s27
    %s30 = sadd.s32 1, %s21
    %s31 = scalar_select %p28, %s30, %s21
    %p32 = scmp.ge.s32.totalorder %s31, 2
    %s33 = scalar_select %p32, 0, %s31
    %s34 = smul.u32 %s22, 2
    %s35 = smul.u32 %s29, 2
    %s36 = ssub.s32 %s21, %s33
    %s37 = ssub.s32 %s34, %s35
    %s38 = sor.u32 %s36, %s37
    %p39 = scmp.eq.s32.totalorder %s38, 0
    %s41 = sadd.s32 %s40, 1
    %s42 = scalar_select %p39, %s40, %s41
    %p45 = pneg %p39
    %p46 = scmp.eq.s32.totalorder %s14, 15
    %p47 = por %p45, %p46
    %p48 = scmp.ne.s32.totalorder %s40, %s43
    %p49 = scmp.eq.s32.totalorder %s14, 0
    %p50 = por %p48, %p49
    %p51 = scmp.ne.s32.totalorder %s40, %s43
    %p52 = scmp.eq.s32.totalorder %s19, 15
    %p53 = por %p51, %p52
    %p54 = scmp.ne.s32.totalorder %s43, %s44
    %p55 = scmp.eq.s32.totalorder %s19, 0
    %p56 = por %p54, %p55
    %p57 = scmp.ne.s32.totalorder %s43, %s44
    %p58 = scmp.eq.s32.totalorder %s20, 15
    %p59 = por %p57, %p58
    %p61 = scmp.ne.s32.totalorder %s44, %s60
    %p62 = scmp.eq.s32.totalorder %s20, 0
    %p63 = por %p61, %p62
    %s64 = smul.u32 %s22, 2
    %s65 = smul.u32 %s29, 2
    %s66 = ssub.s32 %s21, %s33
    %s67 = ssub.s32 %s64, %s65
    %s68 = sor.u32 %s66, %s67
    %p69 = scmp.eq.s32.totalorder %s68, 0
    %s71 = sadd.s32 %s70, 1
    %s72 = scalar_select %p69, %s70, %s71
    %p75 = pneg %p69
    %p76 = scmp.eq.s32.totalorder %s14, 15
    %p77 = por %p75, %p76
    %p78 = scmp.ne.s32.totalorder %s70, %s73
    %p79 = scmp.eq.s32.totalorder %s14, 0
    %p80 = por %p78, %p79
    %p81 = scmp.ne.s32.totalorder %s70, %s73
    %p82 = scmp.eq.s32.totalorder %s19, 15
    %p83 = por %p81, %p82
    %p84 = scmp.ne.s32.totalorder %s73, %s74
    %p85 = scmp.eq.s32.totalorder %s19, 0
    %p86 = por %p84, %p85
    %p87 = scmp.ne.s32.totalorder %s73, %s74
    %p88 = scmp.eq.s32.totalorder %s20, 15
    %p89 = por %p87, %p88
    %p91 = scmp.ne.s32.totalorder %s74, %s90
    %p92 = scmp.eq.s32.totalorder %s20, 0
    %p93 = por %p91, %p92
    %s94 = smul.u32 %s22, 2
    %s95 = sadd.s32 %s94, 1
    %s96 = smul.u32 %s29, 2
    %s97 = sadd.s32 %s96, 1
    %s98 = ssub.s32 %s21, %s33
    %s99 = ssub.s32 %s95, %s97
    %s100 = sor.u32 %s98, %s99
    %p101 = scmp.eq.s32.totalorder %s100, 0
    %s103 = sadd.s32 %s102, 1
    %s104 = scalar_select %p101, %s102, %s103
    %p107 = pneg %p101
    %p108 = scmp.eq.s32.totalorder %s14, 15
    %p109 = por %p107, %p108
    %p110 = scmp.ne.s32.totalorder %s102, %s105
    %p111 = scmp.eq.s32.totalorder %s14, 0
    %p112 = por %p110, %p111
    %p113 = scmp.ne.s32.totalorder %s102, %s105
    %p114 = scmp.eq.s32.totalorder %s19, 15
    %p115 = por %p113, %p114
    %p116 = scmp.ne.s32.totalorder %s105, %s106
    %p117 = scmp.eq.s32.totalorder %s19, 0
    %p118 = por %p116, %p117
    %p119 = scmp.ne.s32.totalorder %s105, %s106
    %p120 = scmp.eq.s32.totalorder %s20, 15
    %p121 = por %p119, %p120
    %p123 = scmp.ne.s32.totalorder %s106, %s122
    %p124 = scmp.eq.s32.totalorder %s20, 0
    %p125 = por %p123, %p124
    %s126 = smul.u32 %s22, 2
    %s127 = sadd.s32 %s126, 1
    %s128 = smul.u32 %s29, 2
    %s129 = sadd.s32 %s128, 1
    %s130 = ssub.s32 %s21, %s33
    %s131 = ssub.s32 %s127, %s129
    %s132 = sor.u32 %s130, %s131
    %p133 = scmp.eq.s32.totalorder %s132, 0
    %s135 = sadd.s32 %s134, 1
    %s136 = scalar_select %p133, %s134, %s135
    %p139 = pneg %p133
    %p140 = scmp.eq.s32.totalorder %s14, 15
    %p141 = por %p139, %p140
    %p142 = scmp.ne.s32.totalorder %s134, %s137
    %p143 = scmp.eq.s32.totalorder %s14, 0
    %p144 = por %p142, %p143
    %p145 = scmp.ne.s32.totalorder %s134, %s137
    %p146 = scmp.eq.s32.totalorder %s19, 15
    %p147 = por %p145, %p146
    %p148 = scmp.ne.s32.totalorder %s137, %s138
    %p149 = scmp.eq.s32.totalorder %s19, 0
    %p150 = por %p148, %p149
    %p151 = scmp.ne.s32.totalorder %s137, %s138
    %p152 = scmp.eq.s32.totalorder %s20, 15
    %p153 = por %p151, %p152
    %p155 = scmp.ne.s32.totalorder %s138, %s154
    %p156 = scmp.eq.s32.totalorder %s20, 0
    %p157 = por %p155, %p156
    %s158 = smul.u32 %s22, 2
    %s159 = sadd.s32 %s158, 2
    %s160 = smul.u32 %s29, 2
    %s161 = sadd.s32 %s160, 2
    %s162 = ssub.s32 %s21, %s33
    %s163 = ssub.s32 %s159, %s161
    %s164 = sor.u32 %s162, %s163
    %p165 = scmp.eq.s32.totalorder %s164, 0
    %s167 = sadd.s32 %s166, 1
    %s168 = scalar_select %p165, %s166, %s167
    %p171 = pneg %p165
    %p172 = scmp.eq.s32.totalorder %s14, 15
    %p173 = por %p171, %p172
    %p174 = scmp.ne.s32.totalorder %s166, %s169
    %p175 = scmp.eq.s32.totalorder %s14, 0
    %p176 = por %p174, %p175
    %p177 = scmp.ne.s32.totalorder %s166, %s169
    %p178 = scmp.eq.s32.totalorder %s19, 15
    %p179 = por %p177, %p178
    %p180 = scmp.ne.s32.totalorder %s169, %s170
    %p181 = scmp.eq.s32.totalorder %s19, 0
    %p182 = por %p180, %p181
    %p183 = scmp.ne.s32.totalorder %s169, %s170
    %p184 = scmp.eq.s32.totalorder %s20, 15
    %p185 = por %p183, %p184
    %p187 = scmp.ne.s32.totalorder %s170, %s186
    %p188 = scmp.eq.s32.totalorder %s20, 0
    %p189 = por %p187, %p188
    %s190 = smul.u32 %s22, 2
    %s191 = sadd.s32 %s190, 2
    %s192 = smul.u32 %s29, 2
    %s193 = sadd.s32 %s192, 2
    %s194 = ssub.s32 %s21, %s33
    %s195 = ssub.s32 %s191, %s193
    %s196 = sor.u32 %s194, %s195
    %p197 = scmp.eq.s32.totalorder %s196, 0
    %s199 = sadd.s32 %s198, 1
    %s200 = scalar_select %p197, %s198, %s199
    %p203 = pneg %p197
    %p204 = scmp.eq.s32.totalorder %s14, 15
    %p205 = por %p203, %p204
    %p206 = scmp.ne.s32.totalorder %s198, %s201
    %p207 = scmp.eq.s32.totalorder %s14, 0
    %p208 = por %p206, %p207
    %p209 = scmp.ne.s32.totalorder %s198, %s201
    %p210 = scmp.eq.s32.totalorder %s19, 15
    %p211 = por %p209, %p210
    %p212 = scmp.ne.s32.totalorder %s201, %s202
    %p213 = scmp.eq.s32.totalorder %s19, 0
    %p214 = por %p212, %p213
    %p215 = scmp.ne.s32.totalorder %s201, %s202
    %p216 = scmp.eq.s32.totalorder %s20, 15
    %p217 = por %p215, %p216
    %p219 = scmp.ne.s32.totalorder %s202, %s218
    %p220 = scmp.eq.s32.totalorder %s20, 0
    %p221 = por %p219, %p220
    %s223 = sadd.s32 %s222, 1
    %p226 = scmp.eq.s32.totalorder %s14, 15
    %p227 = scmp.ne.s32.totalorder %s222, %s224
    %p228 = scmp.eq.s32.totalorder %s14, 0
    %p229 = por %p227, %p228
    %p230 = scmp.ne.s32.totalorder %s222, %s224
    %p231 = scmp.eq.s32.totalorder %s19, 15
    %p232 = por %p230, %p231
    %p233 = scmp.ne.s32.totalorder %s224, %s225
    %p234 = scmp.eq.s32.totalorder %s19, 0
    %p235 = por %p233, %p234
    %p236 = scmp.ne.s32.totalorder %s224, %s225
    %p237 = scmp.eq.s32.totalorder %s20, 15
    %p238 = por %p236, %p237
    %p240 = scmp.ne.s32.totalorder %s225, %s239
    %p241 = scmp.eq.s32.totalorder %s20, 0
    %p242 = por %p240, %p241
    %s244 = sadd.s32 %s243, 1
    %p247 = scmp.eq.s32.totalorder %s14, 15
    %p248 = scmp.ne.s32.totalorder %s243, %s245
    %p249 = scmp.eq.s32.totalorder %s14, 0
    %p250 = por %p248, %p249
    %p251 = scmp.ne.s32.totalorder %s243, %s245
    %p252 = scmp.eq.s32.totalorder %s19, 15
    %p253 = por %p251, %p252
    %p254 = scmp.ne.s32.totalorder %s245, %s246
    %p255 = scmp.eq.s32.totalorder %s19, 0
    %p256 = por %p254, %p255
    %p257 = scmp.ne.s32.totalorder %s245, %s246
    %p258 = scmp.eq.s32.totalorder %s20, 15
    %p259 = por %p257, %p258
    %p261 = scmp.ne.s32.totalorder %s246, %s260
    %p262 = scmp.eq.s32.totalorder %s20, 0
    %p263 = por %p261, %p262
    %s264 = ssub.s32 %s21, %s33
    %s265 = ssub.s32 %s22, %s29
    %s266 = sor.u32 %s264, %s265
    %p267 = scmp.eq.s32.totalorder %s266, 0
    %s269 = sadd.s32 %s268, 1
    %s270 = scalar_select %p267, %s268, %s269
    %p273 = pneg %p267
    %p274 = scmp.eq.s32.totalorder %s14, 15
    %p275 = por %p273, %p274
    %p276 = scmp.ne.s32.totalorder %s268, %s271
    %p277 = scmp.eq.s32.totalorder %s14, 0
    %p278 = por %p276, %p277
    %p279 = scmp.ne.s32.totalorder %s268, %s271
    %p280 = scmp.eq.s32.totalorder %s19, 15
    %p281 = por %p279, %p280
    %p282 = scmp.ne.s32.totalorder %s271, %s272
    %p283 = scmp.eq.s32.totalorder %s19, 0
    %p284 = por %p282, %p283
    %p285 = scmp.ne.s32.totalorder %s271, %s272
    %p286 = scmp.eq.s32.totalorder %s20, 15
    %p287 = por %p285, %p286
    %p289 = scmp.ne.s32.totalorder %s272, %s288
    %p290 = scmp.eq.s32.totalorder %s20, 0
    %p291 = por %p289, %p290
    %p292 = scmp.le.s32.totalorder 1, %s14
    %p293 = scmp.lt.s32.totalorder %s14, 17
    %p294 = pnand %p292, %p293
    %p295 = pneg %p294
    // Predicated region
    $region9: #{csp_layer_forward.6} parent=5 // pred_check
      _
    $region10: #{csp_layer_forward.6} parent=5 // pred_check_branch
      %297 = sbr.rel (%p294) target = $region12
    $region11: #{csp_layer_forward.6} parent=5 // pred_region
      %s298 = ssub.s32 %s14, 1
      // Predicated region
      $region13: #{csp_layer_forward.6} parent=11 // pred_check
        %p299 = pneg %p235
      $region14: #{csp_layer_forward.6} parent=11 // pred_check_branch
        %301 = sbr.rel (%p299) target = $region16
      $region15: #{csp_layer_forward.6} parent=11 // pred_region
        _
      $region16: #{csp_layer_forward.6} parent=11 // pred_fallthru
        _
      // Predicated region
      $region17: #{csp_layer_forward.6} parent=11 // pred_check
        %p302 = pneg %p256
      $region18: #{csp_layer_forward.6} parent=11 // pred_check_branch
        %304 = sbr.rel (%p302) target = $region20
      $region19: #{csp_layer_forward.6} parent=11 // pred_region
        _
      $region20: #{csp_layer_forward.6} parent=11 // pred_fallthru
        _
    $region12: #{csp_layer_forward.6} parent=5 // pred_fallthru
      _
    %p305 = scmp.lt.s32.totalorder %s14, 16
    // Predicated region
    $region21: #{csp_layer_forward.6} parent=5 // pred_check
      %p306 = pneg %p305
    $region22: #{csp_layer_forward.6} parent=5 // pred_check_branch
      %308 = sbr.rel (%p306) target = $region24
    $region23: #{csp_layer_forward.6} parent=5 // pred_region
      // Predicated region
      $region25: #{csp_layer_forward.6} parent=23 // pred_check
        %p309 = pneg %p50
      $region26: #{csp_layer_forward.6} parent=23 // pred_check_branch
        %311 = sbr.rel (%p309) target = $region28
      $region27: #{csp_layer_forward.6} parent=23 // pred_region
        %s312 = smul.u32 %s22, 2
        %p313 = scmp.lt.s32.totalorder %s21, 1
        %s314 = scalar_select %p313, %s21, 1
        %p315 = scmp.lt.s32.totalorder %s312, 17
        %s316 = scalar_select %p315, %s312, 17
        %s317 = smul.addr %s316, 2
        %s318 = smul.addr %s314, 36
        %s319 = sadd.s32 %s317, %s318
        %s320 = smul.addr %s319, 4
        %s321 = scalar_lea.vmem %s0, %s320
        %s322 = smul.u32 %s22, 2
      $region28: #{csp_layer_forward.6} parent=23 // pred_fallthru
        _
      // Predicated region
      $region29: #{csp_layer_forward.6} parent=23 // pred_check
        %p323 = pneg %p80
      $region30: #{csp_layer_forward.6} parent=23 // pred_check_branch
        %325 = sbr.rel (%p323) target = $region32
      $region31: #{csp_layer_forward.6} parent=23 // pred_region
        %s326 = smul.u32 %s22, 2
        %p327 = scmp.lt.s32.totalorder %s21, 1
        %s328 = scalar_select %p327, %s21, 1
        %p329 = scmp.lt.s32.totalorder %s326, 17
        %s330 = scalar_select %p329, %s326, 17
        %s331 = smul.addr %s330, 2
        %s332 = smul.addr %s328, 36
        %s333 = sadd.s32 %s331, %s332
        %s334 = smul.addr %s333, 4
        %s335 = scalar_lea.vmem %s1, %s334
        %s336 = smul.u32 %s22, 2
      $region32: #{csp_layer_forward.6} parent=23 // pred_fallthru
        _
      // Predicated region
      $region33: #{csp_layer_forward.6} parent=23 // pred_check
        %p337 = pneg %p112
      $region34: #{csp_layer_forward.6} parent=23 // pred_check_branch
        %339 = sbr.rel (%p337) target = $region36
      $region35: #{csp_layer_forward.6} parent=23 // pred_region
        %s340 = smul.u32 %s22, 2
        %s341 = sadd.s32 %s340, 1
        %p342 = scmp.lt.s32.totalorder %s21, 1
        %s343 = scalar_select %p342, %s21, 1
        %p344 = scmp.lt.s32.totalorder %s341, 17
        %s345 = scalar_select %p344, %s341, 17
        %s346 = smul.addr %s345, 2
        %s347 = smul.addr %s343, 36
        %s348 = sadd.s32 %s346, %s347
        %s349 = smul.addr %s348, 4
        %s350 = scalar_lea.vmem %s2, %s349
        %s351 = smul.u32 %s22, 2
        %s352 = sadd.s32 %s351, 1
      $region36: #{csp_layer_forward.6} parent=23 // pred_fallthru
        _
      // Predicated region
      $region37: #{csp_layer_forward.6} parent=23 // pred_check
        %p353 = pneg %p144
      $region38: #{csp_layer_forward.6} parent=23 // pred_check_branch
        %355 = sbr.rel (%p353) target = $region40
      $region39: #{csp_layer_forward.6} parent=23 // pred_region
        %s356 = smul.u32 %s22, 2
        %s357 = sadd.s32 %s356, 1
        %p358 = scmp.lt.s32.totalorder %s21, 1
        %s359 = scalar_select %p358, %s21, 1
        %p360 = scmp.lt.s32.totalorder %s357, 17
        %s361 = scalar_select %p360, %s357, 17
        %s362 = smul.addr %s361, 2
        %s363 = smul.addr %s359, 36
        %s364 = sadd.s32 %s362, %s363
        %s365 = smul.addr %s364, 4
        %s366 = scalar_lea.vmem %s3, %s365
        %s367 = smul.u32 %s22, 2
        %s368 = sadd.s32 %s367, 1
      $region40: #{csp_layer_forward.6} parent=23 // pred_fallthru
        _
      // Predicated region
      $region41: #{csp_layer_forward.6} parent=23 // pred_check
        %p369 = pneg %p176
      $region42: #{csp_layer_forward.6} parent=23 // pred_check_branch
        %371 = sbr.rel (%p369) target = $region44
      $region43: #{csp_layer_forward.6} parent=23 // pred_region
        %s372 = smul.u32 %s22, 2
        %s373 = sadd.s32 %s372, 2
        %p374 = scmp.lt.s32.totalorder %s21, 1
        %s375 = scalar_select %p374, %s21, 1
        %p376 = scmp.lt.s32.totalorder %s373, 17
        %s377 = scalar_select %p376, %s373, 17
        %s378 = smul.addr %s377, 2
        %s379 = smul.addr %s375, 36
        %s380 = sadd.s32 %s378, %s379
        %s381 = smul.addr %s380, 4
        %s382 = scalar_lea.vmem %s4, %s381
        %s383 = smul.u32 %s22, 2
        %s384 = sadd.s32 %s383, 2
      $region44: #{csp_layer_forward.6} parent=23 // pred_fallthru
        _
      // Predicated region
      $region45: #{csp_layer_forward.6} parent=23 // pred_check
        %p385 = pneg %p208
      $region46: #{csp_layer_forward.6} parent=23 // pred_check_branch
        %387 = sbr.rel (%p385) target = $region48
      $region47: #{csp_layer_forward.6} parent=23 // pred_region
        %s388 = smul.u32 %s22, 2
        %s389 = sadd.s32 %s388, 2
        %p390 = scmp.lt.s32.totalorder %s21, 1
        %s391 = scalar_select %p390, %s21, 1
        %p392 = scmp.lt.s32.totalorder %s389, 17
        %s393 = scalar_select %p392, %s389, 17
        %s394 = smul.addr %s393, 2
        %s395 = smul.addr %s391, 36
        %s396 = sadd.s32 %s394, %s395
        %s397 = smul.addr %s396, 4
        %s398 = scalar_lea.vmem %s5, %s397
        %s399 = smul.u32 %s22, 2
        %s400 = sadd.s32 %s399, 2
      $region48: #{csp_layer_forward.6} parent=23 // pred_fallthru
        _
    $region24: #{csp_layer_forward.6} parent=5 // pred_fallthru
      _
    %p401 = scmp.le.s32.totalorder 1, %s14
    %p402 = scmp.lt.s32.totalorder %s14, 17
    %p403 = pnand %p401, %p402
    %p404 = pneg %p403
    // Predicated region
    $region49: #{csp_layer_forward.6} parent=5 // pred_check
      _
    $region50: #{csp_layer_forward.6} parent=5 // pred_check_branch
      %406 = sbr.rel (%p403) target = $region52
    $region51: #{csp_layer_forward.6} parent=5 // pred_region
      %s407 = ssub.s32 %s14, 1
      %s408 = smul.u32 %s24, 2
      %p409 = scmp.lt.s32.totalorder %s23, 1
      %s410 = scalar_select %p409, %s23, 1
      %p411 = scmp.lt.s32.totalorder %s408, 17
      %s412 = scalar_select %p411, %s408, 17
      %s413 = smul.addr %s412, 2
      %s414 = smul.addr %s410, 36
      %s415 = sadd.s32 %s413, %s414
      %s416 = smul.addr %s415, 4
      %s417 = scalar_lea.vmem %s0, %s416
      %p418 = pneg %p56
      %p419 = pneg %p53
      %s420 = smul.u32 %s24, 2
      %p421 = scmp.lt.s32.totalorder %s23, 1
      %s422 = scalar_select %p421, %s23, 1
      %p423 = scmp.lt.s32.totalorder %s420, 17
      %s424 = scalar_select %p423, %s420, 17
      %s425 = smul.addr %s424, 2
      %s426 = smul.addr %s422, 36
      %s427 = sadd.s32 %s425, %s426
      %s428 = smul.addr %s427, 4
      %s429 = scalar_lea.vmem %s1, %s428
      %p430 = pneg %p86
      %p431 = pneg %p83
      %s432 = smul.u32 %s24, 2
      %s433 = sadd.s32 %s432, 1
      %p434 = scmp.lt.s32.totalorder %s23, 1
      %s435 = scalar_select %p434, %s23, 1
      %p436 = scmp.lt.s32.totalorder %s433, 17
      %s437 = scalar_select %p436, %s433, 17
      %s438 = smul.addr %s437, 2
      %s439 = smul.addr %s435, 36
      %s440 = sadd.s32 %s438, %s439
      %s441 = smul.addr %s440, 4
      %s442 = scalar_lea.vmem %s2, %s441
      %p443 = pneg %p118
      %p444 = pneg %p115
      %s445 = smul.u32 %s24, 2
      %s446 = sadd.s32 %s445, 1
      %p447 = scmp.lt.s32.totalorder %s23, 1
      %s448 = scalar_select %p447, %s23, 1
      %p449 = scmp.lt.s32.totalorder %s446, 17
      %s450 = scalar_select %p449, %s446, 17
      %s451 = smul.addr %s450, 2
      %s452 = smul.addr %s448, 36
      %s453 = sadd.s32 %s451, %s452
      %s454 = smul.addr %s453, 4
      %s455 = scalar_lea.vmem %s3, %s454
      %p456 = pneg %p150
      %p457 = pneg %p147
      %s458 = smul.u32 %s24, 2
      %s459 = sadd.s32 %s458, 2
      %p460 = scmp.lt.s32.totalorder %s23, 1
      %s461 = scalar_select %p460, %s23, 1
      %p462 = scmp.lt.s32.totalorder %s459, 17
      %s463 = scalar_select %p462, %s459, 17
      %s464 = smul.addr %s463, 2
      %s465 = smul.addr %s461, 36
      %s466 = sadd.s32 %s464, %s465
      %s467 = smul.addr %s466, 4
      %s468 = scalar_lea.vmem %s4, %s467
      %p469 = pneg %p182
      %p470 = pneg %p179
      %s471 = smul.u32 %s24, 2
      %s472 = sadd.s32 %s471, 2
      %p473 = scmp.lt.s32.totalorder %s23, 1
      %s474 = scalar_select %p473, %s23, 1
      %p475 = scmp.lt.s32.totalorder %s472, 17
      %s476 = scalar_select %p475, %s472, 17
      %s477 = smul.addr %s476, 2
      %s478 = smul.addr %s474, 36
      %s479 = sadd.s32 %s477, %s478
      %s480 = smul.addr %s479, 4
      %s481 = scalar_lea.vmem %s5, %s480
      %p482 = pneg %p214
      %p483 = pneg %p211
      %p484 = pneg %p235
      %p485 = pneg %p232
      %p486 = pneg %p256
      %p487 = pneg %p253
      %p488 = pneg %p284
      %p489 = pneg %p281
      %p490 = scmp.lt.s32.totalorder %s23, 1
      %s491 = scalar_select %p490, %s23, 1
      %p492 = scmp.lt.s32.totalorder %s24, 7
      %s493 = scalar_select %p492, %s24, 7
      %s494 = smul.addr %s491, 8
      %s495 = sadd.s32 %s493, %s494
      %s496 = smul.addr %s495, 4
      %s497 = scalar_lea.vmem %s8, %s496
      %s498 = smul.u32 %s24, 2
      %p499 = scmp.lt.s32.totalorder %s23, 1
      %s500 = scalar_select %p499, %s23, 1
      %p501 = scmp.lt.s32.totalorder %s498, 17
      %s502 = scalar_select %p501, %s498, 17
      %s503 = smul.addr %s502, 2
      %s504 = smul.addr %s500, 36
      %s505 = sadd.s32 %s503, %s504
      %s506 = smul.addr %s505, 4
      %s507 = scalar_lea.vmem %s0, %s506
      %s508 = smul.u32 %s24, 2
      %s509 = smul.u32 %s24, 2
      %p510 = scmp.lt.s32.totalorder %s23, 1
      %s511 = scalar_select %p510, %s23, 1
      %p512 = scmp.lt.s32.totalorder %s509, 17
      %s513 = scalar_select %p512, %s509, 17
      %s514 = smul.addr %s513, 2
      %s515 = smul.addr %s511, 36
      %s516 = sadd.s32 %s514, %s515
      %s517 = smul.addr %s516, 4
      %s518 = scalar_lea.vmem %s1, %s517
      %s519 = smul.u32 %s24, 2
      %s520 = smul.u32 %s24, 2
      %s521 = sadd.s32 %s520, 1
      %p522 = scmp.lt.s32.totalorder %s23, 1
      %s523 = scalar_select %p522, %s23, 1
      %p524 = scmp.lt.s32.totalorder %s521, 17
      %s525 = scalar_select %p524, %s521, 17
      %s526 = smul.addr %s525, 2
      %s527 = smul.addr %s523, 36
      %s528 = sadd.s32 %s526, %s527
      %s529 = smul.addr %s528, 4
      %s530 = scalar_lea.vmem %s2, %s529
      %s531 = smul.u32 %s24, 2
      %s532 = sadd.s32 %s531, 1
      %s533 = smul.u32 %s24, 2
      %s534 = sadd.s32 %s533, 1
      %p535 = scmp.lt.s32.totalorder %s23, 1
      %s536 = scalar_select %p535, %s23, 1
      %p537 = scmp.lt.s32.totalorder %s534, 17
      %s538 = scalar_select %p537, %s534, 17
      %s539 = smul.addr %s538, 2
      %s540 = smul.addr %s536, 36
      %s541 = sadd.s32 %s539, %s540
      %s542 = smul.addr %s541, 4
      %s543 = scalar_lea.vmem %s3, %s542
      %s544 = smul.u32 %s24, 2
      %s545 = sadd.s32 %s544, 1
      %s546 = smul.u32 %s24, 2
      %s547 = sadd.s32 %s546, 2
      %p548 = scmp.lt.s32.totalorder %s23, 1
      %s549 = scalar_select %p548, %s23, 1
      %p550 = scmp.lt.s32.totalorder %s547, 17
      %s551 = scalar_select %p550, %s547, 17
      %s552 = smul.addr %s551, 2
      %s553 = smul.addr %s549, 36
      %s554 = sadd.s32 %s552, %s553
      %s555 = smul.addr %s554, 4
      %s556 = scalar_lea.vmem %s4, %s555
      %s557 = smul.u32 %s24, 2
      %s558 = sadd.s32 %s557, 2
      %s559 = smul.u32 %s24, 2
      %s560 = sadd.s32 %s559, 2
      %p561 = scmp.lt.s32.totalorder %s23, 1
      %s562 = scalar_select %p561, %s23, 1
      %p563 = scmp.lt.s32.totalorder %s560, 17
      %s564 = scalar_select %p563, %s560, 17
      %s565 = smul.addr %s564, 2
      %s566 = smul.addr %s562, 36
      %s567 = sadd.s32 %s565, %s566
      %s568 = smul.addr %s567, 4
      %s569 = scalar_lea.vmem %s5, %s568
      %s570 = smul.u32 %s24, 2
      %s571 = sadd.s32 %s570, 2
      %p572 = scmp.lt.s32.totalorder %s23, 1
      %s573 = scalar_select %p572, %s23, 1
      %p574 = scmp.lt.s32.totalorder %s24, 7
      %s575 = scalar_select %p574, %s24, 7
      %s576 = smul.addr %s573, 8
      %s577 = sadd.s32 %s575, %s576
      %s578 = smul.addr %s577, 4
      %s579 = scalar_lea.vmem %s8, %s578
      %v581 = vld [vmem:[%s507] sm:$0xf]
      %v582 = vld [vmem:[%s6] sm:$0xf]
      %v583 = vld [vmem:[%s6 + $0x4] sm:$0xf]
      %v584 = vld [vmem:[%s6 + $0x8] sm:$0xf]
      %v585 = vld [vmem:[%s6 + $0xc] sm:$0xf]
      %v586 = vld [vmem:[%s6 + $0x10] sm:$0xf]
      %v587 = vld [vmem:[%s6 + $0x14] sm:$0xf]
      %v588 = vld [vmem:[%s6 + $0x18] sm:$0xf]
      %v589 = vld [vmem:[%s6 + $0x1c] sm:$0xf]
      %v590 = vld [vmem:[%s6 + $0x20] sm:$0xf]
      %v591 = vld [vmem:[%s6 + $0x24] sm:$0xf]
      %v592 = vld [vmem:[%s6 + $0x28] sm:$0xf]
      %v593 = vld [vmem:[%s6 + $0x2c] sm:$0xf]
      %v594 = vld [vmem:[%s6 + $0x30] sm:$0xf]
      %v595 = vld [vmem:[%s6 + $0x34] sm:$0xf]
      %v596 = vld [vmem:[%s6 + $0x38] sm:$0xf]
      %v597 = vld [vmem:[%s6 + $0x3c] sm:$0xf]
      %v598 = vld [vmem:[%s518] sm:$0xf]
      %v599 = vld [vmem:[%s6 + $0x40] sm:$0xf]
      %v600 = vld [vmem:[%s6 + $0x44] sm:$0xf]
      %v601 = vld [vmem:[%s6 + $0x48] sm:$0xf]
      %v602 = vld [vmem:[%s6 + $0x4c] sm:$0xf]
      %v603 = vld [vmem:[%s6 + $0x50] sm:$0xf]
      %v604 = vld [vmem:[%s6 + $0x54] sm:$0xf]
      %v605 = vld [vmem:[%s6 + $0x58] sm:$0xf]
      %v606 = vld [vmem:[%s6 + $0x5c] sm:$0xf]
      %v607 = vld [vmem:[%s6 + $0x60] sm:$0xf]
      %v608 = vld [vmem:[%s6 + $0x64] sm:$0xf]
      %v609 = vld [vmem:[%s6 + $0x68] sm:$0xf]
      %v610 = vld [vmem:[%s6 + $0x6c] sm:$0xf]
      %v611 = vld [vmem:[%s6 + $0x70] sm:$0xf]
      %v612 = vld [vmem:[%s6 + $0x74] sm:$0xf]
      %v613 = vld [vmem:[%s6 + $0x78] sm:$0xf]
      %v614 = vld [vmem:[%s6 + $0x7c] sm:$0xf]
      %v631 = vunpack.c.l.b16 %v599
      %v632 = vunpack.c.l.b16 %v600
      %v633 = vunpack.c.l.b16 %v601
      %v634 = vunpack.c.l.b16 %v602
      %v635 = vunpack.c.l.b16 %v603
      %v636 = vunpack.c.l.b16 %v604
      %v637 = vunpack.c.l.b16 %v605
      %v638 = vunpack.c.l.b16 %v606
      %v639 = vunpack.c.l.b16 %v607
      %v640 = vunpack.c.l.b16 %v608
      %v641 = vunpack.c.l.b16 %v609
      %v642 = vunpack.c.l.b16 %v610
      %v643 = vunpack.c.l.b16 %v611
      %v644 = vunpack.c.l.b16 %v612
      %v645 = vunpack.c.l.b16 %v613
      %v646 = vunpack.c.l.b16 %v614
      %v647 = vpack.c.b16 %v632, %v631
      %v648 = vpack.c.b16 %v634, %v633
      %v649 = vpack.c.b16 %v636, %v635
      %v650 = vpack.c.b16 %v638, %v637
      %v651 = vpack.c.b16 %v640, %v639
      %v652 = vpack.c.b16 %v642, %v641
      %v653 = vpack.c.b16 %v644, %v643
      %v654 = vpack.c.b16 %v646, %v645
      %663 = vmatprep.subr.bf16.mxu0 0
      %664 = vmatpush1.bf16.msra.mxu0 %v647
      %665 = vmatprep.subr.bf16.mxu0 0
      %666 = vmatpush1.bf16.msra.mxu0 %v648
      %667 = vmatprep.subr.bf16.mxu0 0
      %668 = vmatpush1.bf16.msra.mxu0 %v649
      %669 = vmatprep.subr.bf16.mxu0 0
      %670 = vmatpush1.bf16.msra.mxu0 %v650
      %671 = vmatprep.subr.bf16.mxu0 0
      %672 = vmatpush1.bf16.msra.mxu0 %v651
      %673 = vmatprep.subr.bf16.mxu0 0
      %674 = vmatpush1.bf16.msra.mxu0 %v652
      %675 = vmatprep.subr.bf16.mxu0 0
      %676 = vmatpush1.bf16.msra.mxu0 %v653
      %677 = vmatprep.subr.bf16.mxu0 0
      %678 = vmatpush1.bf16.msra.mxu0 %v654
      %679 = vmatprep.subr.bf16.mxu0 0
      %680 = vmatpush1.bf16.msra.mxu0 0
      %681 = vmatprep.subr.bf16.mxu0 0
      %682 = vmatpush1.bf16.msra.mxu0 0
      %683 = vmatprep.subr.bf16.mxu0 0
      %684 = vmatpush1.bf16.msra.mxu0 0
      %685 = vmatprep.subr.bf16.mxu0 0
      %686 = vmatpush1.bf16.msra.mxu0 0
      %687 = vmatprep.subr.bf16.mxu0 0
      %688 = vmatpush1.bf16.msra.mxu0 0
      %689 = vmatprep.subr.bf16.mxu0 0
      %690 = vmatpush1.bf16.msra.mxu0 0
      %691 = vmatprep.subr.bf16.mxu0 0
      %692 = vmatpush1.bf16.msra.mxu0 0
      %693 = vmatprep.subr.bf16.mxu0 0
      %694 = vmatpush1.bf16.msra.mxu0 0
      %695 = vmatprep.mubr.bf16.mxu0 0
      %696 = vmatmul.mubr.bf16.gmra.mrb[0].mxu0 %v598
      %v697 = vpop.f32.mrb[0].mxu0
      %v698 = vadd.f32 0.0, %v697
      %v699 = vpop.f32.mrb[0].mxu0
      %v700 = vpop.f32.mrb[0].mxu0
      %v701 = vpop.f32.mrb[0].mxu0
      %702 = vdwg.mxu0
      %v719 = vunpack.c.l.b16 %v582
      %v720 = vunpack.c.l.b16 %v583
      %v721 = vunpack.c.l.b16 %v584
      %v722 = vunpack.c.l.b16 %v585
      %v723 = vunpack.c.l.b16 %v586
      %v724 = vunpack.c.l.b16 %v587
      %v725 = vunpack.c.l.b16 %v588
      %v726 = vunpack.c.l.b16 %v589
      %v727 = vunpack.c.l.b16 %v590
      %v728 = vunpack.c.l.b16 %v591
      %v729 = vunpack.c.l.b16 %v592
      %v730 = vunpack.c.l.b16 %v593
      %v731 = vunpack.c.l.b16 %v594
      %v732 = vunpack.c.l.b16 %v595
      %v733 = vunpack.c.l.b16 %v596
      %v734 = vunpack.c.l.b16 %v597
      %v735 = vpack.c.b16 %v720, %v719
      %v736 = vpack.c.b16 %v722, %v721
      %v737 = vpack.c.b16 %v724, %v723
      %v738 = vpack.c.b16 %v726, %v725
      %v739 = vpack.c.b16 %v728, %v727
      %v740 = vpack.c.b16 %v730, %v729
      %v741 = vpack.c.b16 %v732, %v731
      %v742 = vpack.c.b16 %v734, %v733
      %751 = vmatprep.subr.bf16.mxu0 0
      %752 = vmatpush1.bf16.msra.mxu0 %v735
      %753 = vmatprep.subr.bf16.mxu0 0
      %754 = vmatpush1.bf16.msra.mxu0 %v736
      %755 = vmatprep.subr.bf16.mxu0 0
      %756 = vmatpush1.bf16.msra.mxu0 %v737
      %757 = vmatprep.subr.bf16.mxu0 0
      %758 = vmatpush1.bf16.msra.mxu0 %v738
      %759 = vmatprep.subr.bf16.mxu0 0
      %760 = vmatpush1.bf16.msra.mxu0 %v739
      %761 = vmatprep.subr.bf16.mxu0 0
      %762 = vmatpush1.bf16.msra.mxu0 %v740
      %763 = vmatprep.subr.bf16.mxu0 0
      %764 = vmatpush1.bf16.msra.mxu0 %v741
      %765 = vmatprep.subr.bf16.mxu0 0
      %766 = vmatpush1.bf16.msra.mxu0 %v742
      %767 = vmatprep.subr.bf16.mxu0 0
      %768 = vmatpush1.bf16.msra.mxu0 0
      %769 = vmatprep.subr.bf16.mxu0 0
      %770 = vmatpush1.bf16.msra.mxu0 0
      %771 = vmatprep.subr.bf16.mxu0 0
      %772 = vmatpush1.bf16.msra.mxu0 0
      %773 = vmatprep.subr.bf16.mxu0 0
      %774 = vmatpush1.bf16.msra.mxu0 0
      %775 = vmatprep.subr.bf16.mxu0 0
      %776 = vmatpush1.bf16.msra.mxu0 0
      %777 = vmatprep.subr.bf16.mxu0 0
      %778 = vmatpush1.bf16.msra.mxu0 0
      %779 = vmatprep.subr.bf16.mxu0 0
      %780 = vmatpush1.bf16.msra.mxu0 0
      %781 = vmatprep.subr.bf16.mxu0 0
      %782 = vmatpush1.bf16.msra.mxu0 0
      %783 = vmatprep.mubr.bf16.mxu0 0
      %784 = vmatmul.mubr.bf16.gmra.mrb[0].mxu0 %v581
      %v785 = vpop.f32.mrb[0].mxu0
      %v786 = vadd.f32 %v698, %v785
      %v787 = vpop.f32.mrb[0].mxu0
      %v788 = vpop.f32.mrb[0].mxu0
      %v789 = vpop.f32.mrb[0].mxu0
      %790 = vdwg.mxu0
      %v791 = vld [vmem:[%s507] sm:$0xf]
      %v792 = vld [vmem:[%s507 + $0x4] sm:$0x1]
      %v793 = vld [vmem:[%s6 + $0x80] sm:$0xf]
      %v794 = vld [vmem:[%s6 + $0x84] sm:$0xf]
      %v795 = vld [vmem:[%s6 + $0x88] sm:$0xf]
      %v796 = vld [vmem:[%s6 + $0x8c] sm:$0xf]
      %v797 = vld [vmem:[%s6 + $0x90] sm:$0xf]
      %v798 = vld [vmem:[%s6 + $0x94] sm:$0xf]
      %v799 = vld [vmem:[%s6 + $0x98] sm:$0xf]
      %v800 = vld [vmem:[%s6 + $0x9c] sm:$0xf]
      %v801 = vld [vmem:[%s6 + $0xa0] sm:$0xf]
      %v802 = vld [vmem:[%s6 + $0xa4] sm:$0xf]
      %v803 = vld [vmem:[%s6 + $0xa8] sm:$0xf]
      %v804 = vld [vmem:[%s6 + $0xac] sm:$0xf]
      %v805 = vld [vmem:[%s6 + $0xb0] sm:$0xf]
      %v806 = vld [vmem:[%s6 + $0xb4] sm:$0xf]
      %v807 = vld [vmem:[%s6 + $0xb8] sm:$0xf]
      %v808 = vld [vmem:[%s6 + $0xbc] sm:$0xf]
      %v811 = vunpack.c.l.b16 %v791
      %v812 = vunpack.c.l.b16 %v792
      %v813 = vpack.c.b16 %v812, %v811
      %v815 = vshrl.u32 %v813, 16
      %v817 = vshll.u32 %v813, 16
      %v819 = vrot.slane %v817, 1
      %v820 = vor.u32 %v815, %v819
      %v838 = vunpack.c.l.b16 %v793
      %v839 = vunpack.c.l.b16 %v794
      %v840 = vunpack.c.l.b16 %v795
      %v841 = vunpack.c.l.b16 %v796
      %v842 = vunpack.c.l.b16 %v797
      %v843 = vunpack.c.l.b16 %v798
      %v844 = vunpack.c.l.b16 %v799
      %v845 = vunpack.c.l.b16 %v800
      %v846 = vunpack.c.l.b16 %v801
      %v847 = vunpack.c.l.b16 %v802
      %v848 = vunpack.c.l.b16 %v803
      %v849 = vunpack.c.l.b16 %v804
      %v850 = vunpack.c.l.b16 %v805
      %v851 = vunpack.c.l.b16 %v806
      %v852 = vunpack.c.l.b16 %v807
      %v853 = vunpack.c.l.b16 %v808
      %v854 = vpack.c.b16 %v839, %v838
      %v855 = vpack.c.b16 %v841, %v840
      %v856 = vpack.c.b16 %v843, %v842
      %v857 = vpack.c.b16 %v845, %v844
      %v858 = vpack.c.b16 %v847, %v846
      %v859 = vpack.c.b16 %v849, %v848
      %v860 = vpack.c.b16 %v851, %v850
      %v861 = vpack.c.b16 %v853, %v852
      %870 = vmatprep.subr.bf16.mxu0 0
      %871 = vmatpush1.bf16.msra.mxu0 %v854
      %872 = vmatprep.subr.bf16.mxu0 0
      %873 = vmatpush1.bf16.msra.mxu0 %v855
      %874 = vmatprep.subr.bf16.mxu0 0
      %875 = vmatpush1.bf16.msra.mxu0 %v856
      %876 = vmatprep.subr.bf16.mxu0 0
      %877 = vmatpush1.bf16.msra.mxu0 %v857
      %878 = vmatprep.subr.bf16.mxu0 0
      %879 = vmatpush1.bf16.msra.mxu0 %v858
      %880 = vmatprep.subr.bf16.mxu0 0
      %881 = vmatpush1.bf16.msra.mxu0 %v859
      %882 = vmatprep.subr.bf16.mxu0 0
      %883 = vmatpush1.bf16.msra.mxu0 %v860
      %884 = vmatprep.subr.bf16.mxu0 0
      %885 = vmatpush1.bf16.msra.mxu0 %v861
      %886 = vmatprep.subr.bf16.mxu0 0
      %887 = vmatpush1.bf16.msra.mxu0 0
      %888 = vmatprep.subr.bf16.mxu0 0
      %889 = vmatpush1.bf16.msra.mxu0 0
      %890 = vmatprep.subr.bf16.mxu0 0
      %891 = vmatpush1.bf16.msra.mxu0 0
      %892 = vmatprep.subr.bf16.mxu0 0
      %893 = vmatpush1.bf16.msra.mxu0 0
      %894 = vmatprep.subr.bf16.mxu0 0
      %895 = vmatpush1.bf16.msra.mxu0 0
      %896 = vmatprep.subr.bf16.mxu0 0
      %897 = vmatpush1.bf16.msra.mxu0 0
      %898 = vmatprep.subr.bf16.mxu0 0
      %899 = vmatpush1.bf16.msra.mxu0 0
      %900 = vmatprep.subr.bf16.mxu0 0
      %901 = vmatpush1.bf16.msra.mxu0 0
      %902 = vmatprep.mubr.bf16.mxu0 0
      %903 = vmatmul.mubr.bf16.gmra.mrb[0].mxu0 %v820
      %v904 = vpop.f32.mrb[0].mxu0
      %v905 = vadd.f32 0.0, %v904
      %v906 = vpop.f32.mrb[0].mxu0
      %v907 = vpop.f32.mrb[0].mxu0
      %v908 = vpop.f32.mrb[0].mxu0
      %909 = vdwg.mxu0
      %v910 = vadd.f32 %v786, %v905
      %v911 = vld [vmem:[%s530] sm:$0xf]
      %v912 = vld [vmem:[%s6 + $0xc0] sm:$0xf]
      %v913 = vld [vmem:[%s6 + $0xc4] sm:$0xf]
      %v914 = vld [vmem:[%s6 + $0xc8] sm:$0xf]
      %v915 = vld [vmem:[%s6 + $0xcc] sm:$0xf]
      %v916 = vld [vmem:[%s6 + $0xd0] sm:$0xf]
      %v917 = vld [vmem:[%s6 + $0xd4] sm:$0xf]
      %v918 = vld [vmem:[%s6 + $0xd8] sm:$0xf]
      %v919 = vld [vmem:[%s6 + $0xdc] sm:$0xf]
      %v920 = vld [vmem:[%s6 + $0xe0] sm:$0xf]
      %v921 = vld [vmem:[%s6 + $0xe4] sm:$0xf]
      %v922 = vld [vmem:[%s6 + $0xe8] sm:$0xf]
      %v923 = vld [vmem:[%s6 + $0xec] sm:$0xf]
      %v924 = vld [vmem:[%s6 + $0xf0] sm:$0xf]
      %v925 = vld [vmem:[%s6 + $0xf4] sm:$0xf]
      %v926 = vld [vmem:[%s6 + $0xf8] sm:$0xf]
      %v927 = vld [vmem:[%s6 + $0xfc] sm:$0xf]
      %v944 = vunpack.c.l.b16 %v912
      %v945 = vunpack.c.l.b16 %v913
      %v946 = vunpack.c.l.b16 %v914
      %v947 = vunpack.c.l.b16 %v915
      %v948 = vunpack.c.l.b16 %v916
      %v949 = vunpack.c.l.b16 %v917
      %v950 = vunpack.c.l.b16 %v918
      %v951 = vunpack.c.l.b16 %v919
      %v952 = vunpack.c.l.b16 %v920
      %v953 = vunpack.c.l.b16 %v921
      %v954 = vunpack.c.l.b16 %v922
      %v955 = vunpack.c.l.b16 %v923
      %v956 = vunpack.c.l.b16 %v924
      %v957 = vunpack.c.l.b16 %v925
      %v958 = vunpack.c.l.b16 %v926
      %v959 = vunpack.c.l.b16 %v927
      %v960 = vpack.c.b16 %v945, %v944
      %v961 = vpack.c.b16 %v947, %v946
      %v962 = vpack.c.b16 %v949, %v948
      %v963 = vpack.c.b16 %v951, %v950
      %v964 = vpack.c.b16 %v953, %v952
      %v965 = vpack.c.b16 %v955, %v954
      %v966 = vpack.c.b16 %v957, %v956
      %v967 = vpack.c.b16 %v959, %v958
      %976 = vmatprep.subr.bf16.mxu0 0
      %977 = vmatpush1.bf16.msra.mxu0 %v960
      %978 = vmatprep.subr.bf16.mxu0 0
      %979 = vmatpush1.bf16.msra.mxu0 %v961
      %980 = vmatprep.subr.bf16.mxu0 0
      %981 = vmatpush1.bf16.msra.mxu0 %v962
      %982 = vmatprep.subr.bf16.mxu0 0
      %983 = vmatpush1.bf16.msra.mxu0 %v963
      %984 = vmatprep.subr.bf16.mxu0 0
      %985 = vmatpush1.bf16.msra.mxu0 %v964
      %986 = vmatprep.subr.bf16.mxu0 0
      %987 = vmatpush1.bf16.msra.mxu0 %v965
      %988 = vmatprep.subr.bf16.mxu0 0
      %989 = vmatpush1.bf16.msra.mxu0 %v966
      %990 = vmatprep.subr.bf16.mxu0 0
      %991 = vmatpush1.bf16.msra.mxu0 %v967
      %992 = vmatprep.subr.bf16.mxu0 0
      %993 = vmatpush1.bf16.msra.mxu0 0
      %994 = vmatprep.subr.bf16.mxu0 0
      %995 = vmatpush1.bf16.msra.mxu0 0
      %996 = vmatprep.subr.bf16.mxu0 0
      %997 = vmatpush1.bf16.msra.mxu0 0
      %998 = vmatprep.subr.bf16.mxu0 0
      %999 = vmatpush1.bf16.msra.mxu0 0
      %1000 = vmatprep.subr.bf16.mxu0 0
      %1001 = vmatpush1.bf16.msra.mxu0 0
      %1002 = vmatprep.subr.bf16.mxu0 0
      %1003 = vmatpush1.bf16.msra.mxu0 0
      %1004 = vmatprep.subr.bf16.mxu0 0
      %1005 = vmatpush1.bf16.msra.mxu0 0
      %1006 = vmatprep.subr.bf16.mxu0 0
      %1007 = vmatpush1.bf16.msra.mxu0 0
      %1008 = vmatprep.mubr.bf16.mxu0 0
      %1009 = vmatmul.mubr.bf16.gmra.mrb[0].mxu0 %v911
      %v1010 = vpop.f32.mrb[0].mxu0
      %v1011 = vadd.f32 0.0, %v1010
      %v1012 = vpop.f32.mrb[0].mxu0
      %v1013 = vpop.f32.mrb[0].mxu0
      %v1014 = vpop.f32.mrb[0].mxu0
      %1015 = vdwg.mxu0
      %v1016 = vadd.f32 %v910, %v1011
      %v1017 = vld [vmem:[%s543] sm:$0xf]
      %v1018 = vld [vmem:[%s6 + $0x100] sm:$0xf]
      %v1019 = vld [vmem:[%s6 + $0x104] sm:$0xf]
      %v1020 = vld [vmem:[%s6 + $0x108] sm:$0xf]
      %v1021 = vld [vmem:[%s6 + $0x10c] sm:$0xf]
      %v1022 = vld [vmem:[%s6 + $0x110] sm:$0xf]
      %v1023 = vld [vmem:[%s6 + $0x114] sm:$0xf]
      %v1024 = vld [vmem:[%s6 + $0x118] sm:$0xf]
      %v1025 = vld [vmem:[%s6 + $0x11c] sm:$0xf]
      %v1026 = vld [vmem:[%s6 + $0x120] sm:$0xf]
      %v1027 = vld [vmem:[%s6 + $0x124] sm:$0xf]
      %v1028 = vld [vmem:[%s6 + $0x128] sm:$0xf]
      %v1029 = vld [vmem:[%s6 + $0x12c] sm:$0xf]
      %v1030 = vld [vmem:[%s6 + $0x130] sm:$0xf]
      %v1031 = vld [vmem:[%s6 + $0x134] sm:$0xf]
      %v1032 = vld [vmem:[%s6 + $0x138] sm:$0xf]
      %v1033 = vld [vmem:[%s6 + $0x13c] sm:$0xf]
      %v1050 = vunpack.c.l.b16 %v1018
      %v1051 = vunpack.c.l.b16 %v1019
      %v1052 = vunpack.c.l.b16 %v1020
      %v1053 = vunpack.c.l.b16 %v1021
      %v1054 = vunpack.c.l.b16 %v1022
      %v1055 = vunpack.c.l.b16 %v1023
      %v1056 = vunpack.c.l.b16 %v1024
      %v1057 = vunpack.c.l.b16 %v1025
      %v1058 = vunpack.c.l.b16 %v1026
      %v1059 = vunpack.c.l.b16 %v1027
      %v1060 = vunpack.c.l.b16 %v1028
      %v1061 = vunpack.c.l.b16 %v1029
      %v1062 = vunpack.c.l.b16 %v1030
      %v1063 = vunpack.c.l.b16 %v1031
      %v1064 = vunpack.c.l.b16 %v1032
      %v1065 = vunpack.c.l.b16 %v1033
      %v1066 = vpack.c.b16 %v1051, %v1050
      %v1067 = vpack.c.b16 %v1053, %v1052
      %v1068 = vpack.c.b16 %v1055, %v1054
      %v1069 = vpack.c.b16 %v1057, %v1056
      %v1070 = vpack.c.b16 %v1059, %v1058
      %v1071 = vpack.c.b16 %v1061, %v1060
      %v1072 = vpack.c.b16 %v1063, %v1062
      %v1073 = vpack.c.b16 %v1065, %v1064
      %1082 = vmatprep.subr.bf16.mxu0 0
      %1083 = vmatpush1.bf16.msra.mxu0 %v1066
      %1084 = vmatprep.subr.bf16.mxu0 0
      %1085 = vmatpush1.bf16.msra.mxu0 %v1067
      %1086 = vmatprep.subr.bf16.mxu0 0
      %1087 = vmatpush1.bf16.msra.mxu0 %v1068
      %1088 = vmatprep.subr.bf16.mxu0 0
      %1089 = vmatpush1.bf16.msra.mxu0 %v1069
      %1090 = vmatprep.subr.bf16.mxu0 0
      %1091 = vmatpush1.bf16.msra.mxu0 %v1070
      %1092 = vmatprep.subr.bf16.mxu0 0
      %1093 = vmatpush1.bf16.msra.mxu0 %v1071
      %1094 = vmatprep.subr.bf16.mxu0 0
      %1095 = vmatpush1.bf16.msra.mxu0 %v1072
      %1096 = vmatprep.subr.bf16.mxu0 0
      %1097 = vmatpush1.bf16.msra.mxu0 %v1073
      %1098 = vmatprep.subr.bf16.mxu0 0
      %1099 = vmatpush1.bf16.msra.mxu0 0
      %1100 = vmatprep.subr.bf16.mxu0 0
      %1101 = vmatpush1.bf16.msra.mxu0 0
      %1102 = vmatprep.subr.bf16.mxu0 0
      %1103 = vmatpush1.bf16.msra.mxu0 0
      %1104 = vmatprep.subr.bf16.mxu0 0
      %1105 = vmatpush1.bf16.msra.mxu0 0
      %1106 = vmatprep.subr.bf16.mxu0 0
      %1107 = vmatpush1.bf16.msra.mxu0 0
      %1108 = vmatprep.subr.bf16.mxu0 0
      %1109 = vmatpush1.bf16.msra.mxu0 0
      %1110 = vmatprep.subr.bf16.mxu0 0
      %1111 = vmatpush1.bf16.msra.mxu0 0
      %1112 = vmatprep.subr.bf16.mxu0 0
      %1113 = vmatpush1.bf16.msra.mxu0 0
      %1114 = vmatprep.mubr.bf16.mxu0 0
      %1115 = vmatmul.mubr.bf16.gmra.mrb[0].mxu0 %v1017
      %v1116 = vpop.f32.mrb[0].mxu0
      %v1117 = vadd.f32 0.0, %v1116
      %v1118 = vpop.f32.mrb[0].mxu0
      %v1119 = vpop.f32.mrb[0].mxu0
      %v1120 = vpop.f32.mrb[0].mxu0
      %1121 = vdwg.mxu0
      %v1122 = vadd.f32 %v1016, %v1117
      %v1123 = vld [vmem:[%s530] sm:$0xf]
      %v1124 = vld [vmem:[%s530 + $0x4] sm:$0x1]
      %v1125 = vld [vmem:[%s6 + $0x140] sm:$0xf]
      %v1126 = vld [vmem:[%s6 + $0x144] sm:$0xf]
      %v1127 = vld [vmem:[%s6 + $0x148] sm:$0xf]
      %v1128 = vld [vmem:[%s6 + $0x14c] sm:$0xf]
      %v1129 = vld [vmem:[%s6 + $0x150] sm:$0xf]
      %v1130 = vld [vmem:[%s6 + $0x154] sm:$0xf]
      %v1131 = vld [vmem:[%s6 + $0x158] sm:$0xf]
      %v1132 = vld [vmem:[%s6 + $0x15c] sm:$0xf]
      %v1133 = vld [vmem:[%s6 + $0x160] sm:$0xf]
      %v1134 = vld [vmem:[%s6 + $0x164] sm:$0xf]
      %v1135 = vld [vmem:[%s6 + $0x168] sm:$0xf]
      %v1136 = vld [vmem:[%s6 + $0x16c] sm:$0xf]
      %v1137 = vld [vmem:[%s6 + $0x170] sm:$0xf]
      %v1138 = vld [vmem:[%s6 + $0x174] sm:$0xf]
      %v1139 = vld [vmem:[%s6 + $0x178] sm:$0xf]
      %v1140 = vld [vmem:[%s6 + $0x17c] sm:$0xf]
      %v1143 = vunpack.c.l.b16 %v1123
      %v1144 = vunpack.c.l.b16 %v1124
      %v1145 = vpack.c.b16 %v1144, %v1143
      %v1147 = vshrl.u32 %v1145, 16
      %v1149 = vshll.u32 %v1145, 16
      %v1151 = vrot.slane %v1149, 1
      %v1152 = vor.u32 %v1147, %v1151
      %v1170 = vunpack.c.l.b16 %v1125
      %v1171 = vunpack.c.l.b16 %v1126
      %v1172 = vunpack.c.l.b16 %v1127
      %v1173 = vunpack.c.l.b16 %v1128
      %v1174 = vunpack.c.l.b16 %v1129
      %v1175 = vunpack.c.l.b16 %v1130
      %v1176 = vunpack.c.l.b16 %v1131
      %v1177 = vunpack.c.l.b16 %v1132
      %v1178 = vunpack.c.l.b16 %v1133
      %v1179 = vunpack.c.l.b16 %v1134
      %v1180 = vunpack.c.l.b16 %v1135
      %v1181 = vunpack.c.l.b16 %v1136
      %v1182 = vunpack.c.l.b16 %v1137
      %v1183 = vunpack.c.l.b16 %v1138
      %v1184 = vunpack.c.l.b16 %v1139
      %v1185 = vunpack.c.l.b16 %v1140
      %v1186 = vpack.c.b16 %v1171, %v1170
      %v1187 = vpack.c.b16 %v1173, %v1172
      %v1188 = vpack.c.b16 %v1175, %v1174
      %v1189 = vpack.c.b16 %v1177, %v1176
      %v1190 = vpack.c.b16 %v1179, %v1178
      %v1191 = vpack.c.b16 %v1181, %v1180
      %v1192 = vpack.c.b16 %v1183, %v1182
      %v1193 = vpack.c.b16 %v1185, %v1184
      %1202 = vmatprep.subr.bf16.mxu0 0
      %1203 = vmatpush1.bf16.msra.mxu0 %v1186
      %1204 = vmatprep.subr.bf16.mxu0 0
      %1205 = vmatpush1.bf16.msra.mxu0 %v1187
      %1206 = vmatprep.subr.bf16.mxu0 0
      %1207 = vmatpush1.bf16.msra.mxu0 %v1188
      %1208 = vmatprep.subr.bf16.mxu0 0
      %1209 = vmatpush1.bf16.msra.mxu0 %v1189
      %1210 = vmatprep.subr.bf16.mxu0 0
      %1211 = vmatpush1.bf16.msra.mxu0 %v1190
      %1212 = vmatprep.subr.bf16.mxu0 0
      %1213 = vmatpush1.bf16.msra.mxu0 %v1191
      %1214 = vmatprep.subr.bf16.mxu0 0
      %1215 = vmatpush1.bf16.msra.mxu0 %v1192
      %1216 = vmatprep.subr.bf16.mxu0 0
      %1217 = vmatpush1.bf16.msra.mxu0 %v1193
      %1218 = vmatprep.subr.bf16.mxu0 0
      %1219 = vmatpush1.bf16.msra.mxu0 0
      %1220 = vmatprep.subr.bf16.mxu0 0
      %1221 = vmatpush1.bf16.msra.mxu0 0
      %1222 = vmatprep.subr.bf16.mxu0 0
      %1223 = vmatpush1.bf16.msra.mxu0 0
      %1224 = vmatprep.subr.bf16.mxu0 0
      %1225 = vmatpush1.bf16.msra.mxu0 0
      %1226 = vmatprep.subr.bf16.mxu0 0
      %1227 = vmatpush1.bf16.msra.mxu0 0
      %1228 = vmatprep.subr.bf16.mxu0 0
      %1229 = vmatpush1.bf16.msra.mxu0 0
      %1230 = vmatprep.subr.bf16.mxu0 0
      %1231 = vmatpush1.bf16.msra.mxu0 0
      %1232 = vmatprep.subr.bf16.mxu0 0
      %1233 = vmatpush1.bf16.msra.mxu0 0
      %1234 = vmatprep.mubr.bf16.mxu0 0
      %1235 = vmatmul.mubr.bf16.gmra.mrb[0].mxu0 %v1152
      %v1236 = vpop.f32.mrb[0].mxu0
      %v1237 = vadd.f32 0.0, %v1236
      %v1238 = vpop.f32.mrb[0].mxu0
      %v1239 = vpop.f32.mrb[0].mxu0
      %v1240 = vpop.f32.mrb[0].mxu0
      %1241 = vdwg.mxu0
      %v1242 = vadd.f32 %v1122, %v1237
      %v1243 = vld [vmem:[%s556] sm:$0xf]
      %v1244 = vld [vmem:[%s6 + $0x180] sm:$0xf]
      %v1245 = vld [vmem:[%s6 + $0x184] sm:$0xf]
      %v1246 = vld [vmem:[%s6 + $0x188] sm:$0xf]
      %v1247 = vld [vmem:[%s6 + $0x18c] sm:$0xf]
      %v1248 = vld [vmem:[%s6 + $0x190] sm:$0xf]
      %v1249 = vld [vmem:[%s6 + $0x194] sm:$0xf]
      %v1250 = vld [vmem:[%s6 + $0x198] sm:$0xf]
      %v1251 = vld [vmem:[%s6 + $0x19c] sm:$0xf]
      %v1252 = vld [vmem:[%s6 + $0x1a0] sm:$0xf]
      %v1253 = vld [vmem:[%s6 + $0x1a4] sm:$0xf]
      %v1254 = vld [vmem:[%s6 + $0x1a8] sm:$0xf]
      %v1255 = vld [vmem:[%s6 + $0x1ac] sm:$0xf]
      %v1256 = vld [vmem:[%s6 + $0x1b0] sm:$0xf]
      %v1257 = vld [vmem:[%s6 + $0x1b4] sm:$0xf]
      %v1258 = vld [vmem:[%s6 + $0x1b8] sm:$0xf]
      %v1259 = vld [vmem:[%s6 + $0x1bc] sm:$0xf]
      %v1276 = vunpack.c.l.b16 %v1244
      %v1277 = vunpack.c.l.b16 %v1245
      %v1278 = vunpack.c.l.b16 %v1246
      %v1279 = vunpack.c.l.b16 %v1247
      %v1280 = vunpack.c.l.b16 %v1248
      %v1281 = vunpack.c.l.b16 %v1249
      %v1282 = vunpack.c.l.b16 %v1250
      %v1283 = vunpack.c.l.b16 %v1251
      %v1284 = vunpack.c.l.b16 %v1252
      %v1285 = vunpack.c.l.b16 %v1253
      %v1286 = vunpack.c.l.b16 %v1254
      %v1287 = vunpack.c.l.b16 %v1255
      %v1288 = vunpack.c.l.b16 %v1256
      %v1289 = vunpack.c.l.b16 %v1257
      %v1290 = vunpack.c.l.b16 %v1258
      %v1291 = vunpack.c.l.b16 %v1259
      %v1292 = vpack.c.b16 %v1277, %v1276
      %v1293 = vpack.c.b16 %v1279, %v1278
      %v1294 = vpack.c.b16 %v1281, %v1280
      %v1295 = vpack.c.b16 %v1283, %v1282
      %v1296 = vpack.c.b16 %v1285, %v1284
      %v1297 = vpack.c.b16 %v1287, %v1286
      %v1298 = vpack.c.b16 %v1289, %v1288
      %v1299 = vpack.c.b16 %v1291, %v1290
      %1308 = vmatprep.subr.bf16.mxu0 0
      %1309 = vmatpush1.bf16.msra.mxu0 %v1292
      %1310 = vmatprep.subr.bf16.mxu0 0
      %1311 = vmatpush1.bf16.msra.mxu0 %v1293
      %1312 = vmatprep.subr.bf16.mxu0 0
      %1313 = vmatpush1.bf16.msra.mxu0 %v1294
      %1314 = vmatprep.subr.bf16.mxu0 0
      %1315 = vmatpush1.bf16.msra.mxu0 %v1295
      %1316 = vmatprep.subr.bf16.mxu0 0
      %1317 = vmatpush1.bf16.msra.mxu0 %v1296
      %1318 = vmatprep.subr.bf16.mxu0 0
      %1319 = vmatpush1.bf16.msra.mxu0 %v1297
      %1320 = vmatprep.subr.bf16.mxu0 0
      %1321 = vmatpush1.bf16.msra.mxu0 %v1298
      %1322 = vmatprep.subr.bf16.mxu0 0
      %1323 = vmatpush1.bf16.msra.mxu0 %v1299
      %1324 = vmatprep.subr.bf16.mxu0 0
      %1325 = vmatpush1.bf16.msra.mxu0 0
      %1326 = vmatprep.subr.bf16.mxu0 0
      %1327 = vmatpush1.bf16.msra.mxu0 0
      %1328 = vmatprep.subr.bf16.mxu0 0
      %1329 = vmatpush1.bf16.msra.mxu0 0
      %1330 = vmatprep.subr.bf16.mxu0 0
      %1331 = vmatpush1.bf16.msra.mxu0 0
      %1332 = vmatprep.subr.bf16.mxu0 0
      %1333 = vmatpush1.bf16.msra.mxu0 0
      %1334 = vmatprep.subr.bf16.mxu0 0
      %1335 = vmatpush1.bf16.msra.mxu0 0
      %1336 = vmatprep.subr.bf16.mxu0 0
      %1337 = vmatpush1.bf16.msra.mxu0 0
      %1338 = vmatprep.subr.bf16.mxu0 0
      %1339 = vmatpush1.bf16.msra.mxu0 0
      %1340 = vmatprep.mubr.bf16.mxu0 0
      %1341 = vmatmul.mubr.bf16.gmra.mrb[0].mxu0 %v1243
      %v1342 = vpop.f32.mrb[0].mxu0
      %v1343 = vadd.f32 0.0, %v1342
      %v1344 = vpop.f32.mrb[0].mxu0
      %v1345 = vpop.f32.mrb[0].mxu0
      %v1346 = vpop.f32.mrb[0].mxu0
      %1347 = vdwg.mxu0
      %v1348 = vadd.f32 %v1242, %v1343
      %v1349 = vld [vmem:[%s569] sm:$0xf]
      %v1350 = vld [vmem:[%s6 + $0x1c0] sm:$0xf]
      %v1351 = vld [vmem:[%s6 + $0x1c4] sm:$0xf]
      %v1352 = vld [vmem:[%s6 + $0x1c8] sm:$0xf]
      %v1353 = vld [vmem:[%s6 + $0x1cc] sm:$0xf]
      %v1354 = vld [vmem:[%s6 + $0x1d0] sm:$0xf]
      %v1355 = vld [vmem:[%s6 + $0x1d4] sm:$0xf]
      %v1356 = vld [vmem:[%s6 + $0x1d8] sm:$0xf]
      %v1357 = vld [vmem:[%s6 + $0x1dc] sm:$0xf]
      %v1358 = vld [vmem:[%s6 + $0x1e0] sm:$0xf]
      %v1359 = vld [vmem:[%s6 + $0x1e4] sm:$0xf]
      %v1360 = vld [vmem:[%s6 + $0x1e8] sm:$0xf]
      %v1361 = vld [vmem:[%s6 + $0x1ec] sm:$0xf]
      %v1362 = vld [vmem:[%s6 + $0x1f0] sm:$0xf]
      %v1363 = vld [vmem:[%s6 + $0x1f4] sm:$0xf]
      %v1364 = vld [vmem:[%s6 + $0x1f8] sm:$0xf]
      %v1365 = vld [vmem:[%s6 + $0x1fc] sm:$0xf]
      %v1382 = vunpack.c.l.b16 %v1350
      %v1383 = vunpack.c.l.b16 %v1351
      %v1384 = vunpack.c.l.b16 %v1352
      %v1385 = vunpack.c.l.b16 %v1353
      %v1386 = vunpack.c.l.b16 %v1354
      %v1387 = vunpack.c.l.b16 %v1355
      %v1388 = vunpack.c.l.b16 %v1356
      %v1389 = vunpack.c.l.b16 %v1357
      %v1390 = vunpack.c.l.b16 %v1358
      %v1391 = vunpack.c.l.b16 %v1359
      %v1392 = vunpack.c.l.b16 %v1360
      %v1393 = vunpack.c.l.b16 %v1361
      %v1394 = vunpack.c.l.b16 %v1362
      %v1395 = vunpack.c.l.b16 %v1363
      %v1396 = vunpack.c.l.b16 %v1364
      %v1397 = vunpack.c.l.b16 %v1365
      %v1398 = vpack.c.b16 %v1383, %v1382
      %v1399 = vpack.c.b16 %v1385, %v1384
      %v1400 = vpack.c.b16 %v1387, %v1386
      %v1401 = vpack.c.b16 %v1389, %v1388
      %v1402 = vpack.c.b16 %v1391, %v1390
      %v1403 = vpack.c.b16 %v1393, %v1392
      %v1404 = vpack.c.b16 %v1395, %v1394
      %v1405 = vpack.c.b16 %v1397, %v1396
      %1414 = vmatprep.subr.bf16.mxu0 0
      %1415 = vmatpush1.bf16.msra.mxu0 %v1398
      %1416 = vmatprep.subr.bf16.mxu0 0
      %1417 = vmatpush1.bf16.msra.mxu0 %v1399
      %1418 = vmatprep.subr.bf16.mxu0 0
      %1419 = vmatpush1.bf16.msra.mxu0 %v1400
      %1420 = vmatprep.subr.bf16.mxu0 0
      %1421 = vmatpush1.bf16.msra.mxu0 %v1401
      %1422 = vmatprep.subr.bf16.mxu0 0
      %1423 = vmatpush1.bf16.msra.mxu0 %v1402
      %1424 = vmatprep.subr.bf16.mxu0 0
      %1425 = vmatpush1.bf16.msra.mxu0 %v1403
      %1426 = vmatprep.subr.bf16.mxu0 0
      %1427 = vmatpush1.bf16.msra.mxu0 %v1404
      %1428 = vmatprep.subr.bf16.mxu0 0
      %1429 = vmatpush1.bf16.msra.mxu0 %v1405
      %1430 = vmatprep.subr.bf16.mxu0 0
      %1431 = vmatpush1.bf16.msra.mxu0 0
      %1432 = vmatprep.subr.bf16.mxu0 0
      %1433 = vmatpush1.bf16.msra.mxu0 0
      %1434 = vmatprep.subr.bf16.mxu0 0
      %1435 = vmatpush1.bf16.msra.mxu0 0
      %1436 = vmatprep.subr.bf16.mxu0 0
      %1437 = vmatpush1.bf16.msra.mxu0 0
      %1438 = vmatprep.subr.bf16.mxu0 0
      %1439 = vmatpush1.bf16.msra.mxu0 0
      %1440 = vmatprep.subr.bf16.mxu0 0
      %1441 = vmatpush1.bf16.msra.mxu0 0
      %1442 = vmatprep.subr.bf16.mxu0 0
      %1443 = vmatpush1.bf16.msra.mxu0 0
      %1444 = vmatprep.subr.bf16.mxu0 0
      %1445 = vmatpush1.bf16.msra.mxu0 0
      %1446 = vmatprep.mubr.bf16.mxu0 0
      %1447 = vmatmul.mubr.bf16.gmra.mrb[0].mxu0 %v1349
      %v1448 = vpop.f32.mrb[0].mxu0
      %v1449 = vadd.f32 0.0, %v1448
      %v1450 = vpop.f32.mrb[0].mxu0
      %v1451 = vpop.f32.mrb[0].mxu0
      %v1452 = vpop.f32.mrb[0].mxu0
      %1453 = vdwg.mxu0
      %v1454 = vadd.f32 %v1348, %v1449
      %v1455 = vld [vmem:[%s556] sm:$0xf]
      %v1456 = vld [vmem:[%s556 + $0x4] sm:$0x1]
      %v1457 = vld [vmem:[%s6 + $0x200] sm:$0xf]
      %v1458 = vld [vmem:[%s6 + $0x204] sm:$0xf]
      %v1459 = vld [vmem:[%s6 + $0x208] sm:$0xf]
      %v1460 = vld [vmem:[%s6 + $0x20c] sm:$0xf]
      %v1461 = vld [vmem:[%s6 + $0x210] sm:$0xf]
      %v1462 = vld [vmem:[%s6 + $0x214] sm:$0xf]
      %v1463 = vld [vmem:[%s6 + $0x218] sm:$0xf]
      %v1464 = vld [vmem:[%s6 + $0x21c] sm:$0xf]
      %v1465 = vld [vmem:[%s6 + $0x220] sm:$0xf]
      %v1466 = vld [vmem:[%s6 + $0x224] sm:$0xf]
      %v1467 = vld [vmem:[%s6 + $0x228] sm:$0xf]
      %v1468 = vld [vmem:[%s6 + $0x22c] sm:$0xf]
      %v1469 = vld [vmem:[%s6 + $0x230] sm:$0xf]
      %v1470 = vld [vmem:[%s6 + $0x234] sm:$0xf]
      %v1471 = vld [vmem:[%s6 + $0x238] sm:$0xf]
      %v1472 = vld [vmem:[%s6 + $0x23c] sm:$0xf]
      %v1475 = vunpack.c.l.b16 %v1455
      %v1476 = vunpack.c.l.b16 %v1456
      %v1477 = vpack.c.b16 %v1476, %v1475
      %v1479 = vshrl.u32 %v1477, 16
      %v1481 = vshll.u32 %v1477, 16
      %v1483 = vrot.slane %v1481, 1
      %v1484 = vor.u32 %v1479, %v1483
      %v1502 = vunpack.c.l.b16 %v1457
      %v1503 = vunpack.c.l.b16 %v1458
      %v1504 = vunpack.c.l.b16 %v1459
      %v1505 = vunpack.c.l.b16 %v1460
      %v1506 = vunpack.c.l.b16 %v1461
      %v1507 = vunpack.c.l.b16 %v1462
      %v1508 = vunpack.c.l.b16 %v1463
      %v1509 = vunpack.c.l.b16 %v1464
      %v1510 = vunpack.c.l.b16 %v1465
      %v1511 = vunpack.c.l.b16 %v1466
      %v1512 = vunpack.c.l.b16 %v1467
      %v1513 = vunpack.c.l.b16 %v1468
      %v1514 = vunpack.c.l.b16 %v1469
      %v1515 = vunpack.c.l.b16 %v1470
      %v1516 = vunpack.c.l.b16 %v1471
      %v1517 = vunpack.c.l.b16 %v1472
      %v1518 = vpack.c.b16 %v1503, %v1502
      %v1519 = vpack.c.b16 %v1505, %v1504
      %v1520 = vpack.c.b16 %v1507, %v1506
      %v1521 = vpack.c.b16 %v1509, %v1508
      %v1522 = vpack.c.b16 %v1511, %v1510
      %v1523 = vpack.c.b16 %v1513, %v1512
      %v1524 = vpack.c.b16 %v1515, %v1514
      %v1525 = vpack.c.b16 %v1517, %v1516
      %1534 = vmatprep.subr.bf16.mxu0 0
      %1535 = vmatpush1.bf16.msra.mxu0 %v1518
      %1536 = vmatprep.subr.bf16.mxu0 0
      %1537 = vmatpush1.bf16.msra.mxu0 %v1519
      %1538 = vmatprep.subr.bf16.mxu0 0
      %1539 = vmatpush1.bf16.msra.mxu0 %v1520
      %1540 = vmatprep.subr.bf16.mxu0 0
      %1541 = vmatpush1.bf16.msra.mxu0 %v1521
      %1542 = vmatprep.subr.bf16.mxu0 0
      %1543 = vmatpush1.bf16.msra.mxu0 %v1522
      %1544 = vmatprep.subr.bf16.mxu0 0
      %1545 = vmatpush1.bf16.msra.mxu0 %v1523
      %1546 = vmatprep.subr.bf16.mxu0 0
      %1547 = vmatpush1.bf16.msra.mxu0 %v1524
      %1548 = vmatprep.subr.bf16.mxu0 0
      %1549 = vmatpush1.bf16.msra.mxu0 %v1525
      %1550 = vmatprep.subr.bf16.mxu0 0
      %1551 = vmatpush1.bf16.msra.mxu0 0
      %1552 = vmatprep.subr.bf16.mxu0 0
      %1553 = vmatpush1.bf16.msra.mxu0 0
      %1554 = vmatprep.subr.bf16.mxu0 0
      %1555 = vmatpush1.bf16.msra.mxu0 0
      %1556 = vmatprep.subr.bf16.mxu0 0
      %1557 = vmatpush1.bf16.msra.mxu0 0
      %1558 = vmatprep.subr.bf16.mxu0 0
      %1559 = vmatpush1.bf16.msra.mxu0 0
      %1560 = vmatprep.subr.bf16.mxu0 0
      %1561 = vmatpush1.bf16.msra.mxu0 0
      %1562 = vmatprep.subr.bf16.mxu0 0
      %1563 = vmatpush1.bf16.msra.mxu0 0
      %1564 = vmatprep.subr.bf16.mxu0 0
      %1565 = vmatpush1.bf16.msra.mxu0 0
      %1566 = vmatprep.mubr.bf16.mxu0 0
      %1567 = vmatmul.mubr.bf16.gmra.mrb[0].mxu0 %v1484
      %v1568 = vpop.f32.mrb[0].mxu0
      %v1569 = vadd.f32 0.0, %v1568
      %v1570 = vpop.f32.mrb[0].mxu0
      %v1571 = vpop.f32.mrb[0].mxu0
      %v1572 = vpop.f32.mrb[0].mxu0
      %1573 = vdwg.mxu0
      %v1574 = vadd.f32 %v1454, %v1569
      %v1575 = vld [vmem:[%s7] sm:$0x1]
      %v1577 = vlaneseq
      %v1578 = vshrl.u32 %v1577, 7
      %v1579 = vsub.s32 0, %v1578
      %v1580 = vrot.slane %v1575, %v1579
      %v1582 = vadd.f32 %v1574, %v1580
      %v1583 = vmin.f32 %v1582, 20.0
      %v1584 = vmul.f32 %v1583, 1.442695
      %v1585 = vpow.pop %v1584
      %v1586 = vadd.f32 %v1585, 1.0
      %v1587 = vmul.f32 %v1586, %v1586
      %v1588 = vsub.f32 %v1587, 1.0
      %v1589 = vadd.f32 %v1587, 1.0
      %v1590 = vrcp.pop %v1589
      %v1591 = vmul.f32 %v1588, %v1590
      %vm1592 = vcmp.gt.f32.partialorder %v1582, 20.0
      %v1593 = vmul.f32 %v1582, %v1591
      %v1594 = vsel %vm1592, %v1582, %v1593
      %v1595 = vpack.c.bf16 %v1594, %v1594
      %1596 = vst [vmem:[%s579] sm:$0xf] %v1595
      %p1597 = scmp.lt.s32.totalorder %s23, 1
      %s1598 = scalar_select %p1597, %s23, 1
      %p1599 = scmp.lt.s32.totalorder %s24, 7
      %s1600 = scalar_select %p1599, %s24, 7
      %s1601 = smul.addr %s1598, 8
      %s1602 = sadd.s32 %s1600, %s1601
      %s1603 = smul.addr %s1602, 4
      %s1604 = scalar_lea.vmem %s8, %s1603
      // Predicated region
      $region53: #{csp_layer_forward.6} parent=51 // pred_check
        %p1605 = pneg %p281
      $region54: #{csp_layer_forward.6} parent=51 // pred_check_branch
        %1607 = sbr.rel (%p1605) target = $region56
      $region55: #{csp_layer_forward.6} parent=51 // pred_region
        _
      $region56: #{csp_layer_forward.6} parent=51 // pred_fallthru
        _
    $region52: #{csp_layer_forward.6} parent=5 // pred_fallthru
      _
    %p1608 = scmp.le.s32.totalorder 2, %s14
    // Predicated region
    $region57: #{csp_layer_forward.6} parent=5 // pred_check
      %p1609 = pneg %p1608
    $region58: #{csp_layer_forward.6} parent=5 // pred_check_branch
      %1611 = sbr.rel (%p1609) target = $region60
    $region59: #{csp_layer_forward.6} parent=5 // pred_region
      %s1612 = ssub.s32 %s14, 2
      // Predicated region
      $region61: #{csp_layer_forward.6} parent=59 // pred_check
        %p1613 = pneg %p287
      $region62: #{csp_layer_forward.6} parent=59 // pred_check_branch
        %1615 = sbr.rel (%p1613) target = $region64
      $region63: #{csp_layer_forward.6} parent=59 // pred_region
        %p1616 = scmp.lt.s32.totalorder %s25, 1
        %s1617 = scalar_select %p1616, %s25, 1
        %p1618 = scmp.lt.s32.totalorder %s26, 7
        %s1619 = scalar_select %p1618, %s26, 7
        %s1620 = smul.addr %s1617, 8
        %s1621 = sadd.s32 %s1619, %s1620
        %s1622 = smul.addr %s1621, 4
        %s1623 = scalar_lea.vmem %s8, %s1622
      $region64: #{csp_layer_forward.6} parent=59 // pred_fallthru
        _
    $region60: #{csp_layer_forward.6} parent=5 // pred_fallthru
      _
  $region6: #{csp_layer_forward.6} parent=0 // loop_footer
    %s18 = sadd.s32 1, %s14
  $region7: #{csp_layer_forward.6} parent=0 // loop_footer_branch
    %13 = sbr.rel target = $region3
  $region8: #{csp_layer_forward.6} parent=0 // loop_exit
    _

// kernel: csp_layer_forward.11
$region0: #{csp_layer_forward.11}
  #allocation0 [shape = 'u32[]', space=smem, size = 0x4, offset = 0x4, fixed_abs, tag = 'smem constant byte address 0x4 - core index']
  #allocation1 [shape = 'u32[144,128]{1,0:T(1,128)}', space=vmem, size = 0x12000, scoped, tag = 'internal scratch']
  %s0 = inlined_call_operand.vmem [shape: bf16[128,128], index: 0, kind: input, shape index: {}]
  %s1 = inlined_call_operand.vmem [shape: bf16[128,128], index: 1, kind: input, shape index: {}]
  %s2 = inlined_call_operand.vmem [shape: bf16[128,128], index: 2, kind: input, shape index: {}]
  %s3 = inlined_call_operand.vmem [shape: bf16[128,128], index: 3, kind: input, shape index: {}]
  %s4 = inlined_call_operand.vmem [shape: f32[1,128], index: 4, kind: input, shape index: {}]
  %s5 = inlined_call_operand.vmem [shape: bf16[128,128], index: 5, kind: output, shape index: {}]
  %s6 = sld [smem:[#allocation0]]
  $region53: #{csp_layer_forward.11} parent=0
    _
  %s8 = ssub.s32 1, %s6
  %s9 = scalar_select 0, %s8, %s6
  loop: start=0, step=1, limit=4
  $region2: #{csp_layer_forward.11} parent=0 // loop_pre_header
    _
  $region3: #{csp_layer_forward.11} parent=0 // loop_header
    %s11 = sphi 0, %s15
    %p12 = scmp.ge.s32.totalorder %s11, 4
    %s21 = sphi 0, %s23
    %s24 = sphi 0, %s21
    %s25 = sphi 0, %s24
    %s41 = sphi 0, %s25
    %s47 = sphi 0, %s49
    %s50 = sphi 0, %s47
    %s51 = sphi 0, %s50
    %s67 = sphi 0, %s51
    %s71 = sphi 0, %s71
    %s73 = sphi 0, %s71
    %s74 = sphi 0, %s73
    %s88 = sphi 0, %s74
    %s92 = sphi 0, %s92
    %s94 = sphi 0, %s92
    %s95 = sphi 0, %s94
    %s109 = sphi 0, %s95
    %s113 = sphi 0, %s113
    %s115 = sphi 0, %s113
    %s116 = sphi 0, %s115
    %s130 = sphi 0, %s116
    %s136 = sphi 0, %s138
    %s139 = sphi 0, %s136
    %s140 = sphi 0, %s139
    %s156 = sphi 0, %s140
  $region4: #{csp_layer_forward.11} parent=0 // loop_header_branch
    %14 = sbr.rel (%p12) target = $region8
  $region5: #{csp_layer_forward.11} parent=0 // loop_body
    %s16 = ssub.s32 %s11, 1
    %s17 = ssub.s32 %s11, 2
    %s18 = sadd.s32 %s11, 1
    %s19 = ssub.s32 %s11, %s18
    %p20 = scmp.eq.s32.totalorder %s19, 0
    %s22 = sadd.s32 %s21, 1
    %s23 = scalar_select %p20, %s21, %s22
    %p26 = pneg %p20
    %p27 = scmp.eq.s32.totalorder %s11, 1
    %p28 = por %p26, %p27
    %p29 = scmp.ne.s32.totalorder %s21, %s24
    %p30 = scmp.eq.s32.totalorder %s11, 0
    %p31 = por %p29, %p30
    %p32 = scmp.ne.s32.totalorder %s21, %s24
    %p33 = scmp.eq.s32.totalorder %s16, 1
    %p34 = por %p32, %p33
    %p35 = scmp.ne.s32.totalorder %s24, %s25
    %p36 = scmp.eq.s32.totalorder %s16, 0
    %p37 = por %p35, %p36
    %p38 = scmp.ne.s32.totalorder %s24, %s25
    %p39 = scmp.eq.s32.totalorder %s17, 1
    %p40 = por %p38, %p39
    %p42 = scmp.ne.s32.totalorder %s25, %s41
    %p43 = scmp.eq.s32.totalorder %s17, 0
    %p44 = por %p42, %p43
    %s45 = ssub.s32 %s11, %s18
    %p46 = scmp.eq.s32.totalorder %s45, 0
    %s48 = sadd.s32 %s47, 1
    %s49 = scalar_select %p46, %s47, %s48
    %p52 = pneg %p46
    %p53 = scmp.eq.s32.totalorder %s11, 1
    %p54 = por %p52, %p53
    %p55 = scmp.ne.s32.totalorder %s47, %s50
    %p56 = scmp.eq.s32.totalorder %s11, 0
    %p57 = por %p55, %p56
    %p58 = scmp.ne.s32.totalorder %s47, %s50
    %p59 = scmp.eq.s32.totalorder %s16, 1
    %p60 = por %p58, %p59
    %p61 = scmp.ne.s32.totalorder %s50, %s51
    %p62 = scmp.eq.s32.totalorder %s16, 0
    %p63 = por %p61, %p62
    %p64 = scmp.ne.s32.totalorder %s50, %s51
    %p65 = scmp.eq.s32.totalorder %s17, 1
    %p66 = por %p64, %p65
    %p68 = scmp.ne.s32.totalorder %s51, %s67
    %p69 = scmp.eq.s32.totalorder %s17, 0
    %p70 = por %p68, %p69
    %s72 = sadd.s32 %s71, 1
    %p75 = scmp.eq.s32.totalorder %s11, 1
    %p76 = scmp.ne.s32.totalorder %s71, %s73
    %p77 = scmp.eq.s32.totalorder %s11, 0
    %p78 = por %p76, %p77
    %p79 = scmp.ne.s32.totalorder %s71, %s73
    %p80 = scmp.eq.s32.totalorder %s16, 1
    %p81 = por %p79, %p80
    %p82 = scmp.ne.s32.totalorder %s73, %s74
    %p83 = scmp.eq.s32.totalorder %s16, 0
    %p84 = por %p82, %p83
    %p85 = scmp.ne.s32.totalorder %s73, %s74
    %p86 = scmp.eq.s32.totalorder %s17, 1
    %p87 = por %p85, %p86
    %p89 = scmp.ne.s32.totalorder %s74, %s88
    %p90 = scmp.eq.s32.totalorder %s17, 0
    %p91 = por %p89, %p90
    %s93 = sadd.s32 %s92, 1
    %p96 = scmp.eq.s32.totalorder %s11, 1
    %p97 = scmp.ne.s32.totalorder %s92, %s94
    %p98 = scmp.eq.s32.totalorder %s11, 0
    %p99 = por %p97, %p98
    %p100 = scmp.ne.s32.totalorder %s92, %s94
    %p101 = scmp.eq.s32.totalorder %s16, 1
    %p102 = por %p100, %p101
    %p103 = scmp.ne.s32.totalorder %s94, %s95
    %p104 = scmp.eq.s32.totalorder %s16, 0
    %p105 = por %p103, %p104
    %p106 = scmp.ne.s32.totalorder %s94, %s95
    %p107 = scmp.eq.s32.totalorder %s17, 1
    %p108 = por %p106, %p107
    %p110 = scmp.ne.s32.totalorder %s95, %s109
    %p111 = scmp.eq.s32.totalorder %s17, 0
    %p112 = por %p110, %p111
    %s114 = sadd.s32 %s113, 1
    %p117 = scmp.eq.s32.totalorder %s11, 1
    %p118 = scmp.ne.s32.totalorder %s113, %s115
    %p119 = scmp.eq.s32.totalorder %s11, 0
    %p120 = por %p118, %p119
    %p121 = scmp.ne.s32.totalorder %s113, %s115
    %p122 = scmp.eq.s32.totalorder %s16, 1
    %p123 = por %p121, %p122
    %p124 = scmp.ne.s32.totalorder %s115, %s116
    %p125 = scmp.eq.s32.totalorder %s16, 0
    %p126 = por %p124, %p125
    %p127 = scmp.ne.s32.totalorder %s115, %s116
    %p128 = scmp.eq.s32.totalorder %s17, 1
    %p129 = por %p127, %p128
    %p131 = scmp.ne.s32.totalorder %s116, %s130
    %p132 = scmp.eq.s32.totalorder %s17, 0
    %p133 = por %p131, %p132
    %s134 = ssub.s32 %s11, %s18
    %p135 = scmp.eq.s32.totalorder %s134, 0
    %s137 = sadd.s32 %s136, 1
    %s138 = scalar_select %p135, %s136, %s137
    %p141 = pneg %p135
    %p142 = scmp.eq.s32.totalorder %s11, 1
    %p143 = por %p141, %p142
    %p144 = scmp.ne.s32.totalorder %s136, %s139
    %p145 = scmp.eq.s32.totalorder %s11, 0
    %p146 = por %p144, %p145
    %p147 = scmp.ne.s32.totalorder %s136, %s139
    %p148 = scmp.eq.s32.totalorder %s16, 1
    %p149 = por %p147, %p148
    %p150 = scmp.ne.s32.totalorder %s139, %s140
    %p151 = scmp.eq.s32.totalorder %s16, 0
    %p152 = por %p150, %p151
    %p153 = scmp.ne.s32.totalorder %s139, %s140
    %p154 = scmp.eq.s32.totalorder %s17, 1
    %p155 = por %p153, %p154
    %p157 = scmp.ne.s32.totalorder %s140, %s156
    %p158 = scmp.eq.s32.totalorder %s17, 0
    %p159 = por %p157, %p158
    %p160 = scmp.le.s32.totalorder 1, %s11
    %p161 = scmp.lt.s32.totalorder %s11, 3
    %p162 = pnand %p160, %p161
    %p163 = pneg %p162
    // Predicated region
    $region9: #{csp_layer_forward.11} parent=5 // pred_check
      _
    $region10: #{csp_layer_forward.11} parent=5 // pred_check_branch
      %165 = sbr.rel (%p162) target = $region12
    $region11: #{csp_layer_forward.11} parent=5 // pred_region
      %s166 = ssub.s32 %s11, 1
      // Predicated region
      $region13: #{csp_layer_forward.11} parent=11 // pred_check
        %p167 = pneg %p84
      $region14: #{csp_layer_forward.11} parent=11 // pred_check_branch
        %169 = sbr.rel (%p167) target = $region16
      $region15: #{csp_layer_forward.11} parent=11 // pred_region
        _
      $region16: #{csp_layer_forward.11} parent=11 // pred_fallthru
        _
      // Predicated region
      $region17: #{csp_layer_forward.11} parent=11 // pred_check
        %p170 = pneg %p105
      $region18: #{csp_layer_forward.11} parent=11 // pred_check_branch
        %172 = sbr.rel (%p170) target = $region20
      $region19: #{csp_layer_forward.11} parent=11 // pred_region
        _
      $region20: #{csp_layer_forward.11} parent=11 // pred_fallthru
        _
      // Predicated region
      $region21: #{csp_layer_forward.11} parent=11 // pred_check
        %p173 = pneg %p126
      $region22: #{csp_layer_forward.11} parent=11 // pred_check_branch
        %175 = sbr.rel (%p173) target = $region24
      $region23: #{csp_layer_forward.11} parent=11 // pred_region
        _
      $region24: #{csp_layer_forward.11} parent=11 // pred_fallthru
        _
    $region12: #{csp_layer_forward.11} parent=5 // pred_fallthru
      _
    %p176 = scmp.lt.s32.totalorder %s11, 2
    // Predicated region
    $region25: #{csp_layer_forward.11} parent=5 // pred_check
      %p177 = pneg %p176
    $region26: #{csp_layer_forward.11} parent=5 // pred_check_branch
      %179 = sbr.rel (%p177) target = $region28
    $region27: #{csp_layer_forward.11} parent=5 // pred_region
      // Predicated region
      $region29: #{csp_layer_forward.11} parent=27 // pred_check
        %p180 = pneg %p31
      $region30: #{csp_layer_forward.11} parent=27 // pred_check_branch
        %182 = sbr.rel (%p180) target = $region32
      $region31: #{csp_layer_forward.11} parent=27 // pred_region
        %s183 = smul.u32 8, %s11
        %p184 = scmp.lt.s32.totalorder %s183, 15
        %s185 = scalar_select %p184, %s183, 15
        %s186 = smul.addr %s185, 4
        %s187 = scalar_lea.vmem %s0, %s186
        %s188 = smul.u32 8, %s11
      $region32: #{csp_layer_forward.11} parent=27 // pred_fallthru
        _
      // Predicated region
      $region33: #{csp_layer_forward.11} parent=27 // pred_check
        %p189 = pneg %p57
      $region34: #{csp_layer_forward.11} parent=27 // pred_check_branch
        %191 = sbr.rel (%p189) target = $region36
      $region35: #{csp_layer_forward.11} parent=27 // pred_region
        %s192 = smul.u32 8, %s11
        %p193 = scmp.lt.s32.totalorder %s192, 15
        %s194 = scalar_select %p193, %s192, 15
        %s195 = smul.addr %s194, 4
        %s196 = scalar_lea.vmem %s1, %s195
        %s197 = smul.u32 8, %s11
      $region36: #{csp_layer_forward.11} parent=27 // pred_fallthru
        _
    $region28: #{csp_layer_forward.11} parent=5 // pred_fallthru
      _
    %p198 = scmp.le.s32.totalorder 1, %s11
    %p199 = scmp.lt.s32.totalorder %s11, 3
    %p200 = pnand %p198, %p199
    %p201 = pneg %p200
    // Predicated region
    $region37: #{csp_layer_forward.11} parent=5 // pred_check
      _
    $region38: #{csp_layer_forward.11} parent=5 // pred_check_branch
      %203 = sbr.rel (%p200) target = $region40
    $region39: #{csp_layer_forward.11} parent=5 // pred_region
      %s204 = ssub.s32 %s11, 1
      %s205 = smul.u32 8, %s16
      %p206 = scmp.lt.s32.totalorder %s205, 15
      %s207 = scalar_select %p206, %s205, 15
      %s208 = smul.addr %s207, 4
      %s209 = scalar_lea.vmem %s0, %s208
      %p210 = pneg %p37
      %p211 = pneg %p34
      %s212 = smul.u32 8, %s16
      %p213 = scmp.lt.s32.totalorder %s212, 15
      %s214 = scalar_select %p213, %s212, 15
      %s215 = smul.addr %s214, 4
      %s216 = scalar_lea.vmem %s1, %s215
      %p217 = pneg %p63
      %p218 = pneg %p60
      %p219 = pneg %p84
      %p220 = pneg %p81
      %p221 = pneg %p105
      %p222 = pneg %p102
      %p223 = pneg %p126
      %p224 = pneg %p123
      %p225 = pneg %p152
      %p226 = pneg %p149
      %s227 = smul.u32 8, %s16
      %p228 = scmp.lt.s32.totalorder %s227, 15
      %s229 = scalar_select %p228, %s227, 15
      %s230 = smul.addr %s229, 4
      %s231 = scalar_lea.vmem %s5, %s230
      %s232 = smul.u32 8, %s16
      %p233 = scmp.lt.s32.totalorder %s232, 15
      %s234 = scalar_select %p233, %s232, 15
      %s235 = smul.addr %s234, 4
      %s236 = scalar_lea.vmem %s0, %s235
      %s237 = smul.u32 8, %s16
      %s238 = smul.u32 8, %s16
      %p239 = scmp.lt.s32.totalorder %s238, 15
      %s240 = scalar_select %p239, %s238, 15
      %s241 = smul.addr %s240, 4
      %s242 = scalar_lea.vmem %s1, %s241
      %s243 = smul.u32 8, %s16
      %s244 = smul.u32 8, %s16
      %p245 = scmp.lt.s32.totalorder %s244, 15
      %s246 = scalar_select %p245, %s244, 15
      %s247 = smul.addr %s246, 4
      %s248 = scalar_lea.vmem %s5, %s247
      %s249 = smul.u32 8, %s16
      %v251 = vld [vmem:[%s236] sm:$0xf]
      %v252 = vld [vmem:[%s236 + $0x4] sm:$0xf]
      %v253 = vld [vmem:[%s236 + $0x8] sm:$0xf]
      %v254 = vld [vmem:[%s236 + $0xc] sm:$0xf]
      %v255 = vld [vmem:[%s236 + $0x10] sm:$0xf]
      %v256 = vld [vmem:[%s236 + $0x14] sm:$0xf]
      %v257 = vld [vmem:[%s236 + $0x18] sm:$0xf]
      %v258 = vld [vmem:[%s236 + $0x1c] sm:$0xf]
      %v259 = vld [vmem:[%s2] sm:$0xf]
      %v260 = vld [vmem:[%s2 + $0x4] sm:$0xf]
      %v261 = vld [vmem:[%s2 + $0x8] sm:$0xf]
      %v262 = vld [vmem:[%s2 + $0xc] sm:$0xf]
      %v263 = vld [vmem:[%s2 + $0x10] sm:$0xf]
      %v264 = vld [vmem:[%s2 + $0x14] sm:$0xf]
      %v265 = vld [vmem:[%s2 + $0x18] sm:$0xf]
      %v266 = vld [vmem:[%s2 + $0x1c] sm:$0xf]
      %v267 = vld [vmem:[%s2 + $0x20] sm:$0xf]
      %v268 = vld [vmem:[%s2 + $0x24] sm:$0xf]
      %v269 = vld [vmem:[%s2 + $0x28] sm:$0xf]
      %v270 = vld [vmem:[%s2 + $0x2c] sm:$0xf]
      %v271 = vld [vmem:[%s2 + $0x30] sm:$0xf]
      %v272 = vld [vmem:[%s2 + $0x34] sm:$0xf]
      %v273 = vld [vmem:[%s2 + $0x38] sm:$0xf]
      %v274 = vld [vmem:[%s2 + $0x3c] sm:$0xf]
      %v275 = vld [vmem:[%s242] sm:$0xf]
      %v276 = vld [vmem:[%s242 + $0x4] sm:$0xf]
      %v277 = vld [vmem:[%s242 + $0x8] sm:$0xf]
      %v278 = vld [vmem:[%s242 + $0xc] sm:$0xf]
      %v279 = vld [vmem:[%s242 + $0x10] sm:$0xf]
      %v280 = vld [vmem:[%s242 + $0x14] sm:$0xf]
      %v281 = vld [vmem:[%s242 + $0x18] sm:$0xf]
      %v282 = vld [vmem:[%s242 + $0x1c] sm:$0xf]
      %v283 = vld [vmem:[%s3] sm:$0xf]
      %v284 = vld [vmem:[%s3 + $0x4] sm:$0xf]
      %v285 = vld [vmem:[%s3 + $0x8] sm:$0xf]
      %v286 = vld [vmem:[%s3 + $0xc] sm:$0xf]
      %v287 = vld [vmem:[%s3 + $0x10] sm:$0xf]
      %v288 = vld [vmem:[%s3 + $0x14] sm:$0xf]
      %v289 = vld [vmem:[%s3 + $0x18] sm:$0xf]
      %v290 = vld [vmem:[%s3 + $0x1c] sm:$0xf]
      %v291 = vld [vmem:[%s3 + $0x20] sm:$0xf]
      %v292 = vld [vmem:[%s3 + $0x24] sm:$0xf]
      %v293 = vld [vmem:[%s3 + $0x28] sm:$0xf]
      %v294 = vld [vmem:[%s3 + $0x2c] sm:$0xf]
      %v295 = vld [vmem:[%s3 + $0x30] sm:$0xf]
      %v296 = vld [vmem:[%s3 + $0x34] sm:$0xf]
      %v297 = vld [vmem:[%s3 + $0x38] sm:$0xf]
      %v298 = vld [vmem:[%s3 + $0x3c] sm:$0xf]
      %v307 = vunpack.c.l.b16 %v275
      %v308 = vunpack.c.l.b16 %v276
      %v309 = vunpack.c.l.b16 %v277
      %v310 = vunpack.c.l.b16 %v278
      %v311 = vunpack.c.l.b16 %v279
      %v312 = vunpack.c.l.b16 %v280
      %v313 = vunpack.c.l.b16 %v281
      %v314 = vunpack.c.l.b16 %v282
      %v315 = vpack.c.b16 %v308, %v307
      %v316 = vpack.c.b16 %v310, %v309
      %v317 = vpack.c.b16 %v312, %v311
      %v318 = vpack.c.b16 %v314, %v313
      %v339 = vunpack.c.l.b16 %v283
      %v340 = vunpack.c.l.b16 %v284
      %v341 = vunpack.c.l.b16 %v285
      %v342 = vunpack.c.l.b16 %v286
      %v343 = vunpack.c.l.b16 %v287
      %v344 = vunpack.c.l.b16 %v288
      %v345 = vunpack.c.l.b16 %v289
      %v346 = vunpack.c.l.b16 %v290
      %v347 = vunpack.c.l.b16 %v291
      %v348 = vunpack.c.l.b16 %v292
      %v349 = vunpack.c.l.b16 %v293
      %v350 = vunpack.c.l.b16 %v294
      %v351 = vunpack.c.l.b16 %v295
      %v352 = vunpack.c.l.b16 %v296
      %v353 = vunpack.c.l.b16 %v297
      %v354 = vunpack.c.l.b16 %v298
      %v355 = vpack.c.b16 %v340, %v339
      %v356 = vpack.c.b16 %v342, %v341
      %v357 = vpack.c.b16 %v344, %v343
      %v358 = vpack.c.b16 %v346, %v345
      %v359 = vpack.c.b16 %v348, %v347
      %v360 = vpack.c.b16 %v350, %v349
      %v361 = vpack.c.b16 %v352, %v351
      %v362 = vpack.c.b16 %v354, %v353
      %371 = vmatprep.subr.bf16.mxu0 0
      %372 = vmatpush1.bf16.msra.mxu0 %v355
      %373 = vmatprep.subr.bf16.mxu0 0
      %374 = vmatpush1.bf16.msra.mxu0 %v356
      %375 = vmatprep.subr.bf16.mxu0 0
      %376 = vmatpush1.bf16.msra.mxu0 %v357
      %377 = vmatprep.subr.bf16.mxu0 0
      %378 = vmatpush1.bf16.msra.mxu0 %v358
      %379 = vmatprep.subr.bf16.mxu0 0
      %380 = vmatpush1.bf16.msra.mxu0 %v359
      %381 = vmatprep.subr.bf16.mxu0 0
      %382 = vmatpush1.bf16.msra.mxu0 %v360
      %383 = vmatprep.subr.bf16.mxu0 0
      %384 = vmatpush1.bf16.msra.mxu0 %v361
      %385 = vmatprep.subr.bf16.mxu0 0
      %386 = vmatpush1.bf16.msra.mxu0 %v362
      %387 = vmatprep.subr.bf16.mxu0 0
      %388 = vmatpush1.bf16.msra.mxu0 0
      %389 = vmatprep.subr.bf16.mxu0 0
      %390 = vmatpush1.bf16.msra.mxu0 0
      %391 = vmatprep.subr.bf16.mxu0 0
      %392 = vmatpush1.bf16.msra.mxu0 0
      %393 = vmatprep.subr.bf16.mxu0 0
      %394 = vmatpush1.bf16.msra.mxu0 0
      %395 = vmatprep.subr.bf16.mxu0 0
      %396 = vmatpush1.bf16.msra.mxu0 0
      %397 = vmatprep.subr.bf16.mxu0 0
      %398 = vmatpush1.bf16.msra.mxu0 0
      %399 = vmatprep.subr.bf16.mxu0 0
      %400 = vmatpush1.bf16.msra.mxu0 0
      %401 = vmatprep.subr.bf16.mxu0 0
      %402 = vmatpush1.bf16.msra.mxu0 0
      %403 = vmatprep.mubr.bf16.mxu0 0
      %404 = vmatmul.mubr.bf16.gmra.mrb[0].mxu0 %v315
      %v405 = vpop.f32.mrb[0].mxu0
      %v406 = vadd.f32 0.0, %v405
      %v407 = vpop.f32.mrb[0].mxu0
      %v408 = vpop.f32.mrb[0].mxu0
      %v409 = vadd.f32 0.0, %v408
      %v410 = vpop.f32.mrb[0].mxu0
      %411 = vmatprep.mubr.bf16.mxu0 0
      %412 = vmatmul.mubr.bf16.gmra.mrb[0].mxu0 %v316
      %v413 = vpop.f32.mrb[0].mxu0
      %v414 = vadd.f32 0.0, %v413
      %v415 = vpop.f32.mrb[0].mxu0
      %v416 = vpop.f32.mrb[0].mxu0
      %v417 = vadd.f32 0.0, %v416
      %v418 = vpop.f32.mrb[0].mxu0
      %419 = vmatprep.mubr.bf16.mxu0 0
      %420 = vmatmul.mubr.bf16.gmra.mrb[0].mxu0 %v317
      %v421 = vpop.f32.mrb[0].mxu0
      %v422 = vadd.f32 0.0, %v421
      %v423 = vpop.f32.mrb[0].mxu0
      %v424 = vpop.f32.mrb[0].mxu0
      %v425 = vadd.f32 0.0, %v424
      %v426 = vpop.f32.mrb[0].mxu0
      %427 = vmatprep.mubr.bf16.mxu0 0
      %428 = vmatmul.mubr.bf16.gmra.mrb[0].mxu0 %v318
      %v429 = vpop.f32.mrb[0].mxu0
      %v430 = vadd.f32 0.0, %v429
      %v431 = vpop.f32.mrb[0].mxu0
      %v432 = vpop.f32.mrb[0].mxu0
      %v433 = vadd.f32 0.0, %v432
      %v434 = vpop.f32.mrb[0].mxu0
      %435 = vdwg.mxu0
      %v444 = vunpack.c.l.b16 %v251
      %v445 = vunpack.c.l.b16 %v252
      %v446 = vunpack.c.l.b16 %v253
      %v447 = vunpack.c.l.b16 %v254
      %v448 = vunpack.c.l.b16 %v255
      %v449 = vunpack.c.l.b16 %v256
      %v450 = vunpack.c.l.b16 %v257
      %v451 = vunpack.c.l.b16 %v258
      %v452 = vpack.c.b16 %v445, %v444
      %v453 = vpack.c.b16 %v447, %v446
      %v454 = vpack.c.b16 %v449, %v448
      %v455 = vpack.c.b16 %v451, %v450
      %v476 = vunpack.c.l.b16 %v259
      %v477 = vunpack.c.l.b16 %v260
      %v478 = vunpack.c.l.b16 %v261
      %v479 = vunpack.c.l.b16 %v262
      %v480 = vunpack.c.l.b16 %v263
      %v481 = vunpack.c.l.b16 %v264
      %v482 = vunpack.c.l.b16 %v265
      %v483 = vunpack.c.l.b16 %v266
      %v484 = vunpack.c.l.b16 %v267
      %v485 = vunpack.c.l.b16 %v268
      %v486 = vunpack.c.l.b16 %v269
      %v487 = vunpack.c.l.b16 %v270
      %v488 = vunpack.c.l.b16 %v271
      %v489 = vunpack.c.l.b16 %v272
      %v490 = vunpack.c.l.b16 %v273
      %v491 = vunpack.c.l.b16 %v274
      %v492 = vpack.c.b16 %v477, %v476
      %v493 = vpack.c.b16 %v479, %v478
      %v494 = vpack.c.b16 %v481, %v480
      %v495 = vpack.c.b16 %v483, %v482
      %v496 = vpack.c.b16 %v485, %v484
      %v497 = vpack.c.b16 %v487, %v486
      %v498 = vpack.c.b16 %v489, %v488
      %v499 = vpack.c.b16 %v491, %v490
      %508 = vmatprep.subr.bf16.mxu0 0
      %509 = vmatpush1.bf16.msra.mxu0 %v492
      %510 = vmatprep.subr.bf16.mxu0 0
      %511 = vmatpush1.bf16.msra.mxu0 %v493
      %512 = vmatprep.subr.bf16.mxu0 0
      %513 = vmatpush1.bf16.msra.mxu0 %v494
      %514 = vmatprep.subr.bf16.mxu0 0
      %515 = vmatpush1.bf16.msra.mxu0 %v495
      %516 = vmatprep.subr.bf16.mxu0 0
      %517 = vmatpush1.bf16.msra.mxu0 %v496
      %518 = vmatprep.subr.bf16.mxu0 0
      %519 = vmatpush1.bf16.msra.mxu0 %v497
      %520 = vmatprep.subr.bf16.mxu0 0
      %521 = vmatpush1.bf16.msra.mxu0 %v498
      %522 = vmatprep.subr.bf16.mxu0 0
      %523 = vmatpush1.bf16.msra.mxu0 %v499
      %524 = vmatprep.subr.bf16.mxu0 0
      %525 = vmatpush1.bf16.msra.mxu0 0
      %526 = vmatprep.subr.bf16.mxu0 0
      %527 = vmatpush1.bf16.msra.mxu0 0
      %528 = vmatprep.subr.bf16.mxu0 0
      %529 = vmatpush1.bf16.msra.mxu0 0
      %530 = vmatprep.subr.bf16.mxu0 0
      %531 = vmatpush1.bf16.msra.mxu0 0
      %532 = vmatprep.subr.bf16.mxu0 0
      %533 = vmatpush1.bf16.msra.mxu0 0
      %534 = vmatprep.subr.bf16.mxu0 0
      %535 = vmatpush1.bf16.msra.mxu0 0
      %536 = vmatprep.subr.bf16.mxu0 0
      %537 = vmatpush1.bf16.msra.mxu0 0
      %538 = vmatprep.subr.bf16.mxu0 0
      %539 = vmatpush1.bf16.msra.mxu0 0
      %540 = vmatprep.mubr.bf16.mxu0 0
      %541 = vmatmul.mubr.bf16.gmra.mrb[0].mxu0 %v452
      %v542 = vpop.f32.mrb[0].mxu0
      %v543 = vadd.f32 %v406, %v542
      %v544 = vpop.f32.mrb[0].mxu0
      %v545 = vpop.f32.mrb[0].mxu0
      %v546 = vadd.f32 %v409, %v545
      %v547 = vpop.f32.mrb[0].mxu0
      %548 = vmatprep.mubr.bf16.mxu0 0
      %549 = vmatmul.mubr.bf16.gmra.mrb[0].mxu0 %v453
      %v550 = vpop.f32.mrb[0].mxu0
      %v551 = vadd.f32 %v414, %v550
      %v552 = vpop.f32.mrb[0].mxu0
      %v553 = vpop.f32.mrb[0].mxu0
      %v554 = vadd.f32 %v417, %v553
      %v555 = vpop.f32.mrb[0].mxu0
      %556 = vmatprep.mubr.bf16.mxu0 0
      %557 = vmatmul.mubr.bf16.gmra.mrb[0].mxu0 %v454
      %v558 = vpop.f32.mrb[0].mxu0
      %v559 = vadd.f32 %v422, %v558
      %v560 = vpop.f32.mrb[0].mxu0
      %v561 = vpop.f32.mrb[0].mxu0
      %v562 = vadd.f32 %v425, %v561
      %v563 = vpop.f32.mrb[0].mxu0
      %564 = vmatprep.mubr.bf16.mxu0 0
      %565 = vmatmul.mubr.bf16.gmra.mrb[0].mxu0 %v455
      %v566 = vpop.f32.mrb[0].mxu0
      %v567 = vadd.f32 %v430, %v566
      %v568 = vpop.f32.mrb[0].mxu0
      %v569 = vpop.f32.mrb[0].mxu0
      %v570 = vadd.f32 %v433, %v569
      %v571 = vpop.f32.mrb[0].mxu0
      %572 = vdwg.mxu0
      %v573 = vld [vmem:[%s4] sm:$0x1]
      %v575 = vlaneseq
      %v576 = vshrl.u32 %v575, 7
      %v577 = vsub.s32 0, %v576
      %v578 = vrot.slane %v573, %v577
      %v580 = vadd.f32 %v543, %v578
      %v581 = vadd.f32 %v546, %v578
      %v582 = vadd.f32 %v551, %v578
      %v583 = vadd.f32 %v554, %v578
      %v584 = vadd.f32 %v559, %v578
      %v585 = vadd.f32 %v562, %v578
      %v586 = vadd.f32 %v567, %v578
      %v587 = vadd.f32 %v570, %v578
      %v588 = vmin.f32 %v580, 20.0
      %v589 = vmin.f32 %v581, 20.0
      %v590 = vmin.f32 %v582, 20.0
      %v591 = vmin.f32 %v583, 20.0
      %v592 = vmin.f32 %v584, 20.0
      %v593 = vmin.f32 %v585, 20.0
      %v594 = vmin.f32 %v586, 20.0
      %v595 = vmin.f32 %v587, 20.0
      %v596 = vmul.f32 %v588, 1.442695
      %v597 = vpow.pop %v596
      %v598 = vmul.f32 %v589, 1.442695
      %v599 = vpow.pop %v598
      %v600 = vmul.f32 %v590, 1.442695
      %v601 = vpow.pop %v600
      %v602 = vmul.f32 %v591, 1.442695
      %v603 = vpow.pop %v602
      %v604 = vmul.f32 %v592, 1.442695
      %v605 = vpow.pop %v604
      %v606 = vmul.f32 %v593, 1.442695
      %v607 = vpow.pop %v606
      %v608 = vmul.f32 %v594, 1.442695
      %v609 = vpow.pop %v608
      %v610 = vmul.f32 %v595, 1.442695
      %v611 = vpow.pop %v610
      %v612 = vadd.f32 %v597, 1.0
      %v613 = vadd.f32 %v599, 1.0
      %v614 = vadd.f32 %v601, 1.0
      %v615 = vadd.f32 %v603, 1.0
      %v616 = vadd.f32 %v605, 1.0
      %v617 = vadd.f32 %v607, 1.0
      %v618 = vadd.f32 %v609, 1.0
      %v619 = vadd.f32 %v611, 1.0
      %v620 = vmul.f32 %v612, %v612
      %v621 = vmul.f32 %v613, %v613
      %v622 = vmul.f32 %v614, %v614
      %v623 = vmul.f32 %v615, %v615
      %v624 = vmul.f32 %v616, %v616
      %v625 = vmul.f32 %v617, %v617
      %v626 = vmul.f32 %v618, %v618
      %v627 = vmul.f32 %v619, %v619
      %v628 = vsub.f32 %v620, 1.0
      %v629 = vsub.f32 %v621, 1.0
      %v630 = vsub.f32 %v622, 1.0
      %v631 = vsub.f32 %v623, 1.0
      %v632 = vsub.f32 %v624, 1.0
      %v633 = vsub.f32 %v625, 1.0
      %v634 = vsub.f32 %v626, 1.0
      %v635 = vsub.f32 %v627, 1.0
      %v636 = vadd.f32 %v620, 1.0
      %v637 = vadd.f32 %v621, 1.0
      %v638 = vadd.f32 %v622, 1.0
      %v639 = vadd.f32 %v623, 1.0
      %v640 = vadd.f32 %v624, 1.0
      %v641 = vadd.f32 %v625, 1.0
      %v642 = vadd.f32 %v626, 1.0
      %v643 = vadd.f32 %v627, 1.0
      %v644 = vrcp.pop %v636
      %v645 = vrcp.pop %v637
      %v646 = vrcp.pop %v638
      %v647 = vrcp.pop %v639
      %v648 = vrcp.pop %v640
      %v649 = vrcp.pop %v641
      %v650 = vrcp.pop %v642
      %v651 = vrcp.pop %v643
      %v652 = vmul.f32 %v628, %v644
      %v653 = vmul.f32 %v629, %v645
      %v654 = vmul.f32 %v630, %v646
      %v655 = vmul.f32 %v631, %v647
      %v656 = vmul.f32 %v632, %v648
      %v657 = vmul.f32 %v633, %v649
      %v658 = vmul.f32 %v634, %v650
      %v659 = vmul.f32 %v635, %v651
      %vm660 = vcmp.gt.f32.partialorder %v580, 20.0
      %vm661 = vcmp.gt.f32.partialorder %v581, 20.0
      %vm662 = vcmp.gt.f32.partialorder %v582, 20.0
      %vm663 = vcmp.gt.f32.partialorder %v583, 20.0
      %vm664 = vcmp.gt.f32.partialorder %v584, 20.0
      %vm665 = vcmp.gt.f32.partialorder %v585, 20.0
      %vm666 = vcmp.gt.f32.partialorder %v586, 20.0
      %vm667 = vcmp.gt.f32.partialorder %v587, 20.0
      %v668 = vmul.f32 %v580, %v652
      %v669 = vmul.f32 %v581, %v653
      %v670 = vmul.f32 %v582, %v654
      %v671 = vmul.f32 %v583, %v655
      %v672 = vmul.f32 %v584, %v656
      %v673 = vmul.f32 %v585, %v657
      %v674 = vmul.f32 %v586, %v658
      %v675 = vmul.f32 %v587, %v659
      %v676 = vsel %vm660, %v580, %v668
      %v677 = vsel %vm661, %v581, %v669
      %v678 = vsel %vm662, %v582, %v670
      %v679 = vsel %vm663, %v583, %v671
      %v680 = vsel %vm664, %v584, %v672
      %v681 = vsel %vm665, %v585, %v673
      %v682 = vsel %vm666, %v586, %v674
      %v683 = vsel %vm667, %v587, %v675
      %v684 = vpack.c.bf16 %v677, %v676
      %v685 = vpack.c.bf16 %v679, %v678
      %v686 = vpack.c.bf16 %v681, %v680
      %v687 = vpack.c.bf16 %v683, %v682
      %v692 = vunpack.c.l.b16 %v684
      %v693 = vunpack.c.h.b16 %v684
      %v694 = vunpack.c.l.b16 %v685
      %v695 = vunpack.c.h.b16 %v685
      %v696 = vunpack.c.l.b16 %v686
      %v697 = vunpack.c.h.b16 %v686
      %v698 = vunpack.c.l.b16 %v687
      %v699 = vunpack.c.h.b16 %v687
      %v700 = vpack.c.b16 %v692, %v692
      %v701 = vpack.c.b16 %v693, %v693
      %v702 = vpack.c.b16 %v694, %v694
      %v703 = vpack.c.b16 %v695, %v695
      %v704 = vpack.c.b16 %v696, %v696
      %v705 = vpack.c.b16 %v697, %v697
      %v706 = vpack.c.b16 %v698, %v698
      %v707 = vpack.c.b16 %v699, %v699
      %716 = vst [vmem:[%s248] sm:$0xf] %v700
      %717 = vst [vmem:[%s248 + $0x4] sm:$0xf] %v701
      %718 = vst [vmem:[%s248 + $0x8] sm:$0xf] %v702
      %719 = vst [vmem:[%s248 + $0xc] sm:$0xf] %v703
      %720 = vst [vmem:[%s248 + $0x10] sm:$0xf] %v704
      %721 = vst [vmem:[%s248 + $0x14] sm:$0xf] %v705
      %722 = vst [vmem:[%s248 + $0x18] sm:$0xf] %v706
      %723 = vst [vmem:[%s248 + $0x1c] sm:$0xf] %v707
      %s724 = smul.u32 8, %s16
      %p725 = scmp.lt.s32.totalorder %s724, 15
      %s726 = scalar_select %p725, %s724, 15
      %s727 = smul.addr %s726, 4
      %s728 = scalar_lea.vmem %s5, %s727
      // Predicated region
      $region41: #{csp_layer_forward.11} parent=39 // pred_check
        %p729 = pneg %p149
      $region42: #{csp_layer_forward.11} parent=39 // pred_check_branch
        %731 = sbr.rel (%p729) target = $region44
      $region43: #{csp_layer_forward.11} parent=39 // pred_region
        %s732 = smul.u32 8, %s16
      $region44: #{csp_layer_forward.11} parent=39 // pred_fallthru
        _
    $region40: #{csp_layer_forward.11} parent=5 // pred_fallthru
      _
    %p733 = scmp.le.s32.totalorder 2, %s11
    // Predicated region
    $region45: #{csp_layer_forward.11} parent=5 // pred_check
      %p734 = pneg %p733
    $region46: #{csp_layer_forward.11} parent=5 // pred_check_branch
      %736 = sbr.rel (%p734) target = $region48
    $region47: #{csp_layer_forward.11} parent=5 // pred_region
      %s737 = ssub.s32 %s11, 2
      // Predicated region
      $region49: #{csp_layer_forward.11} parent=47 // pred_check
        %p738 = pneg %p155
      $region50: #{csp_layer_forward.11} parent=47 // pred_check_branch
        %740 = sbr.rel (%p738) target = $region52
      $region51: #{csp_layer_forward.11} parent=47 // pred_region
        %s741 = smul.u32 8, %s17
        %p742 = scmp.lt.s32.totalorder %s741, 15
        %s743 = scalar_select %p742, %s741, 15
        %s744 = smul.addr %s743, 4
        %s745 = scalar_lea.vmem %s5, %s744
      $region52: #{csp_layer_forward.11} parent=47 // pred_fallthru
        _
    $region48: #{csp_layer_forward.11} parent=5 // pred_fallthru
      _
  $region6: #{csp_layer_forward.11} parent=0 // loop_footer
    %s15 = sadd.s32 1, %s11
  $region7: #{csp_layer_forward.11} parent=0 // loop_footer_branch
    %10 = sbr.rel target = $region3
  $region8: #{csp_layer_forward.11} parent=0 // loop_exit
    _

// kernel: csp_layer_forward.9
$region0: #{csp_layer_forward.9}
  #allocation0 [shape = 'u32[]', space=smem, size = 0x4, offset = 0x4, fixed_abs, tag = 'smem constant byte address 0x4 - core index']
  #allocation1 [shape = 'u32[144,128]{1,0:T(1,128)}', space=vmem, size = 0x12000, scoped, tag = 'internal scratch']
  %s0 = inlined_call_operand.vmem [shape: bf16[2,10,10,128], index: 0, kind: input, shape index: {}, may-alias: {0,1,2}]
  %s1 = inlined_call_operand.vmem [shape: bf16[2,10,10,128], index: 1, kind: input, shape index: {}, may-alias: {0,1,2}]
  %s2 = inlined_call_operand.vmem [shape: bf16[2,10,10,128], index: 2, kind: input, shape index: {}, may-alias: {0,1,2}]
  %s3 = inlined_call_operand.vmem [shape: bf16[1152,128], index: 3, kind: input, shape index: {}]
  %s4 = inlined_call_operand.vmem [shape: f32[1,128], index: 4, kind: input, shape index: {}]
  %s5 = inlined_call_operand.vmem [shape: bf16[2,8,8,128], index: 5, kind: input, shape index: {}]
  %s6 = inlined_call_operand.vmem [shape: bf16[2,8,8,128], index: 6, kind: output, shape index: {}]
  %s7 = sld [smem:[#allocation0]]
  $region57: #{csp_layer_forward.9} parent=0
    _
  %s9 = ssub.s32 1, %s7
  %s10 = scalar_select 0, %s9, %s7
  loop: start=0, step=1, limit=18
  $region2: #{csp_layer_forward.9} parent=0 // loop_pre_header
    _
  $region3: #{csp_layer_forward.9} parent=0 // loop_header
    %s12 = sphi 0, %s16
    %p13 = scmp.ge.s32.totalorder %s12, 18
    %s19 = sphi 0, %s31
    %s20 = sphi 0, %s27
    %s21 = sphi 0, %s19
    %s22 = sphi 0, %s20
    %s23 = sphi 0, %s21
    %s24 = sphi 0, %s22
    %s36 = sphi 0, %s38
    %s39 = sphi 0, %s36
    %s40 = sphi 0, %s39
    %s56 = sphi 0, %s40
    %s66 = sphi 0, %s68
    %s69 = sphi 0, %s66
    %s70 = sphi 0, %s69
    %s86 = sphi 0, %s70
    %s96 = sphi 0, %s98
    %s99 = sphi 0, %s96
    %s100 = sphi 0, %s99
    %s116 = sphi 0, %s100
    %s120 = sphi 0, %s120
    %s122 = sphi 0, %s120
    %s123 = sphi 0, %s122
    %s137 = sphi 0, %s123
    %s141 = sphi 0, %s141
    %s143 = sphi 0, %s141
    %s144 = sphi 0, %s143
    %s158 = sphi 0, %s144
    %s166 = sphi 0, %s168
    %s169 = sphi 0, %s166
    %s170 = sphi 0, %s169
    %s186 = sphi 0, %s170
    %s194 = sphi 0, %s196
    %s197 = sphi 0, %s194
    %s198 = sphi 0, %s197
    %s214 = sphi 0, %s198
  $region4: #{csp_layer_forward.9} parent=0 // loop_header_branch
    %15 = sbr.rel (%p13) target = $region8
  $region5: #{csp_layer_forward.9} parent=0 // loop_body
    %s17 = ssub.s32 %s12, 1
    %s18 = ssub.s32 %s12, 2
    %s25 = sadd.s32 1, %s20
    %p26 = scmp.ge.s32.totalorder %s25, 8
    %s27 = scalar_select %p26, 0, %s25
    %s28 = sadd.s32 1, %s19
    %s29 = scalar_select %p26, %s28, %s19
    %p30 = scmp.ge.s32.totalorder %s29, 2
    %s31 = scalar_select %p30, 0, %s29
    %s32 = ssub.s32 %s19, %s31
    %s33 = ssub.s32 %s20, %s27
    %s34 = sor.u32 %s32, %s33
    %p35 = scmp.eq.s32.totalorder %s34, 0
    %s37 = sadd.s32 %s36, 1
    %s38 = scalar_select %p35, %s36, %s37
    %p41 = pneg %p35
    %p42 = scmp.eq.s32.totalorder %s12, 15
    %p43 = por %p41, %p42
    %p44 = scmp.ne.s32.totalorder %s36, %s39
    %p45 = scmp.eq.s32.totalorder %s12, 0
    %p46 = por %p44, %p45
    %p47 = scmp.ne.s32.totalorder %s36, %s39
    %p48 = scmp.eq.s32.totalorder %s17, 15
    %p49 = por %p47, %p48
    %p50 = scmp.ne.s32.totalorder %s39, %s40
    %p51 = scmp.eq.s32.totalorder %s17, 0
    %p52 = por %p50, %p51
    %p53 = scmp.ne.s32.totalorder %s39, %s40
    %p54 = scmp.eq.s32.totalorder %s18, 15
    %p55 = por %p53, %p54
    %p57 = scmp.ne.s32.totalorder %s40, %s56
    %p58 = scmp.eq.s32.totalorder %s18, 0
    %p59 = por %p57, %p58
    %s60 = sadd.s32 %s20, 1
    %s61 = sadd.s32 %s27, 1
    %s62 = ssub.s32 %s19, %s31
    %s63 = ssub.s32 %s60, %s61
    %s64 = sor.u32 %s62, %s63
    %p65 = scmp.eq.s32.totalorder %s64, 0
    %s67 = sadd.s32 %s66, 1
    %s68 = scalar_select %p65, %s66, %s67
    %p71 = pneg %p65
    %p72 = scmp.eq.s32.totalorder %s12, 15
    %p73 = por %p71, %p72
    %p74 = scmp.ne.s32.totalorder %s66, %s69
    %p75 = scmp.eq.s32.totalorder %s12, 0
    %p76 = por %p74, %p75
    %p77 = scmp.ne.s32.totalorder %s66, %s69
    %p78 = scmp.eq.s32.totalorder %s17, 15
    %p79 = por %p77, %p78
    %p80 = scmp.ne.s32.totalorder %s69, %s70
    %p81 = scmp.eq.s32.totalorder %s17, 0
    %p82 = por %p80, %p81
    %p83 = scmp.ne.s32.totalorder %s69, %s70
    %p84 = scmp.eq.s32.totalorder %s18, 15
    %p85 = por %p83, %p84
    %p87 = scmp.ne.s32.totalorder %s70, %s86
    %p88 = scmp.eq.s32.totalorder %s18, 0
    %p89 = por %p87, %p88
    %s90 = sadd.s32 %s20, 2
    %s91 = sadd.s32 %s27, 2
    %s92 = ssub.s32 %s19, %s31
    %s93 = ssub.s32 %s90, %s91
    %s94 = sor.u32 %s92, %s93
    %p95 = scmp.eq.s32.totalorder %s94, 0
    %s97 = sadd.s32 %s96, 1
    %s98 = scalar_select %p95, %s96, %s97
    %p101 = pneg %p95
    %p102 = scmp.eq.s32.totalorder %s12, 15
    %p103 = por %p101, %p102
    %p104 = scmp.ne.s32.totalorder %s96, %s99
    %p105 = scmp.eq.s32.totalorder %s12, 0
    %p106 = por %p104, %p105
    %p107 = scmp.ne.s32.totalorder %s96, %s99
    %p108 = scmp.eq.s32.totalorder %s17, 15
    %p109 = por %p107, %p108
    %p110 = scmp.ne.s32.totalorder %s99, %s100
    %p111 = scmp.eq.s32.totalorder %s17, 0
    %p112 = por %p110, %p111
    %p113 = scmp.ne.s32.totalorder %s99, %s100
    %p114 = scmp.eq.s32.totalorder %s18, 15
    %p115 = por %p113, %p114
    %p117 = scmp.ne.s32.totalorder %s100, %s116
    %p118 = scmp.eq.s32.totalorder %s18, 0
    %p119 = por %p117, %p118
    %s121 = sadd.s32 %s120, 1
    %p124 = scmp.eq.s32.totalorder %s12, 15
    %p125 = scmp.ne.s32.totalorder %s120, %s122
    %p126 = scmp.eq.s32.totalorder %s12, 0
    %p127 = por %p125, %p126
    %p128 = scmp.ne.s32.totalorder %s120, %s122
    %p129 = scmp.eq.s32.totalorder %s17, 15
    %p130 = por %p128, %p129
    %p131 = scmp.ne.s32.totalorder %s122, %s123
    %p132 = scmp.eq.s32.totalorder %s17, 0
    %p133 = por %p131, %p132
    %p134 = scmp.ne.s32.totalorder %s122, %s123
    %p135 = scmp.eq.s32.totalorder %s18, 15
    %p136 = por %p134, %p135
    %p138 = scmp.ne.s32.totalorder %s123, %s137
    %p139 = scmp.eq.s32.totalorder %s18, 0
    %p140 = por %p138, %p139
    %s142 = sadd.s32 %s141, 1
    %p145 = scmp.eq.s32.totalorder %s12, 15
    %p146 = scmp.ne.s32.totalorder %s141, %s143
    %p147 = scmp.eq.s32.totalorder %s12, 0
    %p148 = por %p146, %p147
    %p149 = scmp.ne.s32.totalorder %s141, %s143
    %p150 = scmp.eq.s32.totalorder %s17, 15
    %p151 = por %p149, %p150
    %p152 = scmp.ne.s32.totalorder %s143, %s144
    %p153 = scmp.eq.s32.totalorder %s17, 0
    %p154 = por %p152, %p153
    %p155 = scmp.ne.s32.totalorder %s143, %s144
    %p156 = scmp.eq.s32.totalorder %s18, 15
    %p157 = por %p155, %p156
    %p159 = scmp.ne.s32.totalorder %s144, %s158
    %p160 = scmp.eq.s32.totalorder %s18, 0
    %p161 = por %p159, %p160
    %s162 = ssub.s32 %s19, %s31
    %s163 = ssub.s32 %s20, %s27
    %s164 = sor.u32 %s162, %s163
    %p165 = scmp.eq.s32.totalorder %s164, 0
    %s167 = sadd.s32 %s166, 1
    %s168 = scalar_select %p165, %s166, %s167
    %p171 = pneg %p165
    %p172 = scmp.eq.s32.totalorder %s12, 15
    %p173 = por %p171, %p172
    %p174 = scmp.ne.s32.totalorder %s166, %s169
    %p175 = scmp.eq.s32.totalorder %s12, 0
    %p176 = por %p174, %p175
    %p177 = scmp.ne.s32.totalorder %s166, %s169
    %p178 = scmp.eq.s32.totalorder %s17, 15
    %p179 = por %p177, %p178
    %p180 = scmp.ne.s32.totalorder %s169, %s170
    %p181 = scmp.eq.s32.totalorder %s17, 0
    %p182 = por %p180, %p181
    %p183 = scmp.ne.s32.totalorder %s169, %s170
    %p184 = scmp.eq.s32.totalorder %s18, 15
    %p185 = por %p183, %p184
    %p187 = scmp.ne.s32.totalorder %s170, %s186
    %p188 = scmp.eq.s32.totalorder %s18, 0
    %p189 = por %p187, %p188
    %s190 = ssub.s32 %s19, %s31
    %s191 = ssub.s32 %s20, %s27
    %s192 = sor.u32 %s190, %s191
    %p193 = scmp.eq.s32.totalorder %s192, 0
    %s195 = sadd.s32 %s194, 1
    %s196 = scalar_select %p193, %s194, %s195
    %p199 = pneg %p193
    %p200 = scmp.eq.s32.totalorder %s12, 15
    %p201 = por %p199, %p200
    %p202 = scmp.ne.s32.totalorder %s194, %s197
    %p203 = scmp.eq.s32.totalorder %s12, 0
    %p204 = por %p202, %p203
    %p205 = scmp.ne.s32.totalorder %s194, %s197
    %p206 = scmp.eq.s32.totalorder %s17, 15
    %p207 = por %p205, %p206
    %p208 = scmp.ne.s32.totalorder %s197, %s198
    %p209 = scmp.eq.s32.totalorder %s17, 0
    %p210 = por %p208, %p209
    %p211 = scmp.ne.s32.totalorder %s197, %s198
    %p212 = scmp.eq.s32.totalorder %s18, 15
    %p213 = por %p211, %p212
    %p215 = scmp.ne.s32.totalorder %s198, %s214
    %p216 = scmp.eq.s32.totalorder %s18, 0
    %p217 = por %p215, %p216
    %p218 = scmp.le.s32.totalorder 1, %s12
    %p219 = scmp.lt.s32.totalorder %s12, 17
    %p220 = pnand %p218, %p219
    %p221 = pneg %p220
    // Predicated region
    $region9: #{csp_layer_forward.9} parent=5 // pred_check
      _
    $region10: #{csp_layer_forward.9} parent=5 // pred_check_branch
      %223 = sbr.rel (%p220) target = $region12
    $region11: #{csp_layer_forward.9} parent=5 // pred_region
      %s224 = ssub.s32 %s12, 1
      // Predicated region
      $region13: #{csp_layer_forward.9} parent=11 // pred_check
        %p225 = pneg %p133
      $region14: #{csp_layer_forward.9} parent=11 // pred_check_branch
        %227 = sbr.rel (%p225) target = $region16
      $region15: #{csp_layer_forward.9} parent=11 // pred_region
        _
      $region16: #{csp_layer_forward.9} parent=11 // pred_fallthru
        _
      // Predicated region
      $region17: #{csp_layer_forward.9} parent=11 // pred_check
        %p228 = pneg %p154
      $region18: #{csp_layer_forward.9} parent=11 // pred_check_branch
        %230 = sbr.rel (%p228) target = $region20
      $region19: #{csp_layer_forward.9} parent=11 // pred_region
        _
      $region20: #{csp_layer_forward.9} parent=11 // pred_fallthru
        _
    $region12: #{csp_layer_forward.9} parent=5 // pred_fallthru
      _
    %p231 = scmp.lt.s32.totalorder %s12, 16
    // Predicated region
    $region21: #{csp_layer_forward.9} parent=5 // pred_check
      %p232 = pneg %p231
    $region22: #{csp_layer_forward.9} parent=5 // pred_check_branch
      %234 = sbr.rel (%p232) target = $region24
    $region23: #{csp_layer_forward.9} parent=5 // pred_region
      // Predicated region
      $region25: #{csp_layer_forward.9} parent=23 // pred_check
        %p235 = pneg %p46
      $region26: #{csp_layer_forward.9} parent=23 // pred_check_branch
        %237 = sbr.rel (%p235) target = $region28
      $region27: #{csp_layer_forward.9} parent=23 // pred_region
        %p238 = scmp.lt.s32.totalorder %s19, 1
        %s239 = scalar_select %p238, %s19, 1
        %p240 = scmp.lt.s32.totalorder %s20, 9
        %s241 = scalar_select %p240, %s20, 9
        %s242 = smul.addr %s241, 2
        %s243 = smul.addr %s239, 20
        %s244 = sadd.s32 %s242, %s243
        %s245 = smul.addr %s244, 4
        %s246 = scalar_lea.vmem %s0, %s245
      $region28: #{csp_layer_forward.9} parent=23 // pred_fallthru
        _
      // Predicated region
      $region29: #{csp_layer_forward.9} parent=23 // pred_check
        %p247 = pneg %p76
      $region30: #{csp_layer_forward.9} parent=23 // pred_check_branch
        %249 = sbr.rel (%p247) target = $region32
      $region31: #{csp_layer_forward.9} parent=23 // pred_region
        %s250 = sadd.s32 %s20, 1
        %p251 = scmp.lt.s32.totalorder %s19, 1
        %s252 = scalar_select %p251, %s19, 1
        %p253 = scmp.lt.s32.totalorder %s250, 9
        %s254 = scalar_select %p253, %s250, 9
        %s255 = smul.addr %s254, 2
        %s256 = smul.addr %s252, 20
        %s257 = sadd.s32 %s255, %s256
        %s258 = smul.addr %s257, 4
        %s259 = scalar_lea.vmem %s1, %s258
        %s260 = sadd.s32 %s20, 1
      $region32: #{csp_layer_forward.9} parent=23 // pred_fallthru
        _
      // Predicated region
      $region33: #{csp_layer_forward.9} parent=23 // pred_check
        %p261 = pneg %p106
      $region34: #{csp_layer_forward.9} parent=23 // pred_check_branch
        %263 = sbr.rel (%p261) target = $region36
      $region35: #{csp_layer_forward.9} parent=23 // pred_region
        %s264 = sadd.s32 %s20, 2
        %p265 = scmp.lt.s32.totalorder %s19, 1
        %s266 = scalar_select %p265, %s19, 1
        %p267 = scmp.lt.s32.totalorder %s264, 9
        %s268 = scalar_select %p267, %s264, 9
        %s269 = smul.addr %s268, 2
        %s270 = smul.addr %s266, 20
        %s271 = sadd.s32 %s269, %s270
        %s272 = smul.addr %s271, 4
        %s273 = scalar_lea.vmem %s2, %s272
        %s274 = sadd.s32 %s20, 2
      $region36: #{csp_layer_forward.9} parent=23 // pred_fallthru
        _
      // Predicated region
      $region37: #{csp_layer_forward.9} parent=23 // pred_check
        %p275 = pneg %p176
      $region38: #{csp_layer_forward.9} parent=23 // pred_check_branch
        %277 = sbr.rel (%p275) target = $region40
      $region39: #{csp_layer_forward.9} parent=23 // pred_region
        %p278 = scmp.lt.s32.totalorder %s19, 1
        %s279 = scalar_select %p278, %s19, 1
        %p280 = scmp.lt.s32.totalorder %s20, 7
        %s281 = scalar_select %p280, %s20, 7
        %s282 = smul.addr %s279, 8
        %s283 = sadd.s32 %s281, %s282
        %s284 = smul.addr %s283, 4
        %s285 = scalar_lea.vmem %s5, %s284
      $region40: #{csp_layer_forward.9} parent=23 // pred_fallthru
        _
    $region24: #{csp_layer_forward.9} parent=5 // pred_fallthru
      _
    %p286 = scmp.le.s32.totalorder 1, %s12
    %p287 = scmp.lt.s32.totalorder %s12, 17
    %p288 = pnand %p286, %p287
    %p289 = pneg %p288
    // Predicated region
    $region41: #{csp_layer_forward.9} parent=5 // pred_check
      _
    $region42: #{csp_layer_forward.9} parent=5 // pred_check_branch
      %291 = sbr.rel (%p288) target = $region44
    $region43: #{csp_layer_forward.9} parent=5 // pred_region
      %s292 = ssub.s32 %s12, 1
      %p293 = scmp.lt.s32.totalorder %s21, 1
      %s294 = scalar_select %p293, %s21, 1
      %p295 = scmp.lt.s32.totalorder %s22, 9
      %s296 = scalar_select %p295, %s22, 9
      %s297 = smul.addr %s296, 2
      %s298 = smul.addr %s294, 20
      %s299 = sadd.s32 %s297, %s298
      %s300 = smul.addr %s299, 4
      %s301 = scalar_lea.vmem %s0, %s300
      %p302 = pneg %p52
      %p303 = pneg %p49
      %s304 = sadd.s32 %s22, 1
      %p305 = scmp.lt.s32.totalorder %s21, 1
      %s306 = scalar_select %p305, %s21, 1
      %p307 = scmp.lt.s32.totalorder %s304, 9
      %s308 = scalar_select %p307, %s304, 9
      %s309 = smul.addr %s308, 2
      %s310 = smul.addr %s306, 20
      %s311 = sadd.s32 %s309, %s310
      %s312 = smul.addr %s311, 4
      %s313 = scalar_lea.vmem %s1, %s312
      %p314 = pneg %p82
      %p315 = pneg %p79
      %s316 = sadd.s32 %s22, 2
      %p317 = scmp.lt.s32.totalorder %s21, 1
      %s318 = scalar_select %p317, %s21, 1
      %p319 = scmp.lt.s32.totalorder %s316, 9
      %s320 = scalar_select %p319, %s316, 9
      %s321 = smul.addr %s320, 2
      %s322 = smul.addr %s318, 20
      %s323 = sadd.s32 %s321, %s322
      %s324 = smul.addr %s323, 4
      %s325 = scalar_lea.vmem %s2, %s324
      %p326 = pneg %p112
      %p327 = pneg %p109
      %p328 = pneg %p133
      %p329 = pneg %p130
      %p330 = pneg %p154
      %p331 = pneg %p151
      %p332 = scmp.lt.s32.totalorder %s21, 1
      %s333 = scalar_select %p332, %s21, 1
      %p334 = scmp.lt.s32.totalorder %s22, 7
      %s335 = scalar_select %p334, %s22, 7
      %s336 = smul.addr %s333, 8
      %s337 = sadd.s32 %s335, %s336
      %s338 = smul.addr %s337, 4
      %s339 = scalar_lea.vmem %s5, %s338
      %p340 = pneg %p182
      %p341 = pneg %p179
      %p342 = pneg %p210
      %p343 = pneg %p207
      %p344 = scmp.lt.s32.totalorder %s21, 1
      %s345 = scalar_select %p344, %s21, 1
      %p346 = scmp.lt.s32.totalorder %s22, 7
      %s347 = scalar_select %p346, %s22, 7
      %s348 = smul.addr %s345, 8
      %s349 = sadd.s32 %s347, %s348
      %s350 = smul.addr %s349, 4
      %s351 = scalar_lea.vmem %s6, %s350
      %p352 = scmp.lt.s32.totalorder %s21, 1
      %s353 = scalar_select %p352, %s21, 1
      %p354 = scmp.lt.s32.totalorder %s22, 9
      %s355 = scalar_select %p354, %s22, 9
      %s356 = smul.addr %s355, 2
      %s357 = smul.addr %s353, 20
      %s358 = sadd.s32 %s356, %s357
      %s359 = smul.addr %s358, 4
      %s360 = scalar_lea.vmem %s0, %s359
      %s361 = sadd.s32 %s22, 1
      %p362 = scmp.lt.s32.totalorder %s21, 1
      %s363 = scalar_select %p362, %s21, 1
      %p364 = scmp.lt.s32.totalorder %s361, 9
      %s365 = scalar_select %p364, %s361, 9
      %s366 = smul.addr %s365, 2
      %s367 = smul.addr %s363, 20
      %s368 = sadd.s32 %s366, %s367
      %s369 = smul.addr %s368, 4
      %s370 = scalar_lea.vmem %s1, %s369
      %s371 = sadd.s32 %s22, 1
      %s372 = sadd.s32 %s22, 2
      %p373 = scmp.lt.s32.totalorder %s21, 1
      %s374 = scalar_select %p373, %s21, 1
      %p375 = scmp.lt.s32.totalorder %s372, 9
      %s376 = scalar_select %p375, %s372, 9
      %s377 = smul.addr %s376, 2
      %s378 = smul.addr %s374, 20
      %s379 = sadd.s32 %s377, %s378
      %s380 = smul.addr %s379, 4
      %s381 = scalar_lea.vmem %s2, %s380
      %s382 = sadd.s32 %s22, 2
      %p383 = scmp.lt.s32.totalorder %s21, 1
      %s384 = scalar_select %p383, %s21, 1
      %p385 = scmp.lt.s32.totalorder %s22, 7
      %s386 = scalar_select %p385, %s22, 7
      %s387 = smul.addr %s384, 8
      %s388 = sadd.s32 %s386, %s387
      %s389 = smul.addr %s388, 4
      %s390 = scalar_lea.vmem %s5, %s389
      %p391 = scmp.lt.s32.totalorder %s21, 1
      %s392 = scalar_select %p391, %s21, 1
      %p393 = scmp.lt.s32.totalorder %s22, 7
      %s394 = scalar_select %p393, %s22, 7
      %s395 = smul.addr %s392, 8
      %s396 = sadd.s32 %s394, %s395
      %s397 = smul.addr %s396, 4
      %s398 = scalar_lea.vmem %s6, %s397
      %v400 = vld [vmem:[%s360] sm:$0xf]
      %v401 = vld [vmem:[%s3] sm:$0xf]
      %v402 = vld [vmem:[%s3 + $0x4] sm:$0xf]
      %v403 = vld [vmem:[%s3 + $0x8] sm:$0xf]
      %v404 = vld [vmem:[%s3 + $0xc] sm:$0xf]
      %v405 = vld [vmem:[%s3 + $0x10] sm:$0xf]
      %v406 = vld [vmem:[%s3 + $0x14] sm:$0xf]
      %v407 = vld [vmem:[%s3 + $0x18] sm:$0xf]
      %v408 = vld [vmem:[%s3 + $0x1c] sm:$0xf]
      %v409 = vld [vmem:[%s3 + $0x20] sm:$0xf]
      %v410 = vld [vmem:[%s3 + $0x24] sm:$0xf]
      %v411 = vld [vmem:[%s3 + $0x28] sm:$0xf]
      %v412 = vld [vmem:[%s3 + $0x2c] sm:$0xf]
      %v413 = vld [vmem:[%s3 + $0x30] sm:$0xf]
      %v414 = vld [vmem:[%s3 + $0x34] sm:$0xf]
      %v415 = vld [vmem:[%s3 + $0x38] sm:$0xf]
      %v416 = vld [vmem:[%s3 + $0x3c] sm:$0xf]
      %v417 = vld [vmem:[%s360 + $0x4] sm:$0x1]
      %v418 = vld [vmem:[%s3 + $0x40] sm:$0xf]
      %v419 = vld [vmem:[%s3 + $0x44] sm:$0xf]
      %v420 = vld [vmem:[%s3 + $0x48] sm:$0xf]
      %v421 = vld [vmem:[%s3 + $0x4c] sm:$0xf]
      %v422 = vld [vmem:[%s3 + $0x50] sm:$0xf]
      %v423 = vld [vmem:[%s3 + $0x54] sm:$0xf]
      %v424 = vld [vmem:[%s3 + $0x58] sm:$0xf]
      %v425 = vld [vmem:[%s3 + $0x5c] sm:$0xf]
      %v426 = vld [vmem:[%s3 + $0x60] sm:$0xf]
      %v427 = vld [vmem:[%s3 + $0x64] sm:$0xf]
      %v428 = vld [vmem:[%s3 + $0x68] sm:$0xf]
      %v429 = vld [vmem:[%s3 + $0x6c] sm:$0xf]
      %v430 = vld [vmem:[%s3 + $0x70] sm:$0xf]
      %v431 = vld [vmem:[%s3 + $0x74] sm:$0xf]
      %v432 = vld [vmem:[%s3 + $0x78] sm:$0xf]
      %v433 = vld [vmem:[%s3 + $0x7c] sm:$0xf]
      %v436 = vunpack.c.l.b16 %v400
      %v437 = vunpack.c.l.b16 %v417
      %v438 = vpack.c.b16 %v437, %v436
      %v440 = vshrl.u32 %v438, 16
      %v442 = vshll.u32 %v438, 16
      %v444 = vrot.slane %v442, 1
      %v445 = vor.u32 %v440, %v444
      %v463 = vunpack.c.l.b16 %v418
      %v464 = vunpack.c.l.b16 %v419
      %v465 = vunpack.c.l.b16 %v420
      %v466 = vunpack.c.l.b16 %v421
      %v467 = vunpack.c.l.b16 %v422
      %v468 = vunpack.c.l.b16 %v423
      %v469 = vunpack.c.l.b16 %v424
      %v470 = vunpack.c.l.b16 %v425
      %v471 = vunpack.c.l.b16 %v426
      %v472 = vunpack.c.l.b16 %v427
      %v473 = vunpack.c.l.b16 %v428
      %v474 = vunpack.c.l.b16 %v429
      %v475 = vunpack.c.l.b16 %v430
      %v476 = vunpack.c.l.b16 %v431
      %v477 = vunpack.c.l.b16 %v432
      %v478 = vunpack.c.l.b16 %v433
      %v479 = vpack.c.b16 %v464, %v463
      %v480 = vpack.c.b16 %v466, %v465
      %v481 = vpack.c.b16 %v468, %v467
      %v482 = vpack.c.b16 %v470, %v469
      %v483 = vpack.c.b16 %v472, %v471
      %v484 = vpack.c.b16 %v474, %v473
      %v485 = vpack.c.b16 %v476, %v475
      %v486 = vpack.c.b16 %v478, %v477
      %495 = vmatprep.subr.bf16.mxu0 0
      %496 = vmatpush1.bf16.msra.mxu0 %v479
      %497 = vmatprep.subr.bf16.mxu0 0
      %498 = vmatpush1.bf16.msra.mxu0 %v480
      %499 = vmatprep.subr.bf16.mxu0 0
      %500 = vmatpush1.bf16.msra.mxu0 %v481
      %501 = vmatprep.subr.bf16.mxu0 0
      %502 = vmatpush1.bf16.msra.mxu0 %v482
      %503 = vmatprep.subr.bf16.mxu0 0
      %504 = vmatpush1.bf16.msra.mxu0 %v483
      %505 = vmatprep.subr.bf16.mxu0 0
      %506 = vmatpush1.bf16.msra.mxu0 %v484
      %507 = vmatprep.subr.bf16.mxu0 0
      %508 = vmatpush1.bf16.msra.mxu0 %v485
      %509 = vmatprep.subr.bf16.mxu0 0
      %510 = vmatpush1.bf16.msra.mxu0 %v486
      %511 = vmatprep.subr.bf16.mxu0 0
      %512 = vmatpush1.bf16.msra.mxu0 0
      %513 = vmatprep.subr.bf16.mxu0 0
      %514 = vmatpush1.bf16.msra.mxu0 0
      %515 = vmatprep.subr.bf16.mxu0 0
      %516 = vmatpush1.bf16.msra.mxu0 0
      %517 = vmatprep.subr.bf16.mxu0 0
      %518 = vmatpush1.bf16.msra.mxu0 0
      %519 = vmatprep.subr.bf16.mxu0 0
      %520 = vmatpush1.bf16.msra.mxu0 0
      %521 = vmatprep.subr.bf16.mxu0 0
      %522 = vmatpush1.bf16.msra.mxu0 0
      %523 = vmatprep.subr.bf16.mxu0 0
      %524 = vmatpush1.bf16.msra.mxu0 0
      %525 = vmatprep.subr.bf16.mxu0 0
      %526 = vmatpush1.bf16.msra.mxu0 0
      %527 = vmatprep.mubr.bf16.mxu0 0
      %528 = vmatmul.mubr.bf16.gmra.mrb[0].mxu0 %v445
      %v529 = vpop.f32.mrb[0].mxu0
      %v530 = vadd.f32 0.0, %v529
      %v531 = vpop.f32.mrb[0].mxu0
      %v532 = vpop.f32.mrb[0].mxu0
      %v533 = vpop.f32.mrb[0].mxu0
      %534 = vdwg.mxu0
      %v551 = vunpack.c.l.b16 %v401
      %v552 = vunpack.c.l.b16 %v402
      %v553 = vunpack.c.l.b16 %v403
      %v554 = vunpack.c.l.b16 %v404
      %v555 = vunpack.c.l.b16 %v405
      %v556 = vunpack.c.l.b16 %v406
      %v557 = vunpack.c.l.b16 %v407
      %v558 = vunpack.c.l.b16 %v408
      %v559 = vunpack.c.l.b16 %v409
      %v560 = vunpack.c.l.b16 %v410
      %v561 = vunpack.c.l.b16 %v411
      %v562 = vunpack.c.l.b16 %v412
      %v563 = vunpack.c.l.b16 %v413
      %v564 = vunpack.c.l.b16 %v414
      %v565 = vunpack.c.l.b16 %v415
      %v566 = vunpack.c.l.b16 %v416
      %v567 = vpack.c.b16 %v552, %v551
      %v568 = vpack.c.b16 %v554, %v553
      %v569 = vpack.c.b16 %v556, %v555
      %v570 = vpack.c.b16 %v558, %v557
      %v571 = vpack.c.b16 %v560, %v559
      %v572 = vpack.c.b16 %v562, %v561
      %v573 = vpack.c.b16 %v564, %v563
      %v574 = vpack.c.b16 %v566, %v565
      %583 = vmatprep.subr.bf16.mxu0 0
      %584 = vmatpush1.bf16.msra.mxu0 %v567
      %585 = vmatprep.subr.bf16.mxu0 0
      %586 = vmatpush1.bf16.msra.mxu0 %v568
      %587 = vmatprep.subr.bf16.mxu0 0
      %588 = vmatpush1.bf16.msra.mxu0 %v569
      %589 = vmatprep.subr.bf16.mxu0 0
      %590 = vmatpush1.bf16.msra.mxu0 %v570
      %591 = vmatprep.subr.bf16.mxu0 0
      %592 = vmatpush1.bf16.msra.mxu0 %v571
      %593 = vmatprep.subr.bf16.mxu0 0
      %594 = vmatpush1.bf16.msra.mxu0 %v572
      %595 = vmatprep.subr.bf16.mxu0 0
      %596 = vmatpush1.bf16.msra.mxu0 %v573
      %597 = vmatprep.subr.bf16.mxu0 0
      %598 = vmatpush1.bf16.msra.mxu0 %v574
      %599 = vmatprep.subr.bf16.mxu0 0
      %600 = vmatpush1.bf16.msra.mxu0 0
      %601 = vmatprep.subr.bf16.mxu0 0
      %602 = vmatpush1.bf16.msra.mxu0 0
      %603 = vmatprep.subr.bf16.mxu0 0
      %604 = vmatpush1.bf16.msra.mxu0 0
      %605 = vmatprep.subr.bf16.mxu0 0
      %606 = vmatpush1.bf16.msra.mxu0 0
      %607 = vmatprep.subr.bf16.mxu0 0
      %608 = vmatpush1.bf16.msra.mxu0 0
      %609 = vmatprep.subr.bf16.mxu0 0
      %610 = vmatpush1.bf16.msra.mxu0 0
      %611 = vmatprep.subr.bf16.mxu0 0
      %612 = vmatpush1.bf16.msra.mxu0 0
      %613 = vmatprep.subr.bf16.mxu0 0
      %614 = vmatpush1.bf16.msra.mxu0 0
      %615 = vmatprep.mubr.bf16.mxu0 0
      %616 = vmatmul.mubr.bf16.gmra.mrb[0].mxu0 %v400
      %v617 = vpop.f32.mrb[0].mxu0
      %v618 = vadd.f32 %v530, %v617
      %v619 = vpop.f32.mrb[0].mxu0
      %v620 = vpop.f32.mrb[0].mxu0
      %v621 = vpop.f32.mrb[0].mxu0
      %622 = vdwg.mxu0
      %v623 = vld [vmem:[%s360] sm:$0xe]
      %v624 = vld [vmem:[%s3 + $0x80] sm:$0xf]
      %v625 = vld [vmem:[%s3 + $0x84] sm:$0xf]
      %v626 = vld [vmem:[%s3 + $0x88] sm:$0xf]
      %v627 = vld [vmem:[%s3 + $0x8c] sm:$0xf]
      %v628 = vld [vmem:[%s3 + $0x90] sm:$0xf]
      %v629 = vld [vmem:[%s3 + $0x94] sm:$0xf]
      %v630 = vld [vmem:[%s3 + $0x98] sm:$0xf]
      %v631 = vld [vmem:[%s3 + $0x9c] sm:$0xf]
      %v632 = vld [vmem:[%s3 + $0xa0] sm:$0xf]
      %v633 = vld [vmem:[%s3 + $0xa4] sm:$0xf]
      %v634 = vld [vmem:[%s3 + $0xa8] sm:$0xf]
      %v635 = vld [vmem:[%s3 + $0xac] sm:$0xf]
      %v636 = vld [vmem:[%s3 + $0xb0] sm:$0xf]
      %v637 = vld [vmem:[%s3 + $0xb4] sm:$0xf]
      %v638 = vld [vmem:[%s3 + $0xb8] sm:$0xf]
      %v639 = vld [vmem:[%s3 + $0xbc] sm:$0xf]
      %v641 = vunpack.c.l.b16 %v623
      %v642 = vpack.c.b16 %v437, %v641
      %v643 = vrot.slane %v642, 1
      %v661 = vunpack.c.l.b16 %v624
      %v662 = vunpack.c.l.b16 %v625
      %v663 = vunpack.c.l.b16 %v626
      %v664 = vunpack.c.l.b16 %v627
      %v665 = vunpack.c.l.b16 %v628
      %v666 = vunpack.c.l.b16 %v629
      %v667 = vunpack.c.l.b16 %v630
      %v668 = vunpack.c.l.b16 %v631
      %v669 = vunpack.c.l.b16 %v632
      %v670 = vunpack.c.l.b16 %v633
      %v671 = vunpack.c.l.b16 %v634
      %v672 = vunpack.c.l.b16 %v635
      %v673 = vunpack.c.l.b16 %v636
      %v674 = vunpack.c.l.b16 %v637
      %v675 = vunpack.c.l.b16 %v638
      %v676 = vunpack.c.l.b16 %v639
      %v677 = vpack.c.b16 %v662, %v661
      %v678 = vpack.c.b16 %v664, %v663
      %v679 = vpack.c.b16 %v666, %v665
      %v680 = vpack.c.b16 %v668, %v667
      %v681 = vpack.c.b16 %v670, %v669
      %v682 = vpack.c.b16 %v672, %v671
      %v683 = vpack.c.b16 %v674, %v673
      %v684 = vpack.c.b16 %v676, %v675
      %693 = vmatprep.subr.bf16.mxu0 0
      %694 = vmatpush1.bf16.msra.mxu0 %v677
      %695 = vmatprep.subr.bf16.mxu0 0
      %696 = vmatpush1.bf16.msra.mxu0 %v678
      %697 = vmatprep.subr.bf16.mxu0 0
      %698 = vmatpush1.bf16.msra.mxu0 %v679
      %699 = vmatprep.subr.bf16.mxu0 0
      %700 = vmatpush1.bf16.msra.mxu0 %v680
      %701 = vmatprep.subr.bf16.mxu0 0
      %702 = vmatpush1.bf16.msra.mxu0 %v681
      %703 = vmatprep.subr.bf16.mxu0 0
      %704 = vmatpush1.bf16.msra.mxu0 %v682
      %705 = vmatprep.subr.bf16.mxu0 0
      %706 = vmatpush1.bf16.msra.mxu0 %v683
      %707 = vmatprep.subr.bf16.mxu0 0
      %708 = vmatpush1.bf16.msra.mxu0 %v684
      %709 = vmatprep.subr.bf16.mxu0 0
      %710 = vmatpush1.bf16.msra.mxu0 0
      %711 = vmatprep.subr.bf16.mxu0 0
      %712 = vmatpush1.bf16.msra.mxu0 0
      %713 = vmatprep.subr.bf16.mxu0 0
      %714 = vmatpush1.bf16.msra.mxu0 0
      %715 = vmatprep.subr.bf16.mxu0 0
      %716 = vmatpush1.bf16.msra.mxu0 0
      %717 = vmatprep.subr.bf16.mxu0 0
      %718 = vmatpush1.bf16.msra.mxu0 0
      %719 = vmatprep.subr.bf16.mxu0 0
      %720 = vmatpush1.bf16.msra.mxu0 0
      %721 = vmatprep.subr.bf16.mxu0 0
      %722 = vmatpush1.bf16.msra.mxu0 0
      %723 = vmatprep.subr.bf16.mxu0 0
      %724 = vmatpush1.bf16.msra.mxu0 0
      %725 = vmatprep.mubr.bf16.mxu0 0
      %726 = vmatmul.mubr.bf16.gmra.mrb[0].mxu0 %v643
      %v727 = vpop.f32.mrb[0].mxu0
      %v728 = vadd.f32 0.0, %v727
      %v729 = vpop.f32.mrb[0].mxu0
      %v730 = vpop.f32.mrb[0].mxu0
      %v731 = vpop.f32.mrb[0].mxu0
      %732 = vdwg.mxu0
      %v733 = vadd.f32 %v618, %v728
      %v734 = vld [vmem:[%s370] sm:$0xf]
      %v735 = vld [vmem:[%s3 + $0xc0] sm:$0xf]
      %v736 = vld [vmem:[%s3 + $0xc4] sm:$0xf]
      %v737 = vld [vmem:[%s3 + $0xc8] sm:$0xf]
      %v738 = vld [vmem:[%s3 + $0xcc] sm:$0xf]
      %v739 = vld [vmem:[%s3 + $0xd0] sm:$0xf]
      %v740 = vld [vmem:[%s3 + $0xd4] sm:$0xf]
      %v741 = vld [vmem:[%s3 + $0xd8] sm:$0xf]
      %v742 = vld [vmem:[%s3 + $0xdc] sm:$0xf]
      %v743 = vld [vmem:[%s3 + $0xe0] sm:$0xf]
      %v744 = vld [vmem:[%s3 + $0xe4] sm:$0xf]
      %v745 = vld [vmem:[%s3 + $0xe8] sm:$0xf]
      %v746 = vld [vmem:[%s3 + $0xec] sm:$0xf]
      %v747 = vld [vmem:[%s3 + $0xf0] sm:$0xf]
      %v748 = vld [vmem:[%s3 + $0xf4] sm:$0xf]
      %v749 = vld [vmem:[%s3 + $0xf8] sm:$0xf]
      %v750 = vld [vmem:[%s3 + $0xfc] sm:$0xf]
      %v767 = vunpack.c.l.b16 %v735
      %v768 = vunpack.c.l.b16 %v736
      %v769 = vunpack.c.l.b16 %v737
      %v770 = vunpack.c.l.b16 %v738
      %v771 = vunpack.c.l.b16 %v739
      %v772 = vunpack.c.l.b16 %v740
      %v773 = vunpack.c.l.b16 %v741
      %v774 = vunpack.c.l.b16 %v742
      %v775 = vunpack.c.l.b16 %v743
      %v776 = vunpack.c.l.b16 %v744
      %v777 = vunpack.c.l.b16 %v745
      %v778 = vunpack.c.l.b16 %v746
      %v779 = vunpack.c.l.b16 %v747
      %v780 = vunpack.c.l.b16 %v748
      %v781 = vunpack.c.l.b16 %v749
      %v782 = vunpack.c.l.b16 %v750
      %v783 = vpack.c.b16 %v768, %v767
      %v784 = vpack.c.b16 %v770, %v769
      %v785 = vpack.c.b16 %v772, %v771
      %v786 = vpack.c.b16 %v774, %v773
      %v787 = vpack.c.b16 %v776, %v775
      %v788 = vpack.c.b16 %v778, %v777
      %v789 = vpack.c.b16 %v780, %v779
      %v790 = vpack.c.b16 %v782, %v781
      %799 = vmatprep.subr.bf16.mxu0 0
      %800 = vmatpush1.bf16.msra.mxu0 %v783
      %801 = vmatprep.subr.bf16.mxu0 0
      %802 = vmatpush1.bf16.msra.mxu0 %v784
      %803 = vmatprep.subr.bf16.mxu0 0
      %804 = vmatpush1.bf16.msra.mxu0 %v785
      %805 = vmatprep.subr.bf16.mxu0 0
      %806 = vmatpush1.bf16.msra.mxu0 %v786
      %807 = vmatprep.subr.bf16.mxu0 0
      %808 = vmatpush1.bf16.msra.mxu0 %v787
      %809 = vmatprep.subr.bf16.mxu0 0
      %810 = vmatpush1.bf16.msra.mxu0 %v788
      %811 = vmatprep.subr.bf16.mxu0 0
      %812 = vmatpush1.bf16.msra.mxu0 %v789
      %813 = vmatprep.subr.bf16.mxu0 0
      %814 = vmatpush1.bf16.msra.mxu0 %v790
      %815 = vmatprep.subr.bf16.mxu0 0
      %816 = vmatpush1.bf16.msra.mxu0 0
      %817 = vmatprep.subr.bf16.mxu0 0
      %818 = vmatpush1.bf16.msra.mxu0 0
      %819 = vmatprep.subr.bf16.mxu0 0
      %820 = vmatpush1.bf16.msra.mxu0 0
      %821 = vmatprep.subr.bf16.mxu0 0
      %822 = vmatpush1.bf16.msra.mxu0 0
      %823 = vmatprep.subr.bf16.mxu0 0
      %824 = vmatpush1.bf16.msra.mxu0 0
      %825 = vmatprep.subr.bf16.mxu0 0
      %826 = vmatpush1.bf16.msra.mxu0 0
      %827 = vmatprep.subr.bf16.mxu0 0
      %828 = vmatpush1.bf16.msra.mxu0 0
      %829 = vmatprep.subr.bf16.mxu0 0
      %830 = vmatpush1.bf16.msra.mxu0 0
      %831 = vmatprep.mubr.bf16.mxu0 0
      %832 = vmatmul.mubr.bf16.gmra.mrb[0].mxu0 %v734
      %v833 = vpop.f32.mrb[0].mxu0
      %v834 = vadd.f32 0.0, %v833
      %v835 = vpop.f32.mrb[0].mxu0
      %v836 = vpop.f32.mrb[0].mxu0
      %v837 = vpop.f32.mrb[0].mxu0
      %838 = vdwg.mxu0
      %v839 = vadd.f32 %v733, %v834
      %v840 = vld [vmem:[%s370] sm:$0xf]
      %v841 = vld [vmem:[%s370 + $0x4] sm:$0x1]
      %v842 = vld [vmem:[%s3 + $0x100] sm:$0xf]
      %v843 = vld [vmem:[%s3 + $0x104] sm:$0xf]
      %v844 = vld [vmem:[%s3 + $0x108] sm:$0xf]
      %v845 = vld [vmem:[%s3 + $0x10c] sm:$0xf]
      %v846 = vld [vmem:[%s3 + $0x110] sm:$0xf]
      %v847 = vld [vmem:[%s3 + $0x114] sm:$0xf]
      %v848 = vld [vmem:[%s3 + $0x118] sm:$0xf]
      %v849 = vld [vmem:[%s3 + $0x11c] sm:$0xf]
      %v850 = vld [vmem:[%s3 + $0x120] sm:$0xf]
      %v851 = vld [vmem:[%s3 + $0x124] sm:$0xf]
      %v852 = vld [vmem:[%s3 + $0x128] sm:$0xf]
      %v853 = vld [vmem:[%s3 + $0x12c] sm:$0xf]
      %v854 = vld [vmem:[%s3 + $0x130] sm:$0xf]
      %v855 = vld [vmem:[%s3 + $0x134] sm:$0xf]
      %v856 = vld [vmem:[%s3 + $0x138] sm:$0xf]
      %v857 = vld [vmem:[%s3 + $0x13c] sm:$0xf]
      %v860 = vunpack.c.l.b16 %v840
      %v861 = vunpack.c.l.b16 %v841
      %v862 = vpack.c.b16 %v861, %v860
      %v864 = vshrl.u32 %v862, 16
      %v866 = vshll.u32 %v862, 16
      %v868 = vrot.slane %v866, 1
      %v869 = vor.u32 %v864, %v868
      %v887 = vunpack.c.l.b16 %v842
      %v888 = vunpack.c.l.b16 %v843
      %v889 = vunpack.c.l.b16 %v844
      %v890 = vunpack.c.l.b16 %v845
      %v891 = vunpack.c.l.b16 %v846
      %v892 = vunpack.c.l.b16 %v847
      %v893 = vunpack.c.l.b16 %v848
      %v894 = vunpack.c.l.b16 %v849
      %v895 = vunpack.c.l.b16 %v850
      %v896 = vunpack.c.l.b16 %v851
      %v897 = vunpack.c.l.b16 %v852
      %v898 = vunpack.c.l.b16 %v853
      %v899 = vunpack.c.l.b16 %v854
      %v900 = vunpack.c.l.b16 %v855
      %v901 = vunpack.c.l.b16 %v856
      %v902 = vunpack.c.l.b16 %v857
      %v903 = vpack.c.b16 %v888, %v887
      %v904 = vpack.c.b16 %v890, %v889
      %v905 = vpack.c.b16 %v892, %v891
      %v906 = vpack.c.b16 %v894, %v893
      %v907 = vpack.c.b16 %v896, %v895
      %v908 = vpack.c.b16 %v898, %v897
      %v909 = vpack.c.b16 %v900, %v899
      %v910 = vpack.c.b16 %v902, %v901
      %919 = vmatprep.subr.bf16.mxu0 0
      %920 = vmatpush1.bf16.msra.mxu0 %v903
      %921 = vmatprep.subr.bf16.mxu0 0
      %922 = vmatpush1.bf16.msra.mxu0 %v904
      %923 = vmatprep.subr.bf16.mxu0 0
      %924 = vmatpush1.bf16.msra.mxu0 %v905
      %925 = vmatprep.subr.bf16.mxu0 0
      %926 = vmatpush1.bf16.msra.mxu0 %v906
      %927 = vmatprep.subr.bf16.mxu0 0
      %928 = vmatpush1.bf16.msra.mxu0 %v907
      %929 = vmatprep.subr.bf16.mxu0 0
      %930 = vmatpush1.bf16.msra.mxu0 %v908
      %931 = vmatprep.subr.bf16.mxu0 0
      %932 = vmatpush1.bf16.msra.mxu0 %v909
      %933 = vmatprep.subr.bf16.mxu0 0
      %934 = vmatpush1.bf16.msra.mxu0 %v910
      %935 = vmatprep.subr.bf16.mxu0 0
      %936 = vmatpush1.bf16.msra.mxu0 0
      %937 = vmatprep.subr.bf16.mxu0 0
      %938 = vmatpush1.bf16.msra.mxu0 0
      %939 = vmatprep.subr.bf16.mxu0 0
      %940 = vmatpush1.bf16.msra.mxu0 0
      %941 = vmatprep.subr.bf16.mxu0 0
      %942 = vmatpush1.bf16.msra.mxu0 0
      %943 = vmatprep.subr.bf16.mxu0 0
      %944 = vmatpush1.bf16.msra.mxu0 0
      %945 = vmatprep.subr.bf16.mxu0 0
      %946 = vmatpush1.bf16.msra.mxu0 0
      %947 = vmatprep.subr.bf16.mxu0 0
      %948 = vmatpush1.bf16.msra.mxu0 0
      %949 = vmatprep.subr.bf16.mxu0 0
      %950 = vmatpush1.bf16.msra.mxu0 0
      %951 = vmatprep.mubr.bf16.mxu0 0
      %952 = vmatmul.mubr.bf16.gmra.mrb[0].mxu0 %v869
      %v953 = vpop.f32.mrb[0].mxu0
      %v954 = vadd.f32 0.0, %v953
      %v955 = vpop.f32.mrb[0].mxu0
      %v956 = vpop.f32.mrb[0].mxu0
      %v957 = vpop.f32.mrb[0].mxu0
      %958 = vdwg.mxu0
      %v959 = vadd.f32 %v839, %v954
      %v960 = vld [vmem:[%s370] sm:$0xe]
      %v961 = vld [vmem:[%s3 + $0x140] sm:$0xf]
      %v962 = vld [vmem:[%s3 + $0x144] sm:$0xf]
      %v963 = vld [vmem:[%s3 + $0x148] sm:$0xf]
      %v964 = vld [vmem:[%s3 + $0x14c] sm:$0xf]
      %v965 = vld [vmem:[%s3 + $0x150] sm:$0xf]
      %v966 = vld [vmem:[%s3 + $0x154] sm:$0xf]
      %v967 = vld [vmem:[%s3 + $0x158] sm:$0xf]
      %v968 = vld [vmem:[%s3 + $0x15c] sm:$0xf]
      %v969 = vld [vmem:[%s3 + $0x160] sm:$0xf]
      %v970 = vld [vmem:[%s3 + $0x164] sm:$0xf]
      %v971 = vld [vmem:[%s3 + $0x168] sm:$0xf]
      %v972 = vld [vmem:[%s3 + $0x16c] sm:$0xf]
      %v973 = vld [vmem:[%s3 + $0x170] sm:$0xf]
      %v974 = vld [vmem:[%s3 + $0x174] sm:$0xf]
      %v975 = vld [vmem:[%s3 + $0x178] sm:$0xf]
      %v976 = vld [vmem:[%s3 + $0x17c] sm:$0xf]
      %v978 = vunpack.c.l.b16 %v960
      %v979 = vpack.c.b16 %v861, %v978
      %v980 = vrot.slane %v979, 1
      %v998 = vunpack.c.l.b16 %v961
      %v999 = vunpack.c.l.b16 %v962
      %v1000 = vunpack.c.l.b16 %v963
      %v1001 = vunpack.c.l.b16 %v964
      %v1002 = vunpack.c.l.b16 %v965
      %v1003 = vunpack.c.l.b16 %v966
      %v1004 = vunpack.c.l.b16 %v967
      %v1005 = vunpack.c.l.b16 %v968
      %v1006 = vunpack.c.l.b16 %v969
      %v1007 = vunpack.c.l.b16 %v970
      %v1008 = vunpack.c.l.b16 %v971
      %v1009 = vunpack.c.l.b16 %v972
      %v1010 = vunpack.c.l.b16 %v973
      %v1011 = vunpack.c.l.b16 %v974
      %v1012 = vunpack.c.l.b16 %v975
      %v1013 = vunpack.c.l.b16 %v976
      %v1014 = vpack.c.b16 %v999, %v998
      %v1015 = vpack.c.b16 %v1001, %v1000
      %v1016 = vpack.c.b16 %v1003, %v1002
      %v1017 = vpack.c.b16 %v1005, %v1004
      %v1018 = vpack.c.b16 %v1007, %v1006
      %v1019 = vpack.c.b16 %v1009, %v1008
      %v1020 = vpack.c.b16 %v1011, %v1010
      %v1021 = vpack.c.b16 %v1013, %v1012
      %1030 = vmatprep.subr.bf16.mxu0 0
      %1031 = vmatpush1.bf16.msra.mxu0 %v1014
      %1032 = vmatprep.subr.bf16.mxu0 0
      %1033 = vmatpush1.bf16.msra.mxu0 %v1015
      %1034 = vmatprep.subr.bf16.mxu0 0
      %1035 = vmatpush1.bf16.msra.mxu0 %v1016
      %1036 = vmatprep.subr.bf16.mxu0 0
      %1037 = vmatpush1.bf16.msra.mxu0 %v1017
      %1038 = vmatprep.subr.bf16.mxu0 0
      %1039 = vmatpush1.bf16.msra.mxu0 %v1018
      %1040 = vmatprep.subr.bf16.mxu0 0
      %1041 = vmatpush1.bf16.msra.mxu0 %v1019
      %1042 = vmatprep.subr.bf16.mxu0 0
      %1043 = vmatpush1.bf16.msra.mxu0 %v1020
      %1044 = vmatprep.subr.bf16.mxu0 0
      %1045 = vmatpush1.bf16.msra.mxu0 %v1021
      %1046 = vmatprep.subr.bf16.mxu0 0
      %1047 = vmatpush1.bf16.msra.mxu0 0
      %1048 = vmatprep.subr.bf16.mxu0 0
      %1049 = vmatpush1.bf16.msra.mxu0 0
      %1050 = vmatprep.subr.bf16.mxu0 0
      %1051 = vmatpush1.bf16.msra.mxu0 0
      %1052 = vmatprep.subr.bf16.mxu0 0
      %1053 = vmatpush1.bf16.msra.mxu0 0
      %1054 = vmatprep.subr.bf16.mxu0 0
      %1055 = vmatpush1.bf16.msra.mxu0 0
      %1056 = vmatprep.subr.bf16.mxu0 0
      %1057 = vmatpush1.bf16.msra.mxu0 0
      %1058 = vmatprep.subr.bf16.mxu0 0
      %1059 = vmatpush1.bf16.msra.mxu0 0
      %1060 = vmatprep.subr.bf16.mxu0 0
      %1061 = vmatpush1.bf16.msra.mxu0 0
      %1062 = vmatprep.mubr.bf16.mxu0 0
      %1063 = vmatmul.mubr.bf16.gmra.mrb[0].mxu0 %v980
      %v1064 = vpop.f32.mrb[0].mxu0
      %v1065 = vadd.f32 0.0, %v1064
      %v1066 = vpop.f32.mrb[0].mxu0
      %v1067 = vpop.f32.mrb[0].mxu0
      %v1068 = vpop.f32.mrb[0].mxu0
      %1069 = vdwg.mxu0
      %v1070 = vadd.f32 %v959, %v1065
      %v1071 = vld [vmem:[%s381] sm:$0xf]
      %v1072 = vld [vmem:[%s3 + $0x180] sm:$0xf]
      %v1073 = vld [vmem:[%s3 + $0x184] sm:$0xf]
      %v1074 = vld [vmem:[%s3 + $0x188] sm:$0xf]
      %v1075 = vld [vmem:[%s3 + $0x18c] sm:$0xf]
      %v1076 = vld [vmem:[%s3 + $0x190] sm:$0xf]
      %v1077 = vld [vmem:[%s3 + $0x194] sm:$0xf]
      %v1078 = vld [vmem:[%s3 + $0x198] sm:$0xf]
      %v1079 = vld [vmem:[%s3 + $0x19c] sm:$0xf]
      %v1080 = vld [vmem:[%s3 + $0x1a0] sm:$0xf]
      %v1081 = vld [vmem:[%s3 + $0x1a4] sm:$0xf]
      %v1082 = vld [vmem:[%s3 + $0x1a8] sm:$0xf]
      %v1083 = vld [vmem:[%s3 + $0x1ac] sm:$0xf]
      %v1084 = vld [vmem:[%s3 + $0x1b0] sm:$0xf]
      %v1085 = vld [vmem:[%s3 + $0x1b4] sm:$0xf]
      %v1086 = vld [vmem:[%s3 + $0x1b8] sm:$0xf]
      %v1087 = vld [vmem:[%s3 + $0x1bc] sm:$0xf]
      %v1104 = vunpack.c.l.b16 %v1072
      %v1105 = vunpack.c.l.b16 %v1073
      %v1106 = vunpack.c.l.b16 %v1074
      %v1107 = vunpack.c.l.b16 %v1075
      %v1108 = vunpack.c.l.b16 %v1076
      %v1109 = vunpack.c.l.b16 %v1077
      %v1110 = vunpack.c.l.b16 %v1078
      %v1111 = vunpack.c.l.b16 %v1079
      %v1112 = vunpack.c.l.b16 %v1080
      %v1113 = vunpack.c.l.b16 %v1081
      %v1114 = vunpack.c.l.b16 %v1082
      %v1115 = vunpack.c.l.b16 %v1083
      %v1116 = vunpack.c.l.b16 %v1084
      %v1117 = vunpack.c.l.b16 %v1085
      %v1118 = vunpack.c.l.b16 %v1086
      %v1119 = vunpack.c.l.b16 %v1087
      %v1120 = vpack.c.b16 %v1105, %v1104
      %v1121 = vpack.c.b16 %v1107, %v1106
      %v1122 = vpack.c.b16 %v1109, %v1108
      %v1123 = vpack.c.b16 %v1111, %v1110
      %v1124 = vpack.c.b16 %v1113, %v1112
      %v1125 = vpack.c.b16 %v1115, %v1114
      %v1126 = vpack.c.b16 %v1117, %v1116
      %v1127 = vpack.c.b16 %v1119, %v1118
      %1136 = vmatprep.subr.bf16.mxu0 0
      %1137 = vmatpush1.bf16.msra.mxu0 %v1120
      %1138 = vmatprep.subr.bf16.mxu0 0
      %1139 = vmatpush1.bf16.msra.mxu0 %v1121
      %1140 = vmatprep.subr.bf16.mxu0 0
      %1141 = vmatpush1.bf16.msra.mxu0 %v1122
      %1142 = vmatprep.subr.bf16.mxu0 0
      %1143 = vmatpush1.bf16.msra.mxu0 %v1123
      %1144 = vmatprep.subr.bf16.mxu0 0
      %1145 = vmatpush1.bf16.msra.mxu0 %v1124
      %1146 = vmatprep.subr.bf16.mxu0 0
      %1147 = vmatpush1.bf16.msra.mxu0 %v1125
      %1148 = vmatprep.subr.bf16.mxu0 0
      %1149 = vmatpush1.bf16.msra.mxu0 %v1126
      %1150 = vmatprep.subr.bf16.mxu0 0
      %1151 = vmatpush1.bf16.msra.mxu0 %v1127
      %1152 = vmatprep.subr.bf16.mxu0 0
      %1153 = vmatpush1.bf16.msra.mxu0 0
      %1154 = vmatprep.subr.bf16.mxu0 0
      %1155 = vmatpush1.bf16.msra.mxu0 0
      %1156 = vmatprep.subr.bf16.mxu0 0
      %1157 = vmatpush1.bf16.msra.mxu0 0
      %1158 = vmatprep.subr.bf16.mxu0 0
      %1159 = vmatpush1.bf16.msra.mxu0 0
      %1160 = vmatprep.subr.bf16.mxu0 0
      %1161 = vmatpush1.bf16.msra.mxu0 0
      %1162 = vmatprep.subr.bf16.mxu0 0
      %1163 = vmatpush1.bf16.msra.mxu0 0
      %1164 = vmatprep.subr.bf16.mxu0 0
      %1165 = vmatpush1.bf16.msra.mxu0 0
      %1166 = vmatprep.subr.bf16.mxu0 0
      %1167 = vmatpush1.bf16.msra.mxu0 0
      %1168 = vmatprep.mubr.bf16.mxu0 0
      %1169 = vmatmul.mubr.bf16.gmra.mrb[0].mxu0 %v1071
      %v1170 = vpop.f32.mrb[0].mxu0
      %v1171 = vadd.f32 0.0, %v1170
      %v1172 = vpop.f32.mrb[0].mxu0
      %v1173 = vpop.f32.mrb[0].mxu0
      %v1174 = vpop.f32.mrb[0].mxu0
      %1175 = vdwg.mxu0
      %v1176 = vadd.f32 %v1070, %v1171
      %v1177 = vld [vmem:[%s381] sm:$0xf]
      %v1178 = vld [vmem:[%s381 + $0x4] sm:$0x1]
      %v1179 = vld [vmem:[%s3 + $0x1c0] sm:$0xf]
      %v1180 = vld [vmem:[%s3 + $0x1c4] sm:$0xf]
      %v1181 = vld [vmem:[%s3 + $0x1c8] sm:$0xf]
      %v1182 = vld [vmem:[%s3 + $0x1cc] sm:$0xf]
      %v1183 = vld [vmem:[%s3 + $0x1d0] sm:$0xf]
      %v1184 = vld [vmem:[%s3 + $0x1d4] sm:$0xf]
      %v1185 = vld [vmem:[%s3 + $0x1d8] sm:$0xf]
      %v1186 = vld [vmem:[%s3 + $0x1dc] sm:$0xf]
      %v1187 = vld [vmem:[%s3 + $0x1e0] sm:$0xf]
      %v1188 = vld [vmem:[%s3 + $0x1e4] sm:$0xf]
      %v1189 = vld [vmem:[%s3 + $0x1e8] sm:$0xf]
      %v1190 = vld [vmem:[%s3 + $0x1ec] sm:$0xf]
      %v1191 = vld [vmem:[%s3 + $0x1f0] sm:$0xf]
      %v1192 = vld [vmem:[%s3 + $0x1f4] sm:$0xf]
      %v1193 = vld [vmem:[%s3 + $0x1f8] sm:$0xf]
      %v1194 = vld [vmem:[%s3 + $0x1fc] sm:$0xf]
      %v1197 = vunpack.c.l.b16 %v1177
      %v1198 = vunpack.c.l.b16 %v1178
      %v1199 = vpack.c.b16 %v1198, %v1197
      %v1201 = vshrl.u32 %v1199, 16
      %v1203 = vshll.u32 %v1199, 16
      %v1205 = vrot.slane %v1203, 1
      %v1206 = vor.u32 %v1201, %v1205
      %v1224 = vunpack.c.l.b16 %v1179
      %v1225 = vunpack.c.l.b16 %v1180
      %v1226 = vunpack.c.l.b16 %v1181
      %v1227 = vunpack.c.l.b16 %v1182
      %v1228 = vunpack.c.l.b16 %v1183
      %v1229 = vunpack.c.l.b16 %v1184
      %v1230 = vunpack.c.l.b16 %v1185
      %v1231 = vunpack.c.l.b16 %v1186
      %v1232 = vunpack.c.l.b16 %v1187
      %v1233 = vunpack.c.l.b16 %v1188
      %v1234 = vunpack.c.l.b16 %v1189
      %v1235 = vunpack.c.l.b16 %v1190
      %v1236 = vunpack.c.l.b16 %v1191
      %v1237 = vunpack.c.l.b16 %v1192
      %v1238 = vunpack.c.l.b16 %v1193
      %v1239 = vunpack.c.l.b16 %v1194
      %v1240 = vpack.c.b16 %v1225, %v1224
      %v1241 = vpack.c.b16 %v1227, %v1226
      %v1242 = vpack.c.b16 %v1229, %v1228
      %v1243 = vpack.c.b16 %v1231, %v1230
      %v1244 = vpack.c.b16 %v1233, %v1232
      %v1245 = vpack.c.b16 %v1235, %v1234
      %v1246 = vpack.c.b16 %v1237, %v1236
      %v1247 = vpack.c.b16 %v1239, %v1238
      %1256 = vmatprep.subr.bf16.mxu0 0
      %1257 = vmatpush1.bf16.msra.mxu0 %v1240
      %1258 = vmatprep.subr.bf16.mxu0 0
      %1259 = vmatpush1.bf16.msra.mxu0 %v1241
      %1260 = vmatprep.subr.bf16.mxu0 0
      %1261 = vmatpush1.bf16.msra.mxu0 %v1242
      %1262 = vmatprep.subr.bf16.mxu0 0
      %1263 = vmatpush1.bf16.msra.mxu0 %v1243
      %1264 = vmatprep.subr.bf16.mxu0 0
      %1265 = vmatpush1.bf16.msra.mxu0 %v1244
      %1266 = vmatprep.subr.bf16.mxu0 0
      %1267 = vmatpush1.bf16.msra.mxu0 %v1245
      %1268 = vmatprep.subr.bf16.mxu0 0
      %1269 = vmatpush1.bf16.msra.mxu0 %v1246
      %1270 = vmatprep.subr.bf16.mxu0 0
      %1271 = vmatpush1.bf16.msra.mxu0 %v1247
      %1272 = vmatprep.subr.bf16.mxu0 0
      %1273 = vmatpush1.bf16.msra.mxu0 0
      %1274 = vmatprep.subr.bf16.mxu0 0
      %1275 = vmatpush1.bf16.msra.mxu0 0
      %1276 = vmatprep.subr.bf16.mxu0 0
      %1277 = vmatpush1.bf16.msra.mxu0 0
      %1278 = vmatprep.subr.bf16.mxu0 0
      %1279 = vmatpush1.bf16.msra.mxu0 0
      %1280 = vmatprep.subr.bf16.mxu0 0
      %1281 = vmatpush1.bf16.msra.mxu0 0
      %1282 = vmatprep.subr.bf16.mxu0 0
      %1283 = vmatpush1.bf16.msra.mxu0 0
      %1284 = vmatprep.subr.bf16.mxu0 0
      %1285 = vmatpush1.bf16.msra.mxu0 0
      %1286 = vmatprep.subr.bf16.mxu0 0
      %1287 = vmatpush1.bf16.msra.mxu0 0
      %1288 = vmatprep.mubr.bf16.mxu0 0
      %1289 = vmatmul.mubr.bf16.gmra.mrb[0].mxu0 %v1206
      %v1290 = vpop.f32.mrb[0].mxu0
      %v1291 = vadd.f32 0.0, %v1290
      %v1292 = vpop.f32.mrb[0].mxu0
      %v1293 = vpop.f32.mrb[0].mxu0
      %v1294 = vpop.f32.mrb[0].mxu0
      %1295 = vdwg.mxu0
      %v1296 = vadd.f32 %v1176, %v1291
      %v1297 = vld [vmem:[%s381] sm:$0xe]
      %v1298 = vld [vmem:[%s3 + $0x200] sm:$0xf]
      %v1299 = vld [vmem:[%s3 + $0x204] sm:$0xf]
      %v1300 = vld [vmem:[%s3 + $0x208] sm:$0xf]
      %v1301 = vld [vmem:[%s3 + $0x20c] sm:$0xf]
      %v1302 = vld [vmem:[%s3 + $0x210] sm:$0xf]
      %v1303 = vld [vmem:[%s3 + $0x214] sm:$0xf]
      %v1304 = vld [vmem:[%s3 + $0x218] sm:$0xf]
      %v1305 = vld [vmem:[%s3 + $0x21c] sm:$0xf]
      %v1306 = vld [vmem:[%s3 + $0x220] sm:$0xf]
      %v1307 = vld [vmem:[%s3 + $0x224] sm:$0xf]
      %v1308 = vld [vmem:[%s3 + $0x228] sm:$0xf]
      %v1309 = vld [vmem:[%s3 + $0x22c] sm:$0xf]
      %v1310 = vld [vmem:[%s3 + $0x230] sm:$0xf]
      %v1311 = vld [vmem:[%s3 + $0x234] sm:$0xf]
      %v1312 = vld [vmem:[%s3 + $0x238] sm:$0xf]
      %v1313 = vld [vmem:[%s3 + $0x23c] sm:$0xf]
      %v1315 = vunpack.c.l.b16 %v1297
      %v1316 = vpack.c.b16 %v1198, %v1315
      %v1317 = vrot.slane %v1316, 1
      %v1335 = vunpack.c.l.b16 %v1298
      %v1336 = vunpack.c.l.b16 %v1299
      %v1337 = vunpack.c.l.b16 %v1300
      %v1338 = vunpack.c.l.b16 %v1301
      %v1339 = vunpack.c.l.b16 %v1302
      %v1340 = vunpack.c.l.b16 %v1303
      %v1341 = vunpack.c.l.b16 %v1304
      %v1342 = vunpack.c.l.b16 %v1305
      %v1343 = vunpack.c.l.b16 %v1306
      %v1344 = vunpack.c.l.b16 %v1307
      %v1345 = vunpack.c.l.b16 %v1308
      %v1346 = vunpack.c.l.b16 %v1309
      %v1347 = vunpack.c.l.b16 %v1310
      %v1348 = vunpack.c.l.b16 %v1311
      %v1349 = vunpack.c.l.b16 %v1312
      %v1350 = vunpack.c.l.b16 %v1313
      %v1351 = vpack.c.b16 %v1336, %v1335
      %v1352 = vpack.c.b16 %v1338, %v1337
      %v1353 = vpack.c.b16 %v1340, %v1339
      %v1354 = vpack.c.b16 %v1342, %v1341
      %v1355 = vpack.c.b16 %v1344, %v1343
      %v1356 = vpack.c.b16 %v1346, %v1345
      %v1357 = vpack.c.b16 %v1348, %v1347
      %v1358 = vpack.c.b16 %v1350, %v1349
      %1367 = vmatprep.subr.bf16.mxu0 0
      %1368 = vmatpush1.bf16.msra.mxu0 %v1351
      %1369 = vmatprep.subr.bf16.mxu0 0
      %1370 = vmatpush1.bf16.msra.mxu0 %v1352
      %1371 = vmatprep.subr.bf16.mxu0 0
      %1372 = vmatpush1.bf16.msra.mxu0 %v1353
      %1373 = vmatprep.subr.bf16.mxu0 0
      %1374 = vmatpush1.bf16.msra.mxu0 %v1354
      %1375 = vmatprep.subr.bf16.mxu0 0
      %1376 = vmatpush1.bf16.msra.mxu0 %v1355
      %1377 = vmatprep.subr.bf16.mxu0 0
      %1378 = vmatpush1.bf16.msra.mxu0 %v1356
      %1379 = vmatprep.subr.bf16.mxu0 0
      %1380 = vmatpush1.bf16.msra.mxu0 %v1357
      %1381 = vmatprep.subr.bf16.mxu0 0
      %1382 = vmatpush1.bf16.msra.mxu0 %v1358
      %1383 = vmatprep.subr.bf16.mxu0 0
      %1384 = vmatpush1.bf16.msra.mxu0 0
      %1385 = vmatprep.subr.bf16.mxu0 0
      %1386 = vmatpush1.bf16.msra.mxu0 0
      %1387 = vmatprep.subr.bf16.mxu0 0
      %1388 = vmatpush1.bf16.msra.mxu0 0
      %1389 = vmatprep.subr.bf16.mxu0 0
      %1390 = vmatpush1.bf16.msra.mxu0 0
      %1391 = vmatprep.subr.bf16.mxu0 0
      %1392 = vmatpush1.bf16.msra.mxu0 0
      %1393 = vmatprep.subr.bf16.mxu0 0
      %1394 = vmatpush1.bf16.msra.mxu0 0
      %1395 = vmatprep.subr.bf16.mxu0 0
      %1396 = vmatpush1.bf16.msra.mxu0 0
      %1397 = vmatprep.subr.bf16.mxu0 0
      %1398 = vmatpush1.bf16.msra.mxu0 0
      %1399 = vmatprep.mubr.bf16.mxu0 0
      %1400 = vmatmul.mubr.bf16.gmra.mrb[0].mxu0 %v1317
      %v1401 = vpop.f32.mrb[0].mxu0
      %v1402 = vadd.f32 0.0, %v1401
      %v1403 = vpop.f32.mrb[0].mxu0
      %v1404 = vpop.f32.mrb[0].mxu0
      %v1405 = vpop.f32.mrb[0].mxu0
      %1406 = vdwg.mxu0
      %v1407 = vadd.f32 %v1296, %v1402
      %v1408 = vld [vmem:[%s4] sm:$0x1]
      %v1410 = vlaneseq
      %v1411 = vshrl.u32 %v1410, 7
      %v1412 = vsub.s32 0, %v1411
      %v1413 = vrot.slane %v1408, %v1412
      %v1415 = vadd.f32 %v1407, %v1413
      %v1416 = vmin.f32 %v1415, 20.0
      %v1417 = vmul.f32 %v1416, 1.442695
      %v1418 = vpow.pop %v1417
      %v1419 = vadd.f32 %v1418, 1.0
      %v1420 = vmul.f32 %v1419, %v1419
      %v1421 = vsub.f32 %v1420, 1.0
      %v1422 = vadd.f32 %v1420, 1.0
      %v1423 = vrcp.pop %v1422
      %v1424 = vmul.f32 %v1421, %v1423
      %vm1425 = vcmp.gt.f32.partialorder %v1415, 20.0
      %v1426 = vmul.f32 %v1415, %v1424
      %v1427 = vsel %vm1425, %v1415, %v1426
      %v1428 = vld [vmem:[%s390] sm:$0xf]
      %v1429 = vunpack.c.l.bf16 %v1428
      %v1430 = vadd.f32 %v1427, %v1429
      %v1431 = vpack.c.bf16 %v1430, %v1430
      %1432 = vst [vmem:[%s398] sm:$0xf] %v1431
      %p1433 = scmp.lt.s32.totalorder %s21, 1
      %s1434 = scalar_select %p1433, %s21, 1
      %p1435 = scmp.lt.s32.totalorder %s22, 7
      %s1436 = scalar_select %p1435, %s22, 7
      %s1437 = smul.addr %s1434, 8
      %s1438 = sadd.s32 %s1436, %s1437
      %s1439 = smul.addr %s1438, 4
      %s1440 = scalar_lea.vmem %s6, %s1439
      // Predicated region
      $region45: #{csp_layer_forward.9} parent=43 // pred_check
        %p1441 = pneg %p207
      $region46: #{csp_layer_forward.9} parent=43 // pred_check_branch
        %1443 = sbr.rel (%p1441) target = $region48
      $region47: #{csp_layer_forward.9} parent=43 // pred_region
        _
      $region48: #{csp_layer_forward.9} parent=43 // pred_fallthru
        _
    $region44: #{csp_layer_forward.9} parent=5 // pred_fallthru
      _
    %p1444 = scmp.le.s32.totalorder 2, %s12
    // Predicated region
    $region49: #{csp_layer_forward.9} parent=5 // pred_check
      %p1445 = pneg %p1444
    $region50: #{csp_layer_forward.9} parent=5 // pred_check_branch
      %1447 = sbr.rel (%p1445) target = $region52
    $region51: #{csp_layer_forward.9} parent=5 // pred_region
      %s1448 = ssub.s32 %s12, 2
      // Predicated region
      $region53: #{csp_layer_forward.9} parent=51 // pred_check
        %p1449 = pneg %p213
      $region54: #{csp_layer_forward.9} parent=51 // pred_check_branch
        %1451 = sbr.rel (%p1449) target = $region56
      $region55: #{csp_layer_forward.9} parent=51 // pred_region
        %p1452 = scmp.lt.s32.totalorder %s23, 1
        %s1453 = scalar_select %p1452, %s23, 1
        %p1454 = scmp.lt.s32.totalorder %s24, 7
        %s1455 = scalar_select %p1454, %s24, 7
        %s1456 = smul.addr %s1453, 8
        %s1457 = sadd.s32 %s1455, %s1456
        %s1458 = smul.addr %s1457, 4
        %s1459 = scalar_lea.vmem %s6, %s1458
      $region56: #{csp_layer_forward.9} parent=51 // pred_fallthru
        _
    $region52: #{csp_layer_forward.9} parent=5 // pred_fallthru
      _
  $region6: #{csp_layer_forward.9} parent=0 // loop_footer
    %s16 = sadd.s32 1, %s12
  $region7: #{csp_layer_forward.9} parent=0 // loop_footer_branch
    %11 = sbr.rel target = $region3
  $region8: #{csp_layer_forward.9} parent=0 // loop_exit
    _

</llo_original>
